<compile_context>
chip_gen: v5e
topology: v5e:2x2
jax: 0.10.0
libtpu: 0.0.40
codegen_flags: <defaults>
</compile_context>

<pallas_src>
import functools

import jax
import jax.numpy as jnp
from jax import lax
from jax.experimental import pallas as pl
from jax.experimental.pallas import tpu as pltpu

BN_EPS = 1e-5
LANE = 128


def _round_up(x, m):
    return (x + m - 1) // m * m


# ---------------------------------------------------------------------------
# Kernel 1: 3x3 conv (padding=1) on one (batch, row-tile) block, optionally
# applying the previous layer's BatchNorm+ReLU to its input, and emitting
# per-tile partial BN statistics of its own (pre-BN) output.
# ---------------------------------------------------------------------------
def _conv3x3_stats_kernel(x_ref, w_ref, b_ref, s_ref, t_ref,
                          y_ref, stat_ref, acc_ref, *, apply_input_act):
    # x_ref   : (1, 1, tile_h+2, W+2, Cin_p)  bf16   halo'd input tile
    # w_ref   : (3, 3*Cin_p, Cout_p)          bf16   ky-major, kx folded into K
    # b_ref   : (1, Cout_p)                   f32    conv bias
    # s_ref   : (1, Cin_p)                    f32    input BN scale (prev layer)
    # t_ref   : (1, Cin_p)                    f32    input BN shift (prev layer)
    # y_ref   : (1, tile_h, W, Cout_p)        bf16   raw conv output (pre-BN)
    # stat_ref: (1, 1, 2, Cout_p)             f32    per-tile [sum, sum(x^2)]
    # acc_ref : (tile_h*W, Cout_p)            f32    VMEM accumulator scratch
    tile_h = y_ref.shape[1]
    wo = y_ref.shape[2]
    cin_p = x_ref.shape[-1]

    x = x_ref[0, 0]                                     # (tile_h+2, W+2, Cin_p)

    if apply_input_act:
        # Fused BN+ReLU of the previous conv's output (f32 math).
        xf = x.astype(jnp.float32)
        xf = jnp.maximum(xf * s_ref[0] + t_ref[0], 0.0)
        # Conv padding must be zero *after* the activation: zero the halo ring.
        rows = lax.broadcasted_iota(jnp.int32, xf.shape, 0)
        cols = lax.broadcasted_iota(jnp.int32, xf.shape, 1)
        i = pl.program_id(1)
        nh = pl.num_programs(1)
        th2 = xf.shape[0]
        wp2 = xf.shape[1]
        valid = (cols > 0) & (cols < wp2 - 1)
        valid = valid & ~((i == 0) & (rows == 0))
        valid = valid & ~((i == nh - 1) & (rows == th2 - 1))
        xf = jnp.where(valid, xf, 0.0)
        x = xf.astype(jnp.bfloat16)

    # Fold the 3 kx taps into the contraction dimension (K = 3*Cin_p).
    xk = jnp.concatenate(
        [x[:, 0:wo, :], x[:, 1:wo + 1, :], x[:, 2:wo + 2, :]], axis=-1)

    # 3 MXU matmuls (one per ky tap), f32 accumulation in VMEM scratch.
    for ky in range(3):
        lhs = xk[ky:ky + tile_h].reshape(tile_h * wo, 3 * cin_p)
        part = jnp.dot(lhs, w_ref[ky], preferred_element_type=jnp.float32)
        if ky == 0:
            acc_ref[...] = part
        else:
            acc_ref[...] += part

    acc = acc_ref[...] + b_ref[...]                      # (tile_h*W, Cout_p) f32

    # One-pass partial BN statistics (finalized across tiles in the wrapper).
    stat_ref[0, 0] = jnp.concatenate(
        [jnp.sum(acc, axis=0, keepdims=True),
         jnp.sum(acc * acc, axis=0, keepdims=True)], axis=0)

    y_ref[0] = acc.reshape(tile_h, wo, -1).astype(y_ref.dtype)


# ---------------------------------------------------------------------------
# Kernel 2: elementwise BN + ReLU finisher (per-channel affine, f32 math).
# ---------------------------------------------------------------------------
def _bn_relu_kernel(y_ref, s_ref, t_ref, o_ref):
    y = y_ref[...].astype(jnp.float32)
    o_ref[...] = jnp.maximum(y * s_ref[0] + t_ref[0], 0.0)


# ---------------------------------------------------------------------------
# Wrapper helpers
# ---------------------------------------------------------------------------
def _prep_weight(w, cin_p, cout_p):
    """(Cout, Cin, 3, 3) -> (3, 3*Cin_p, Cout_p) bf16, kx folded into K."""
    cout, cin = w.shape[0], w.shape[1]
    wt = jnp.transpose(w, (2, 3, 1, 0))                  # (ky, kx, Cin, Cout)
    wt = jnp.pad(wt, ((0, 0), (0, 0), (0, cin_p - cin), (0, cout_p - cout)))
    return wt.reshape(3, 3 * cin_p, cout_p).astype(jnp.bfloat16)


def _pad_vec(v, cp):
    return jnp.pad(v.astype(jnp.float32), (0, cp - v.shape[0])).reshape(1, cp)


def _overlap_row_tiles(a, tile_h):
    """(N, H+2, Wp, C) -> (N, nH, tile_h+2, Wp, C) row tiles with 1-row halos."""
    n, hp2, wp, c = a.shape
    del n, wp, c
    h = hp2 - 2
    nh = h // tile_h
    tiles = [lax.slice_in_dim(a, i * tile_h, i * tile_h + tile_h + 2, axis=1)
             for i in range(nh)]
    return jnp.stack(tiles, axis=1)


def _conv_stage(a_pad, w, b, in_scale, in_shift, *, apply_input_act, tile_h,
                vmem_limit):
    """3x3 conv (pad=1) over a padded NHWC activation; returns raw conv output
    (bf16, channel-padded) plus per-channel batch mean / biased variance."""
    n, hp2, wp2, cin_p = a_pad.shape
    h, wo = hp2 - 2, wp2 - 2
    cout_p = w.shape[-1]
    nh = h // tile_h

    a_tiles = _overlap_row_tiles(a_pad, tile_h)

    kernel = functools.partial(_conv3x3_stats_kernel,
                               apply_input_act=apply_input_act)
    y, stats = pl.pallas_call(
        kernel,
        out_shape=(jax.ShapeDtypeStruct((n, h, wo, cout_p), jnp.bfloat16),
                   jax.ShapeDtypeStruct((n, nh, 2, cout_p), jnp.float32)),
        grid=(n, nh),
        in_specs=[
            pl.BlockSpec((1, 1, tile_h + 2, wp2, cin_p),
                         lambda b_, i: (b_, i, 0, 0, 0)),
            pl.BlockSpec((3, 3 * cin_p, cout_p), lambda b_, i: (0, 0, 0)),
            pl.BlockSpec((1, cout_p), lambda b_, i: (0, 0)),
            pl.BlockSpec((1, cin_p), lambda b_, i: (0, 0)),
            pl.BlockSpec((1, cin_p), lambda b_, i: (0, 0)),
        ],
        out_specs=(
            pl.BlockSpec((1, tile_h, wo, cout_p), lambda b_, i: (b_, i, 0, 0)),
            pl.BlockSpec((1, 1, 2, cout_p), lambda b_, i: (b_, i, 0, 0)),
        ),
        scratch_shapes=[pltpu.VMEM((tile_h * wo, cout_p), jnp.float32)],
        compiler_params=pltpu.CompilerParams(
            dimension_semantics=("parallel", "parallel"),
            vmem_limit_bytes=vmem_limit),
    )(a_tiles, w, b, in_scale, in_shift)

    tot = jnp.sum(stats, axis=(0, 1))                    # (2, Cout_p)
    cnt = float(n * h * wo)
    mean = tot[0] / cnt
    var = jnp.maximum(tot[1] / cnt - mean * mean, 0.0)   # biased (train mode)
    return y, mean, var


# ---------------------------------------------------------------------------
# Public forward: PyTorch-style NCHW in / NCHW out.
# ---------------------------------------------------------------------------
def double_conv(x_nchw, params, *, tile_h=8, vmem_limit=48 * 1024 * 1024):
    n, cin, h, w = x_nchw.shape
    cout = params["w1"].shape[0]
    cin_p = _round_up(cin, LANE)
    cout_p = _round_up(cout, LANE)

    # Row-tile height must divide H (keeps the example simple; large H uses
    # the requested tile height).
    tile_h = max(1, min(tile_h, h))
    while h % tile_h:
        tile_h -= 1
    nh = h // tile_h

    # NCHW -> NHWC, lane-dense channel pad, spatial zero-pad of 1, bf16.
    x = jnp.transpose(x_nchw, (0, 2, 3, 1))
    x = jnp.pad(x, ((0, 0), (1, 1), (1, 1), (0, cin_p - cin)))
    x = x.astype(jnp.bfloat16)

    w1 = _prep_weight(params["w1"], cin_p, cout_p)
    w2 = _prep_weight(params["w2"], cout_p, cout_p)
    b1 = _pad_vec(params["b1"], cout_p)
    b2 = _pad_vec(params["b2"], cout_p)
    g1 = _pad_vec(params["gamma1"], cout_p)
    be1 = _pad_vec(params["beta1"], cout_p)
    g2 = _pad_vec(params["gamma2"], cout_p)
    be2 = _pad_vec(params["beta2"], cout_p)

    ident_s = jnp.ones((1, cin_p), jnp.float32)
    ident_t = jnp.zeros((1, cin_p), jnp.float32)

    # ---- conv1 (raw) + batch statistics ------------------------------------
    y1, mean1, var1 = _conv_stage(x, w1, b1, ident_s, ident_t,
                                  apply_input_act=False, tile_h=tile_h,
                                  vmem_limit=vmem_limit)
    scale1 = (g1[0] * lax.rsqrt(var1 + BN_EPS)).reshape(1, cout_p)
    shift1 = (be1[0] - mean1 * scale1[0]).reshape(1, cout_p)

    # ---- BN1+ReLU fused into conv2's input read; conv2 (raw) + stats --------
    y1_pad = jnp.pad(y1, ((0, 0), (1, 1), (1, 1), (0, 0)))
    y2, mean2, var2 = _conv_stage(y1_pad, w2, b2, scale1, shift1,
                                  apply_input_act=True, tile_h=tile_h,
                                  vmem_limit=vmem_limit)
    scale2 = (g2[0] * lax.rsqrt(var2 + BN_EPS)).reshape(1, cout_p)
    shift2 = (be2[0] - mean2 * scale2[0]).reshape(1, cout_p)

    # ---- BN2 + ReLU finisher -------------------------------------------------
    out = pl.pallas_call(
        _bn_relu_kernel,
        out_shape=jax.ShapeDtypeStruct((n, h, w, cout_p), jnp.float32),
        grid=(n, nh),
        in_specs=[
            pl.BlockSpec((1, tile_h, w, cout_p), lambda b_, i: (b_, i, 0, 0)),
            pl.BlockSpec((1, cout_p), lambda b_, i: (0, 0)),
            pl.BlockSpec((1, cout_p), lambda b_, i: (0, 0)),
        ],
        out_specs=pl.BlockSpec((1, tile_h, w, cout_p),
                               lambda b_, i: (b_, i, 0, 0)),
        compiler_params=pltpu.CompilerParams(
            dimension_semantics=("parallel", "parallel"),
            vmem_limit_bytes=vmem_limit),
    )(y2, scale2, shift2)

    return jnp.transpose(out[..., :cout], (0, 3, 1, 2))  # back to NCHW, f32


# ---------------------------------------------------------------------------
# Params / reference / demo
# ---------------------------------------------------------------------------
def init_params(key, in_channels, out_channels):
    """Deterministic init mimicking PyTorch defaults (uniform +-1/sqrt(fan_in))."""
    k = jax.random.split(key, 4)
    fan1 = in_channels * 9
    fan2 = out_channels * 9
    b1lim = 1.0 / jnp.sqrt(fan1)
    b2lim = 1.0 / jnp.sqrt(fan2)
    return {
        "w1": jax.random.uniform(k[0], (out_channels, in_channels, 3, 3),
                                 jnp.float32, -b1lim, b1lim),
        "b1": jax.random.uniform(k[1], (out_channels,), jnp.float32, -b1lim, b1lim),
        "w2": jax.random.uniform(k[2], (out_channels, out_channels, 3, 3),
                                 jnp.float32, -b2lim, b2lim),
        "b2": jax.random.uniform(k[3], (out_channels,), jnp.float32, -b2lim, b2lim),
        "gamma1": jnp.ones((out_channels,), jnp.float32),
        "beta1": jnp.zeros((out_channels,), jnp.float32),
        "gamma2": jnp.ones((out_channels,), jnp.float32),
        "beta2": jnp.zeros((out_channels,), jnp.float32),
    }


def _reference(x_nchw, params):
    """Pure-JAX f32 reference (lax.conv) with PyTorch train-mode BN semantics."""
    def conv(x, w, b):
        y = lax.conv_general_dilated(x, w, (1, 1), ((1, 1), (1, 1)),
                                     dimension_numbers=("NCHW", "OIHW", "NCHW"))
        return y + b[None, :, None, None]

    def bn_relu(x, g, be):
        mean = jnp.mean(x, axis=(0, 2, 3), keepdims=True)
        var = jnp.mean((x - mean) ** 2, axis=(0, 2, 3), keepdims=True)
        y = (x - mean) * lax.rsqrt(var + BN_EPS)
        y = y * g[None, :, None, None] + be[None, :, None, None]
        return jnp.maximum(y, 0.0)

    h = bn_relu(conv(x_nchw, params["w1"], params["b1"]),
                params["gamma1"], params["beta1"])
    return bn_relu(conv(h, params["w2"], params["b2"]),
                   params["gamma2"], params["beta2"])


if __name__ == "__main__":
    key = jax.random.PRNGKey(0)
    kx, kp = jax.random.split(key)

    N, Cin, H, W = 2, 4, 16, 16
    Cout = 8
    x = jax.random.normal(kx, (N, Cin, H, W), jnp.float32)
    params = init_params(kp, Cin, Cout)

    fwd = jax.jit(double_conv)
    out = jax.block_until_ready(fwd(x, params))
    assert out.shape == (N, Cout, H, W)

    # bf16 activation/weight pipeline vs f32 reference: tolerance sized for
    # bf16 rounding amplified by the BN normalization (outputs are O(1)).
    ref = _reference(x, params)
    max_err = float(jnp.max(jnp.abs(out - ref)))
    assert jnp.allclose(out, ref, atol=5e-2, rtol=5e-2), f"max abs err {max_err}"

    print("KERNEL_OK")
</pallas_src>

<mosaic_0001>
module attributes {stable_mosaic.version = 11 : i64} {
  func.func @_conv3x3_stats_kernel(%arg0: i32, %arg1: i32, %arg2: memref<1x1x10x18x128xbf16, #tpu.memory_space<vmem>>, %arg3: memref<3x384x128xbf16, #tpu.memory_space<vmem>>, %arg4: memref<1x128xf32, #tpu.memory_space<vmem>>, %arg5: memref<1x128xf32, #tpu.memory_space<vmem>>, %arg6: memref<1x128xf32, #tpu.memory_space<vmem>>, %arg7: memref<1x8x16x128xbf16, #tpu.memory_space<vmem>>, %arg8: memref<1x1x2x128xf32, #tpu.memory_space<vmem>>, %arg9: memref<128x128xf32, #tpu.memory_space<vmem>>) attributes {dimension_semantics = [#tpu.dimension_semantics<parallel>, #tpu.dimension_semantics<parallel>], iteration_bounds = array<i64: 2, 2>, scalar_prefetch = 0 : i64, scratch_operands = 1 : i64, tpu.core_type = #tpu.core_type<tc>, window_params = [{transform_indices = @transform_0, window_bounds = array<i64: 1, 1, 10, 18, 128>}, {pipeline_mode = #tpu.pipeline_mode<synchronous>, transform_indices = @transform_1, window_bounds = array<i64: 3, 384, 128>}, {pipeline_mode = #tpu.pipeline_mode<synchronous>, transform_indices = @transform_2, window_bounds = array<i64: 1, 128>}, {pipeline_mode = #tpu.pipeline_mode<synchronous>, transform_indices = @transform_3, window_bounds = array<i64: 1, 128>}, {pipeline_mode = #tpu.pipeline_mode<synchronous>, transform_indices = @transform_4, window_bounds = array<i64: 1, 128>}, {transform_indices = @transform_5, window_bounds = array<i64: 1, 8, 16, 128>}, {transform_indices = @transform_6, window_bounds = array<i64: 1, 1, 2, 128>}]} {
    %c0 = arith.constant 0 : index
    %c0_0 = arith.constant 0 : index
    %c0_1 = arith.constant 0 : index
    %c0_2 = arith.constant 0 : index
    %c0_3 = arith.constant 0 : index
    %0 = vector.load %arg2[%c0, %c0_0, %c0_1, %c0_2, %c0_3] : memref<1x1x10x18x128xbf16, #tpu.memory_space<vmem>>, vector<1x1x10x18x128xbf16>
    %1 = vector.shape_cast %0 : vector<1x1x10x18x128xbf16> to vector<10x18x128xbf16>
    %2 = vector.extract_strided_slice %1 {offsets = [0, 0, 0], sizes = [10, 16, 128], strides = [1, 1, 1]} : vector<10x18x128xbf16> to vector<10x16x128xbf16>
    %3 = vector.extract_strided_slice %1 {offsets = [0, 1, 0], sizes = [10, 16, 128], strides = [1, 1, 1]} : vector<10x18x128xbf16> to vector<10x16x128xbf16>
    %4 = vector.extract_strided_slice %1 {offsets = [0, 2, 0], sizes = [10, 16, 128], strides = [1, 1, 1]} : vector<10x18x128xbf16> to vector<10x16x128xbf16>
    %5 = tpu.concatenate %2, %3, %4 in 2 : vector<10x16x128xbf16>, vector<10x16x128xbf16>, vector<10x16x128xbf16> -> vector<10x16x384xbf16>
    %6 = vector.extract_strided_slice %5 {offsets = [0, 0, 0], sizes = [8, 16, 384], strides = [1, 1, 1]} : vector<10x16x384xbf16> to vector<8x16x384xbf16>
    %7 = vector.shape_cast %6 : vector<8x16x384xbf16> to vector<128x384xbf16>
    %c0_4 = arith.constant 0 : index
    %c0_5 = arith.constant 0 : index
    %c0_6 = arith.constant 0 : index
    %8 = vector.load %arg3[%c0_4, %c0_5, %c0_6] : memref<3x384x128xbf16, #tpu.memory_space<vmem>>, vector<1x384x128xbf16>
    %9 = vector.shape_cast %8 : vector<1x384x128xbf16> to vector<384x128xbf16>
    %cst = arith.constant dense<0.000000e+00> : vector<128x128xf32>
    %10 = tpu.matmul %7, %9, %cst {dimension_numbers = #tpu.dot_dimension_numbers<[1], [0], [0], [1], [0, 0, 1, 1], [], []>} : vector<128x384xbf16>, vector<384x128xbf16>, vector<128x128xf32> -> vector<128x128xf32>
    %c0_7 = arith.constant 0 : index
    %c0_8 = arith.constant 0 : index
    %11 = vector.load %arg9[%c0_7, %c0_8] : memref<128x128xf32, #tpu.memory_space<vmem>>, vector<128x128xf32>
    tpu.vector_store %arg9[%c0_7, %c0_8], %10 {strides = array<i32>} : memref<128x128xf32, #tpu.memory_space<vmem>>, vector<128x128xf32>,
    %12 = vector.extract_strided_slice %5 {offsets = [1, 0, 0], sizes = [8, 16, 384], strides = [1, 1, 1]} : vector<10x16x384xbf16> to vector<8x16x384xbf16>
    %13 = vector.shape_cast %12 : vector<8x16x384xbf16> to vector<128x384xbf16>
    %c1 = arith.constant 1 : index
    %c0_9 = arith.constant 0 : index
    %c0_10 = arith.constant 0 : index
    %14 = vector.load %arg3[%c1, %c0_9, %c0_10] : memref<3x384x128xbf16, #tpu.memory_space<vmem>>, vector<1x384x128xbf16>
    %15 = vector.shape_cast %14 : vector<1x384x128xbf16> to vector<384x128xbf16>
    %cst_11 = arith.constant dense<0.000000e+00> : vector<128x128xf32>
    %16 = tpu.matmul %13, %15, %cst_11 {dimension_numbers = #tpu.dot_dimension_numbers<[1], [0], [0], [1], [0, 0, 1, 1], [], []>} : vector<128x384xbf16>, vector<384x128xbf16>, vector<128x128xf32> -> vector<128x128xf32>
    %c0_12 = arith.constant 0 : index
    %c0_13 = arith.constant 0 : index
    %17 = vector.load %arg9[%c0_12, %c0_13] : memref<128x128xf32, #tpu.memory_space<vmem>>, vector<128x128xf32>
    %18 = arith.addf %17, %16 : vector<128x128xf32>
    %c0_14 = arith.constant 0 : index
    %c0_15 = arith.constant 0 : index
    %19 = vector.load %arg9[%c0_14, %c0_15] : memref<128x128xf32, #tpu.memory_space<vmem>>, vector<128x128xf32>
    tpu.vector_store %arg9[%c0_14, %c0_15], %18 {strides = array<i32>} : memref<128x128xf32, #tpu.memory_space<vmem>>, vector<128x128xf32>,
    %20 = vector.extract_strided_slice %5 {offsets = [2, 0, 0], sizes = [8, 16, 384], strides = [1, 1, 1]} : vector<10x16x384xbf16> to vector<8x16x384xbf16>
    %21 = vector.shape_cast %20 : vector<8x16x384xbf16> to vector<128x384xbf16>
    %c2 = arith.constant 2 : index
    %c0_16 = arith.constant 0 : index
    %c0_17 = arith.constant 0 : index
    %22 = vector.load %arg3[%c2, %c0_16, %c0_17] : memref<3x384x128xbf16, #tpu.memory_space<vmem>>, vector<1x384x128xbf16>
    %23 = vector.shape_cast %22 : vector<1x384x128xbf16> to vector<384x128xbf16>
    %cst_18 = arith.constant dense<0.000000e+00> : vector<128x128xf32>
    %24 = tpu.matmul %21, %23, %cst_18 {dimension_numbers = #tpu.dot_dimension_numbers<[1], [0], [0], [1], [0, 0, 1, 1], [], []>} : vector<128x384xbf16>, vector<384x128xbf16>, vector<128x128xf32> -> vector<128x128xf32>
    %c0_19 = arith.constant 0 : index
    %c0_20 = arith.constant 0 : index
    %25 = vector.load %arg9[%c0_19, %c0_20] : memref<128x128xf32, #tpu.memory_space<vmem>>, vector<128x128xf32>
    %26 = arith.addf %25, %24 : vector<128x128xf32>
    %c0_21 = arith.constant 0 : index
    %c0_22 = arith.constant 0 : index
    %27 = vector.load %arg9[%c0_21, %c0_22] : memref<128x128xf32, #tpu.memory_space<vmem>>, vector<128x128xf32>
    tpu.vector_store %arg9[%c0_21, %c0_22], %26 {strides = array<i32>} : memref<128x128xf32, #tpu.memory_space<vmem>>, vector<128x128xf32>,
    %c0_23 = arith.constant 0 : index
    %c0_24 = arith.constant 0 : index
    %28 = vector.load %arg9[%c0_23, %c0_24] : memref<128x128xf32, #tpu.memory_space<vmem>>, vector<128x128xf32>
    %c0_25 = arith.constant 0 : index
    %c0_26 = arith.constant 0 : index
    %29 = vector.load %arg4[%c0_25, %c0_26] : memref<1x128xf32, #tpu.memory_space<vmem>>, vector<1x128xf32>
    %30 = vector.broadcast %29 : vector<1x128xf32> to vector<128x128xf32>
    %31 = arith.addf %28, %30 : vector<128x128xf32>
    %cst_27 = arith.constant dense<0.000000e+00> : vector<128xf32>
    %32 = vector.multi_reduction <add>, %31, %cst_27 [0] : vector<128x128xf32> to vector<128xf32>
    %33 = vector.shape_cast %32 : vector<128xf32> to vector<1x128xf32>
    %34 = arith.mulf %31, %31 : vector<128x128xf32>
    %cst_28 = arith.constant dense<0.000000e+00> : vector<128xf32>
    %35 = vector.multi_reduction <add>, %34, %cst_28 [0] : vector<128x128xf32> to vector<128xf32>
    %36 = vector.shape_cast %35 : vector<128xf32> to vector<1x128xf32>
    %37 = tpu.concatenate %33, %36 in 0 : vector<1x128xf32>, vector<1x128xf32> -> vector<2x128xf32>
    %c0_29 = arith.constant 0 : index
    %c0_30 = arith.constant 0 : index
    %c0_31 = arith.constant 0 : index
    %c0_32 = arith.constant 0 : index
    %38 = vector.load %arg8[%c0_29, %c0_30, %c0_31, %c0_32] : memref<1x1x2x128xf32, #tpu.memory_space<vmem>>, vector<1x1x2x128xf32>
    %39 = vector.shape_cast %38 : vector<1x1x2x128xf32> to vector<2x128xf32>
    %40 = vector.shape_cast %37 : vector<2x128xf32> to vector<1x1x2x128xf32>
    tpu.vector_store %arg8[%c0_29, %c0_30, %c0_31, %c0_32], %40 {strides = array<i32>} : memref<1x1x2x128xf32, #tpu.memory_space<vmem>>, vector<1x1x2x128xf32>,
    %41 = vector.shape_cast %31 : vector<128x128xf32> to vector<8x16x128xf32>
    %42 = arith.truncf %41 : vector<8x16x128xf32> to vector<8x16x128xbf16>
    %c0_33 = arith.constant 0 : index
    %c0_34 = arith.constant 0 : index
    %c0_35 = arith.constant 0 : index
    %c0_36 = arith.constant 0 : index
    %43 = vector.load %arg7[%c0_33, %c0_34, %c0_35, %c0_36] : memref<1x8x16x128xbf16, #tpu.memory_space<vmem>>, vector<1x8x16x128xbf16>
    %44 = vector.shape_cast %43 : vector<1x8x16x128xbf16> to vector<8x16x128xbf16>
    %45 = vector.shape_cast %42 : vector<8x16x128xbf16> to vector<1x8x16x128xbf16>
    tpu.vector_store %arg7[%c0_33, %c0_34, %c0_35, %c0_36], %45 {strides = array<i32>} : memref<1x8x16x128xbf16, #tpu.memory_space<vmem>>, vector<1x8x16x128xbf16>,
    return
  }
  func.func @transform_0(%arg0: i32, %arg1: i32) -> (i32, i32, i32, i32, i32) {
    %c0_i32 = arith.constant 0 : i32
    %c0_i32_0 = arith.constant 0 : i32
    %c0_i32_1 = arith.constant 0 : i32
    %c0_i32_2 = arith.constant 0 : i32
    return %arg0, %arg1, %c0_i32, %c0_i32_0, %c0_i32_1 : i32, i32, i32, i32, i32
  }
  func.func @transform_1(%arg0: i32, %arg1: i32) -> (i32, i32, i32) {
    %c0_i32 = arith.constant 0 : i32
    %c0_i32_0 = arith.constant 0 : i32
    %c0_i32_1 = arith.constant 0 : i32
    %c0_i32_2 = arith.constant 0 : i32
    return %c0_i32, %c0_i32_0, %c0_i32_1 : i32, i32, i32
  }
  func.func @transform_2(%arg0: i32, %arg1: i32) -> (i32, i32) {
    %c0_i32 = arith.constant 0 : i32
    %c0_i32_0 = arith.constant 0 : i32
    %c0_i32_1 = arith.constant 0 : i32
    return %c0_i32, %c0_i32_0 : i32, i32
  }
  func.func @transform_3(%arg0: i32, %arg1: i32) -> (i32, i32) {
    %c0_i32 = arith.constant 0 : i32
    %c0_i32_0 = arith.constant 0 : i32
    %c0_i32_1 = arith.constant 0 : i32
    return %c0_i32, %c0_i32_0 : i32, i32
  }
  func.func @transform_4(%arg0: i32, %arg1: i32) -> (i32, i32) {
    %c0_i32 = arith.constant 0 : i32
    %c0_i32_0 = arith.constant 0 : i32
    %c0_i32_1 = arith.constant 0 : i32
    return %c0_i32, %c0_i32_0 : i32, i32
  }
  func.func @transform_5(%arg0: i32, %arg1: i32) -> (i32, i32, i32, i32) {
    %c0_i32 = arith.constant 0 : i32
    %c0_i32_0 = arith.constant 0 : i32
    %c0_i32_1 = arith.constant 0 : i32
    return %arg0, %arg1, %c0_i32, %c0_i32_0 : i32, i32, i32, i32
  }
  func.func @transform_6(%arg0: i32, %arg1: i32) -> (i32, i32, i32, i32) {
    %c0_i32 = arith.constant 0 : i32
    %c0_i32_0 = arith.constant 0 : i32
    %c0_i32_1 = arith.constant 0 : i32
    return %arg0, %arg1, %c0_i32, %c0_i32_0 : i32, i32, i32, i32
  }
}

module attributes {stable_mosaic.version = 11 : i64} {
  func.func @_bn_relu_kernel(%arg0: i32, %arg1: i32, %arg2: memref<1x8x16x128xbf16, #tpu.memory_space<vmem>>, %arg3: memref<1x128xf32, #tpu.memory_space<vmem>>, %arg4: memref<1x128xf32, #tpu.memory_space<vmem>>, %arg5: memref<1x8x16x128xf32, #tpu.memory_space<vmem>>) attributes {dimension_semantics = [#tpu.dimension_semantics<parallel>, #tpu.dimension_semantics<parallel>], iteration_bounds = array<i64: 2, 2>, scalar_prefetch = 0 : i64, scratch_operands = 0 : i64, tpu.core_type = #tpu.core_type<tc>, window_params = [{transform_indices = @transform_0, window_bounds = array<i64: 1, 8, 16, 128>}, {pipeline_mode = #tpu.pipeline_mode<synchronous>, transform_indices = @transform_1, window_bounds = array<i64: 1, 128>}, {pipeline_mode = #tpu.pipeline_mode<synchronous>, transform_indices = @transform_2, window_bounds = array<i64: 1, 128>}, {transform_indices = @transform_3, window_bounds = array<i64: 1, 8, 16, 128>}]} {
    %c0 = arith.constant 0 : index
    %c0_0 = arith.constant 0 : index
    %c0_1 = arith.constant 0 : index
    %c0_2 = arith.constant 0 : index
    %0 = vector.load %arg2[%c0, %c0_0, %c0_1, %c0_2] : memref<1x8x16x128xbf16, #tpu.memory_space<vmem>>, vector<1x8x16x128xbf16>
    %1 = arith.extf %0 : vector<1x8x16x128xbf16> to vector<1x8x16x128xf32>
    %c0_3 = arith.constant 0 : index
    %c0_4 = arith.constant 0 : index
    %2 = vector.load %arg3[%c0_3, %c0_4] : memref<1x128xf32, #tpu.memory_space<vmem>>, vector<1x128xf32>
    %3 = vector.shape_cast %2 : vector<1x128xf32> to vector<128xf32>
    %4 = vector.shape_cast %3 : vector<128xf32> to vector<1x1x1x128xf32>
    %5 = vector.broadcast %4 : vector<1x1x1x128xf32> to vector<1x8x16x128xf32>
    %6 = arith.mulf %1, %5 : vector<1x8x16x128xf32>
    %c0_5 = arith.constant 0 : index
    %c0_6 = arith.constant 0 : index
    %7 = vector.load %arg4[%c0_5, %c0_6] : memref<1x128xf32, #tpu.memory_space<vmem>>, vector<1x128xf32>
    %8 = vector.shape_cast %7 : vector<1x128xf32> to vector<128xf32>
    %9 = vector.shape_cast %8 : vector<128xf32> to vector<1x1x1x128xf32>
    %10 = vector.broadcast %9 : vector<1x1x1x128xf32> to vector<1x8x16x128xf32>
    %11 = arith.addf %6, %10 : vector<1x8x16x128xf32>
    %cst = arith.constant 0.000000e+00 : f32
    %12 = vector.broadcast %cst : f32 to vector<1x8x16x128xf32>
    %13 = arith.maximumf %11, %12 : vector<1x8x16x128xf32>
    %c0_7 = arith.constant 0 : index
    %c0_8 = arith.constant 0 : index
    %c0_9 = arith.constant 0 : index
    %c0_10 = arith.constant 0 : index
    %14 = vector.load %arg5[%c0_7, %c0_8, %c0_9, %c0_10] : memref<1x8x16x128xf32, #tpu.memory_space<vmem>>, vector<1x8x16x128xf32>
    tpu.vector_store %arg5[%c0_7, %c0_8, %c0_9, %c0_10], %13 {strides = array<i32>} : memref<1x8x16x128xf32, #tpu.memory_space<vmem>>, vector<1x8x16x128xf32>,
    return
  }
  func.func @transform_0(%arg0: i32, %arg1: i32) -> (i32, i32, i32, i32) {
    %c0_i32 = arith.constant 0 : i32
    %c0_i32_0 = arith.constant 0 : i32
    %c0_i32_1 = arith.constant 0 : i32
    return %arg0, %arg1, %c0_i32, %c0_i32_0 : i32, i32, i32, i32
  }
  func.func @transform_1(%arg0: i32, %arg1: i32) -> (i32, i32) {
    %c0_i32 = arith.constant 0 : i32
    %c0_i32_0 = arith.constant 0 : i32
    %c0_i32_1 = arith.constant 0 : i32
    return %c0_i32, %c0_i32_0 : i32, i32
  }
  func.func @transform_2(%arg0: i32, %arg1: i32) -> (i32, i32) {
    %c0_i32 = arith.constant 0 : i32
    %c0_i32_0 = arith.constant 0 : i32
    %c0_i32_1 = arith.constant 0 : i32
    return %c0_i32, %c0_i32_0 : i32, i32
  }
  func.func @transform_3(%arg0: i32, %arg1: i32) -> (i32, i32, i32, i32) {
    %c0_i32 = arith.constant 0 : i32
    %c0_i32_0 = arith.constant 0 : i32
    %c0_i32_1 = arith.constant 0 : i32
    return %arg0, %arg1, %c0_i32, %c0_i32_0 : i32, i32, i32, i32
  }
}

module attributes {stable_mosaic.version = 11 : i64} {
  func.func @_conv3x3_stats_kernel(%arg0: i32, %arg1: i32, %arg2: memref<1x1x10x18x128xbf16, #tpu.memory_space<vmem>>, %arg3: memref<3x384x128xbf16, #tpu.memory_space<vmem>>, %arg4: memref<1x128xf32, #tpu.memory_space<vmem>>, %arg5: memref<1x128xf32, #tpu.memory_space<vmem>>, %arg6: memref<1x128xf32, #tpu.memory_space<vmem>>, %arg7: memref<1x8x16x128xbf16, #tpu.memory_space<vmem>>, %arg8: memref<1x1x2x128xf32, #tpu.memory_space<vmem>>, %arg9: memref<128x128xf32, #tpu.memory_space<vmem>>) attributes {dimension_semantics = [#tpu.dimension_semantics<parallel>, #tpu.dimension_semantics<parallel>], iteration_bounds = array<i64: 2, 2>, scalar_prefetch = 0 : i64, scratch_operands = 1 : i64, tpu.core_type = #tpu.core_type<tc>, window_params = [{transform_indices = @transform_0, window_bounds = array<i64: 1, 1, 10, 18, 128>}, {pipeline_mode = #tpu.pipeline_mode<synchronous>, transform_indices = @transform_1, window_bounds = array<i64: 3, 384, 128>}, {pipeline_mode = #tpu.pipeline_mode<synchronous>, transform_indices = @transform_2, window_bounds = array<i64: 1, 128>}, {pipeline_mode = #tpu.pipeline_mode<synchronous>, transform_indices = @transform_3, window_bounds = array<i64: 1, 128>}, {pipeline_mode = #tpu.pipeline_mode<synchronous>, transform_indices = @transform_4, window_bounds = array<i64: 1, 128>}, {transform_indices = @transform_5, window_bounds = array<i64: 1, 8, 16, 128>}, {transform_indices = @transform_6, window_bounds = array<i64: 1, 1, 2, 128>}]} {
    %c0 = arith.constant 0 : index
    %c0_0 = arith.constant 0 : index
    %c0_1 = arith.constant 0 : index
    %c0_2 = arith.constant 0 : index
    %c0_3 = arith.constant 0 : index
    %0 = vector.load %arg2[%c0, %c0_0, %c0_1, %c0_2, %c0_3] : memref<1x1x10x18x128xbf16, #tpu.memory_space<vmem>>, vector<1x1x10x18x128xbf16>
    %1 = vector.shape_cast %0 : vector<1x1x10x18x128xbf16> to vector<10x18x128xbf16>
    %2 = arith.extf %1 : vector<10x18x128xbf16> to vector<10x18x128xf32>
    %c0_4 = arith.constant 0 : index
    %c0_5 = arith.constant 0 : index
    %3 = vector.load %arg5[%c0_4, %c0_5] : memref<1x128xf32, #tpu.memory_space<vmem>>, vector<1x128xf32>
    %4 = vector.shape_cast %3 : vector<1x128xf32> to vector<128xf32>
    %5 = vector.shape_cast %4 : vector<128xf32> to vector<1x1x128xf32>
    %6 = vector.broadcast %5 : vector<1x1x128xf32> to vector<10x18x128xf32>
    %7 = arith.mulf %2, %6 : vector<10x18x128xf32>
    %c0_6 = arith.constant 0 : index
    %c0_7 = arith.constant 0 : index
    %8 = vector.load %arg6[%c0_6, %c0_7] : memref<1x128xf32, #tpu.memory_space<vmem>>, vector<1x128xf32>
    %9 = vector.shape_cast %8 : vector<1x128xf32> to vector<128xf32>
    %10 = vector.shape_cast %9 : vector<128xf32> to vector<1x1x128xf32>
    %11 = vector.broadcast %10 : vector<1x1x128xf32> to vector<10x18x128xf32>
    %12 = arith.addf %7, %11 : vector<10x18x128xf32>
    %cst = arith.constant 0.000000e+00 : f32
    %13 = vector.broadcast %cst : f32 to vector<10x18x128xf32>
    %14 = arith.maximumf %12, %13 : vector<10x18x128xf32>
    %15 = tpu.iota {dimensions = array<i32: 0>} : vector<10x18x128xi32>
    %16 = tpu.iota {dimensions = array<i32: 1>} : vector<10x18x128xi32>
    %c0_i32 = arith.constant 0 : i32
    %17 = vector.broadcast %c0_i32 : i32 to vector<10x18x128xi32>
    %18 = arith.cmpi sgt, %16, %17 : vector<10x18x128xi32>
    %c17_i32 = arith.constant 17 : i32
    %19 = vector.broadcast %c17_i32 : i32 to vector<10x18x128xi32>
    %20 = arith.cmpi slt, %16, %19 : vector<10x18x128xi32>
    %21 = arith.andi %18, %20 : vector<10x18x128xi1>
    %c0_i32_8 = arith.constant 0 : i32
    %22 = arith.cmpi eq, %arg1, %c0_i32_8 : i32
    %c0_i32_9 = arith.constant 0 : i32
    %23 = vector.broadcast %c0_i32_9 : i32 to vector<10x18x128xi32>
    %24 = arith.cmpi eq, %15, %23 : vector<10x18x128xi32>
    %25 = vector.broadcast %22 : i1 to vector<10x18x128xi1>
    %26 = arith.andi %25, %24 : vector<10x18x128xi1>
    %cst_10 = arith.constant dense<true> : vector<10x18x128xi1>
    %27 = arith.xori %26, %cst_10 : vector<10x18x128xi1>
    %28 = arith.andi %21, %27 : vector<10x18x128xi1>
    %c1_i32 = arith.constant 1 : i32
    %29 = arith.cmpi eq, %arg1, %c1_i32 : i32
    %c9_i32 = arith.constant 9 : i32
    %30 = vector.broadcast %c9_i32 : i32 to vector<10x18x128xi32>
    %31 = arith.cmpi eq, %15, %30 : vector<10x18x128xi32>
    %32 = vector.broadcast %29 : i1 to vector<10x18x128xi1>
    %33 = arith.andi %32, %31 : vector<10x18x128xi1>
    %cst_11 = arith.constant dense<true> : vector<10x18x128xi1>
    %34 = arith.xori %33, %cst_11 : vector<10x18x128xi1>
    %35 = arith.andi %28, %34 : vector<10x18x128xi1>
    %cst_12 = arith.constant 0.000000e+00 : f32
    %36 = vector.broadcast %cst_12 : f32 to vector<10x18x128xf32>
    %37 = arith.select %35, %14, %36 : vector<10x18x128xi1>, vector<10x18x128xf32>
    %38 = arith.truncf %37 : vector<10x18x128xf32> to vector<10x18x128xbf16>
    %39 = vector.extract_strided_slice %38 {offsets = [0, 0, 0], sizes = [10, 16, 128], strides = [1, 1, 1]} : vector<10x18x128xbf16> to vector<10x16x128xbf16>
    %40 = vector.extract_strided_slice %38 {offsets = [0, 1, 0], sizes = [10, 16, 128], strides = [1, 1, 1]} : vector<10x18x128xbf16> to vector<10x16x128xbf16>
    %41 = vector.extract_strided_slice %38 {offsets = [0, 2, 0], sizes = [10, 16, 128], strides = [1, 1, 1]} : vector<10x18x128xbf16> to vector<10x16x128xbf16>
    %42 = tpu.concatenate %39, %40, %41 in 2 : vector<10x16x128xbf16>, vector<10x16x128xbf16>, vector<10x16x128xbf16> -> vector<10x16x384xbf16>
    %43 = vector.extract_strided_slice %42 {offsets = [0, 0, 0], sizes = [8, 16, 384], strides = [1, 1, 1]} : vector<10x16x384xbf16> to vector<8x16x384xbf16>
    %44 = vector.shape_cast %43 : vector<8x16x384xbf16> to vector<128x384xbf16>
    %c0_13 = arith.constant 0 : index
    %c0_14 = arith.constant 0 : index
    %c0_15 = arith.constant 0 : index
    %45 = vector.load %arg3[%c0_13, %c0_14, %c0_15] : memref<3x384x128xbf16, #tpu.memory_space<vmem>>, vector<1x384x128xbf16>
    %46 = vector.shape_cast %45 : vector<1x384x128xbf16> to vector<384x128xbf16>
    %cst_16 = arith.constant dense<0.000000e+00> : vector<128x128xf32>
    %47 = tpu.matmul %44, %46, %cst_16 {dimension_numbers = #tpu.dot_dimension_numbers<[1], [0], [0], [1], [0, 0, 1, 1], [], []>} : vector<128x384xbf16>, vector<384x128xbf16>, vector<128x128xf32> -> vector<128x128xf32>
    %c0_17 = arith.constant 0 : index
    %c0_18 = arith.constant 0 : index
    %48 = vector.load %arg9[%c0_17, %c0_18] : memref<128x128xf32, #tpu.memory_space<vmem>>, vector<128x128xf32>
    tpu.vector_store %arg9[%c0_17, %c0_18], %47 {strides = array<i32>} : memref<128x128xf32, #tpu.memory_space<vmem>>, vector<128x128xf32>,
    %49 = vector.extract_strided_slice %42 {offsets = [1, 0, 0], sizes = [8, 16, 384], strides = [1, 1, 1]} : vector<10x16x384xbf16> to vector<8x16x384xbf16>
    %50 = vector.shape_cast %49 : vector<8x16x384xbf16> to vector<128x384xbf16>
    %c1 = arith.constant 1 : index
    %c0_19 = arith.constant 0 : index
    %c0_20 = arith.constant 0 : index
    %51 = vector.load %arg3[%c1, %c0_19, %c0_20] : memref<3x384x128xbf16, #tpu.memory_space<vmem>>, vector<1x384x128xbf16>
    %52 = vector.shape_cast %51 : vector<1x384x128xbf16> to vector<384x128xbf16>
    %cst_21 = arith.constant dense<0.000000e+00> : vector<128x128xf32>
    %53 = tpu.matmul %50, %52, %cst_21 {dimension_numbers = #tpu.dot_dimension_numbers<[1], [0], [0], [1], [0, 0, 1, 1], [], []>} : vector<128x384xbf16>, vector<384x128xbf16>, vector<128x128xf32> -> vector<128x128xf32>
    %c0_22 = arith.constant 0 : index
    %c0_23 = arith.constant 0 : index
    %54 = vector.load %arg9[%c0_22, %c0_23] : memref<128x128xf32, #tpu.memory_space<vmem>>, vector<128x128xf32>
    %55 = arith.addf %54, %53 : vector<128x128xf32>
    %c0_24 = arith.constant 0 : index
    %c0_25 = arith.constant 0 : index
    %56 = vector.load %arg9[%c0_24, %c0_25] : memref<128x128xf32, #tpu.memory_space<vmem>>, vector<128x128xf32>
    tpu.vector_store %arg9[%c0_24, %c0_25], %55 {strides = array<i32>} : memref<128x128xf32, #tpu.memory_space<vmem>>, vector<128x128xf32>,
    %57 = vector.extract_strided_slice %42 {offsets = [2, 0, 0], sizes = [8, 16, 384], strides = [1, 1, 1]} : vector<10x16x384xbf16> to vector<8x16x384xbf16>
    %58 = vector.shape_cast %57 : vector<8x16x384xbf16> to vector<128x384xbf16>
    %c2 = arith.constant 2 : index
    %c0_26 = arith.constant 0 : index
    %c0_27 = arith.constant 0 : index
    %59 = vector.load %arg3[%c2, %c0_26, %c0_27] : memref<3x384x128xbf16, #tpu.memory_space<vmem>>, vector<1x384x128xbf16>
    %60 = vector.shape_cast %59 : vector<1x384x128xbf16> to vector<384x128xbf16>
    %cst_28 = arith.constant dense<0.000000e+00> : vector<128x128xf32>
    %61 = tpu.matmul %58, %60, %cst_28 {dimension_numbers = #tpu.dot_dimension_numbers<[1], [0], [0], [1], [0, 0, 1, 1], [], []>} : vector<128x384xbf16>, vector<384x128xbf16>, vector<128x128xf32> -> vector<128x128xf32>
    %c0_29 = arith.constant 0 : index
    %c0_30 = arith.constant 0 : index
    %62 = vector.load %arg9[%c0_29, %c0_30] : memref<128x128xf32, #tpu.memory_space<vmem>>, vector<128x128xf32>
    %63 = arith.addf %62, %61 : vector<128x128xf32>
    %c0_31 = arith.constant 0 : index
    %c0_32 = arith.constant 0 : index
    %64 = vector.load %arg9[%c0_31, %c0_32] : memref<128x128xf32, #tpu.memory_space<vmem>>, vector<128x128xf32>
    tpu.vector_store %arg9[%c0_31, %c0_32], %63 {strides = array<i32>} : memref<128x128xf32, #tpu.memory_space<vmem>>, vector<128x128xf32>,
    %c0_33 = arith.constant 0 : index
    %c0_34 = arith.constant 0 : index
    %65 = vector.load %arg9[%c0_33, %c0_34] : memref<128x128xf32, #tpu.memory_space<vmem>>, vector<128x128xf32>
    %c0_35 = arith.constant 0 : index
    %c0_36 = arith.constant 0 : index
    %66 = vector.load %arg4[%c0_35, %c0_36] : memref<1x128xf32, #tpu.memory_space<vmem>>, vector<1x128xf32>
    %67 = vector.broadcast %66 : vector<1x128xf32> to vector<128x128xf32>
    %68 = arith.addf %65, %67 : vector<128x128xf32>
    %cst_37 = arith.constant dense<0.000000e+00> : vector<128xf32>
    %69 = vector.multi_reduction <add>, %68, %cst_37 [0] : vector<128x128xf32> to vector<128xf32>
    %70 = vector.shape_cast %69 : vector<128xf32> to vector<1x128xf32>
    %71 = arith.mulf %68, %68 : vector<128x128xf32>
    %cst_38 = arith.constant dense<0.000000e+00> : vector<128xf32>
    %72 = vector.multi_reduction <add>, %71, %cst_38 [0] : vector<128x128xf32> to vector<128xf32>
    %73 = vector.shape_cast %72 : vector<128xf32> to vector<1x128xf32>
    %74 = tpu.concatenate %70, %73 in 0 : vector<1x128xf32>, vector<1x128xf32> -> vector<2x128xf32>
    %c0_39 = arith.constant 0 : index
    %c0_40 = arith.constant 0 : index
    %c0_41 = arith.constant 0 : index
    %c0_42 = arith.constant 0 : index
    %75 = vector.load %arg8[%c0_39, %c0_40, %c0_41, %c0_42] : memref<1x1x2x128xf32, #tpu.memory_space<vmem>>, vector<1x1x2x128xf32>
    %76 = vector.shape_cast %75 : vector<1x1x2x128xf32> to vector<2x128xf32>
    %77 = vector.shape_cast %74 : vector<2x128xf32> to vector<1x1x2x128xf32>
    tpu.vector_store %arg8[%c0_39, %c0_40, %c0_41, %c0_42], %77 {strides = array<i32>} : memref<1x1x2x128xf32, #tpu.memory_space<vmem>>, vector<1x1x2x128xf32>,
    %78 = vector.shape_cast %68 : vector<128x128xf32> to vector<8x16x128xf32>
    %79 = arith.truncf %78 : vector<8x16x128xf32> to vector<8x16x128xbf16>
    %c0_43 = arith.constant 0 : index
    %c0_44 = arith.constant 0 : index
    %c0_45 = arith.constant 0 : index
    %c0_46 = arith.constant 0 : index
    %80 = vector.load %arg7[%c0_43, %c0_44, %c0_45, %c0_46] : memref<1x8x16x128xbf16, #tpu.memory_space<vmem>>, vector<1x8x16x128xbf16>
    %81 = vector.shape_cast %80 : vector<1x8x16x128xbf16> to vector<8x16x128xbf16>
    %82 = vector.shape_cast %79 : vector<8x16x128xbf16> to vector<1x8x16x128xbf16>
    tpu.vector_store %arg7[%c0_43, %c0_44, %c0_45, %c0_46], %82 {strides = array<i32>} : memref<1x8x16x128xbf16, #tpu.memory_space<vmem>>, vector<1x8x16x128xbf16>,
    return
  }
  func.func @transform_0(%arg0: i32, %arg1: i32) -> (i32, i32, i32, i32, i32) {
    %c0_i32 = arith.constant 0 : i32
    %c0_i32_0 = arith.constant 0 : i32
    %c0_i32_1 = arith.constant 0 : i32
    %c0_i32_2 = arith.constant 0 : i32
    return %arg0, %arg1, %c0_i32, %c0_i32_0, %c0_i32_1 : i32, i32, i32, i32, i32
  }
  func.func @transform_1(%arg0: i32, %arg1: i32) -> (i32, i32, i32) {
    %c0_i32 = arith.constant 0 : i32
    %c0_i32_0 = arith.constant 0 : i32
    %c0_i32_1 = arith.constant 0 : i32
    %c0_i32_2 = arith.constant 0 : i32
    return %c0_i32, %c0_i32_0, %c0_i32_1 : i32, i32, i32
  }
  func.func @transform_2(%arg0: i32, %arg1: i32) -> (i32, i32) {
    %c0_i32 = arith.constant 0 : i32
    %c0_i32_0 = arith.constant 0 : i32
    %c0_i32_1 = arith.constant 0 : i32
    return %c0_i32, %c0_i32_0 : i32, i32
  }
  func.func @transform_3(%arg0: i32, %arg1: i32) -> (i32, i32) {
    %c0_i32 = arith.constant 0 : i32
    %c0_i32_0 = arith.constant 0 : i32
    %c0_i32_1 = arith.constant 0 : i32
    return %c0_i32, %c0_i32_0 : i32, i32
  }
  func.func @transform_4(%arg0: i32, %arg1: i32) -> (i32, i32) {
    %c0_i32 = arith.constant 0 : i32
    %c0_i32_0 = arith.constant 0 : i32
    %c0_i32_1 = arith.constant 0 : i32
    return %c0_i32, %c0_i32_0 : i32, i32
  }
  func.func @transform_5(%arg0: i32, %arg1: i32) -> (i32, i32, i32, i32) {
    %c0_i32 = arith.constant 0 : i32
    %c0_i32_0 = arith.constant 0 : i32
    %c0_i32_1 = arith.constant 0 : i32
    return %arg0, %arg1, %c0_i32, %c0_i32_0 : i32, i32, i32, i32
  }
  func.func @transform_6(%arg0: i32, %arg1: i32) -> (i32, i32, i32, i32) {
    %c0_i32 = arith.constant 0 : i32
    %c0_i32_0 = arith.constant 0 : i32
    %c0_i32_1 = arith.constant 0 : i32
    return %arg0, %arg1, %c0_i32, %c0_i32_0 : i32, i32, i32, i32
  }
}

</mosaic_0001>

<llo_original>
// kernel: double_conv.5
$region0: #{double_conv.5}
  #allocation0 [shape = 'u32[]', space=smem, size = 0x4, offset = 0x4, fixed_abs, tag = 'smem constant byte address 0x4 - core index']
  #allocation1 [shape = 'u32[72,128]{1,0:T(1,128)}', space=vmem, size = 0x9000, scoped, tag = 'internal scratch']
  %s0 = inlined_call_operand.vmem [shape: bf16[2,16,16,128], index: 0, kind: input, shape index: {}]
  %s1 = inlined_call_operand.vmem [shape: f32[1,128], index: 1, kind: input, shape index: {}]
  %s2 = inlined_call_operand.vmem [shape: f32[1,128], index: 2, kind: input, shape index: {}]
  %s3 = inlined_call_operand.vmem [shape: f32[2,16,16,128], index: 3, kind: output, shape index: {}]
  %s4 = sld [smem:[#allocation0]]
  $region45: #{double_conv.5} parent=0
    _
  %s6 = ssub.s32 1, %s4
  %s7 = scalar_select 0, %s6, %s4
  loop: start=0, step=1, limit=6
  $region2: #{double_conv.5} parent=0 // loop_pre_header
    _
  $region3: #{double_conv.5} parent=0 // loop_header
    %s9 = sphi 0, %s13
    %p10 = scmp.ge.s32.totalorder %s9, 6
    %s16 = sphi 0, %s28
    %s17 = sphi 0, %s24
    %s18 = sphi 0, %s16
    %s19 = sphi 0, %s17
    %s20 = sphi 0, %s18
    %s21 = sphi 0, %s19
    %s33 = sphi 0, %s35
    %s36 = sphi 0, %s33
    %s37 = sphi 0, %s36
    %s53 = sphi 0, %s37
    %s57 = sphi 0, %s57
    %s59 = sphi 0, %s57
    %s60 = sphi 0, %s59
    %s74 = sphi 0, %s60
    %s78 = sphi 0, %s78
    %s80 = sphi 0, %s78
    %s81 = sphi 0, %s80
    %s95 = sphi 0, %s81
    %s103 = sphi 0, %s105
    %s106 = sphi 0, %s103
    %s107 = sphi 0, %s106
    %s123 = sphi 0, %s107
  $region4: #{double_conv.5} parent=0 // loop_header_branch
    %12 = sbr.rel (%p10) target = $region8
  $region5: #{double_conv.5} parent=0 // loop_body
    %s14 = ssub.s32 %s9, 1
    %s15 = ssub.s32 %s9, 2
    %s22 = sadd.s32 1, %s17
    %p23 = scmp.ge.s32.totalorder %s22, 2
    %s24 = scalar_select %p23, 0, %s22
    %s25 = sadd.s32 1, %s16
    %s26 = scalar_select %p23, %s25, %s16
    %p27 = scmp.ge.s32.totalorder %s26, 2
    %s28 = scalar_select %p27, 0, %s26
    %s29 = ssub.s32 %s16, %s28
    %s30 = ssub.s32 %s17, %s24
    %s31 = sor.u32 %s29, %s30
    %p32 = scmp.eq.s32.totalorder %s31, 0
    %s34 = sadd.s32 %s33, 1
    %s35 = scalar_select %p32, %s33, %s34
    %p38 = pneg %p32
    %p39 = scmp.eq.s32.totalorder %s9, 3
    %p40 = por %p38, %p39
    %p41 = scmp.ne.s32.totalorder %s33, %s36
    %p42 = scmp.eq.s32.totalorder %s9, 0
    %p43 = por %p41, %p42
    %p44 = scmp.ne.s32.totalorder %s33, %s36
    %p45 = scmp.eq.s32.totalorder %s14, 3
    %p46 = por %p44, %p45
    %p47 = scmp.ne.s32.totalorder %s36, %s37
    %p48 = scmp.eq.s32.totalorder %s14, 0
    %p49 = por %p47, %p48
    %p50 = scmp.ne.s32.totalorder %s36, %s37
    %p51 = scmp.eq.s32.totalorder %s15, 3
    %p52 = por %p50, %p51
    %p54 = scmp.ne.s32.totalorder %s37, %s53
    %p55 = scmp.eq.s32.totalorder %s15, 0
    %p56 = por %p54, %p55
    %s58 = sadd.s32 %s57, 1
    %p61 = scmp.eq.s32.totalorder %s9, 3
    %p62 = scmp.ne.s32.totalorder %s57, %s59
    %p63 = scmp.eq.s32.totalorder %s9, 0
    %p64 = por %p62, %p63
    %p65 = scmp.ne.s32.totalorder %s57, %s59
    %p66 = scmp.eq.s32.totalorder %s14, 3
    %p67 = por %p65, %p66
    %p68 = scmp.ne.s32.totalorder %s59, %s60
    %p69 = scmp.eq.s32.totalorder %s14, 0
    %p70 = por %p68, %p69
    %p71 = scmp.ne.s32.totalorder %s59, %s60
    %p72 = scmp.eq.s32.totalorder %s15, 3
    %p73 = por %p71, %p72
    %p75 = scmp.ne.s32.totalorder %s60, %s74
    %p76 = scmp.eq.s32.totalorder %s15, 0
    %p77 = por %p75, %p76
    %s79 = sadd.s32 %s78, 1
    %p82 = scmp.eq.s32.totalorder %s9, 3
    %p83 = scmp.ne.s32.totalorder %s78, %s80
    %p84 = scmp.eq.s32.totalorder %s9, 0
    %p85 = por %p83, %p84
    %p86 = scmp.ne.s32.totalorder %s78, %s80
    %p87 = scmp.eq.s32.totalorder %s14, 3
    %p88 = por %p86, %p87
    %p89 = scmp.ne.s32.totalorder %s80, %s81
    %p90 = scmp.eq.s32.totalorder %s14, 0
    %p91 = por %p89, %p90
    %p92 = scmp.ne.s32.totalorder %s80, %s81
    %p93 = scmp.eq.s32.totalorder %s15, 3
    %p94 = por %p92, %p93
    %p96 = scmp.ne.s32.totalorder %s81, %s95
    %p97 = scmp.eq.s32.totalorder %s15, 0
    %p98 = por %p96, %p97
    %s99 = ssub.s32 %s16, %s28
    %s100 = ssub.s32 %s17, %s24
    %s101 = sor.u32 %s99, %s100
    %p102 = scmp.eq.s32.totalorder %s101, 0
    %s104 = sadd.s32 %s103, 1
    %s105 = scalar_select %p102, %s103, %s104
    %p108 = pneg %p102
    %p109 = scmp.eq.s32.totalorder %s9, 3
    %p110 = por %p108, %p109
    %p111 = scmp.ne.s32.totalorder %s103, %s106
    %p112 = scmp.eq.s32.totalorder %s9, 0
    %p113 = por %p111, %p112
    %p114 = scmp.ne.s32.totalorder %s103, %s106
    %p115 = scmp.eq.s32.totalorder %s14, 3
    %p116 = por %p114, %p115
    %p117 = scmp.ne.s32.totalorder %s106, %s107
    %p118 = scmp.eq.s32.totalorder %s14, 0
    %p119 = por %p117, %p118
    %p120 = scmp.ne.s32.totalorder %s106, %s107
    %p121 = scmp.eq.s32.totalorder %s15, 3
    %p122 = por %p120, %p121
    %p124 = scmp.ne.s32.totalorder %s107, %s123
    %p125 = scmp.eq.s32.totalorder %s15, 0
    %p126 = por %p124, %p125
    %p127 = scmp.le.s32.totalorder 1, %s9
    %p128 = scmp.lt.s32.totalorder %s9, 5
    %p129 = pnand %p127, %p128
    %p130 = pneg %p129
    // Predicated region
    $region9: #{double_conv.5} parent=5 // pred_check
      _
    $region10: #{double_conv.5} parent=5 // pred_check_branch
      %132 = sbr.rel (%p129) target = $region12
    $region11: #{double_conv.5} parent=5 // pred_region
      %s133 = ssub.s32 %s9, 1
      // Predicated region
      $region13: #{double_conv.5} parent=11 // pred_check
        %p134 = pneg %p70
      $region14: #{double_conv.5} parent=11 // pred_check_branch
        %136 = sbr.rel (%p134) target = $region16
      $region15: #{double_conv.5} parent=11 // pred_region
        _
      $region16: #{double_conv.5} parent=11 // pred_fallthru
        _
      // Predicated region
      $region17: #{double_conv.5} parent=11 // pred_check
        %p137 = pneg %p91
      $region18: #{double_conv.5} parent=11 // pred_check_branch
        %139 = sbr.rel (%p137) target = $region20
      $region19: #{double_conv.5} parent=11 // pred_region
        _
      $region20: #{double_conv.5} parent=11 // pred_fallthru
        _
    $region12: #{double_conv.5} parent=5 // pred_fallthru
      _
    %p140 = scmp.lt.s32.totalorder %s9, 4
    // Predicated region
    $region21: #{double_conv.5} parent=5 // pred_check
      %p141 = pneg %p140
    $region22: #{double_conv.5} parent=5 // pred_check_branch
      %143 = sbr.rel (%p141) target = $region24
    $region23: #{double_conv.5} parent=5 // pred_region
      // Predicated region
      $region25: #{double_conv.5} parent=23 // pred_check
        %p144 = pneg %p43
      $region26: #{double_conv.5} parent=23 // pred_check_branch
        %146 = sbr.rel (%p144) target = $region28
      $region27: #{double_conv.5} parent=23 // pred_region
        %s147 = smul.u32 8, %s17
        %p148 = scmp.lt.s32.totalorder %s16, 1
        %s149 = scalar_select %p148, %s16, 1
        %p150 = scmp.lt.s32.totalorder %s147, 15
        %s151 = scalar_select %p150, %s147, 15
        %s152 = smul.addr %s151, 2
        %s153 = smul.addr %s149, 32
        %s154 = sadd.s32 %s152, %s153
        %s155 = smul.addr %s154, 4
        %s156 = scalar_lea.vmem %s0, %s155
        %s157 = smul.u32 8, %s17
      $region28: #{double_conv.5} parent=23 // pred_fallthru
        _
    $region24: #{double_conv.5} parent=5 // pred_fallthru
      _
    %p158 = scmp.le.s32.totalorder 1, %s9
    %p159 = scmp.lt.s32.totalorder %s9, 5
    %p160 = pnand %p158, %p159
    %p161 = pneg %p160
    // Predicated region
    $region29: #{double_conv.5} parent=5 // pred_check
      _
    $region30: #{double_conv.5} parent=5 // pred_check_branch
      %163 = sbr.rel (%p160) target = $region32
    $region31: #{double_conv.5} parent=5 // pred_region
      %s164 = ssub.s32 %s9, 1
      %s165 = smul.u32 8, %s19
      %p166 = scmp.lt.s32.totalorder %s18, 1
      %s167 = scalar_select %p166, %s18, 1
      %p168 = scmp.lt.s32.totalorder %s165, 15
      %s169 = scalar_select %p168, %s165, 15
      %s170 = smul.addr %s169, 2
      %s171 = smul.addr %s167, 32
      %s172 = sadd.s32 %s170, %s171
      %s173 = smul.addr %s172, 4
      %s174 = scalar_lea.vmem %s0, %s173
      %p175 = pneg %p49
      %p176 = pneg %p46
      %p177 = pneg %p70
      %p178 = pneg %p67
      %p179 = pneg %p91
      %p180 = pneg %p88
      %p181 = pneg %p119
      %p182 = pneg %p116
      %s183 = smul.u32 8, %s19
      %p184 = scmp.lt.s32.totalorder %s18, 1
      %s185 = scalar_select %p184, %s18, 1
      %p186 = scmp.lt.s32.totalorder %s183, 15
      %s187 = scalar_select %p186, %s183, 15
      %s188 = smul.addr %s187, 2
      %s189 = smul.addr %s185, 32
      %s190 = sadd.s32 %s188, %s189
      %s191 = smul.addr %s190, 8
      %s192 = scalar_lea.vmem %s3, %s191
      %s193 = smul.u32 8, %s19
      %p194 = scmp.lt.s32.totalorder %s18, 1
      %s195 = scalar_select %p194, %s18, 1
      %p196 = scmp.lt.s32.totalorder %s193, 15
      %s197 = scalar_select %p196, %s193, 15
      %s198 = smul.addr %s197, 2
      %s199 = smul.addr %s195, 32
      %s200 = sadd.s32 %s198, %s199
      %s201 = smul.addr %s200, 4
      %s202 = scalar_lea.vmem %s0, %s201
      %s203 = smul.u32 8, %s19
      %s204 = smul.u32 8, %s19
      %p205 = scmp.lt.s32.totalorder %s18, 1
      %s206 = scalar_select %p205, %s18, 1
      %p207 = scmp.lt.s32.totalorder %s204, 15
      %s208 = scalar_select %p207, %s204, 15
      %s209 = smul.addr %s208, 2
      %s210 = smul.addr %s206, 32
      %s211 = sadd.s32 %s209, %s210
      %s212 = smul.addr %s211, 8
      %s213 = scalar_lea.vmem %s3, %s212
      %s214 = smul.u32 8, %s19
      %v215 = vld [vmem:[%s202] sm:$0xf]
      %v216 = vld [vmem:[%s202 + $0x4] sm:$0xf]
      %v217 = vld [vmem:[%s202 + $0x8] sm:$0xf]
      %v218 = vld [vmem:[%s202 + $0xc] sm:$0xf]
      %v219 = vld [vmem:[%s202 + $0x10] sm:$0xf]
      %v220 = vld [vmem:[%s202 + $0x14] sm:$0xf]
      %v221 = vld [vmem:[%s202 + $0x18] sm:$0xf]
      %v222 = vld [vmem:[%s202 + $0x1c] sm:$0xf]
      %v223 = vld [vmem:[%s202 + $0x20] sm:$0xf]
      %v224 = vld [vmem:[%s202 + $0x24] sm:$0xf]
      %v225 = vld [vmem:[%s202 + $0x28] sm:$0xf]
      %v226 = vld [vmem:[%s202 + $0x2c] sm:$0xf]
      %v227 = vld [vmem:[%s202 + $0x30] sm:$0xf]
      %v228 = vld [vmem:[%s202 + $0x34] sm:$0xf]
      %v229 = vld [vmem:[%s202 + $0x38] sm:$0xf]
      %v230 = vld [vmem:[%s202 + $0x3c] sm:$0xf]
      %v231 = vunpack.c.l.bf16 %v215
      %v232 = vunpack.c.l.bf16 %v216
      %v233 = vunpack.c.l.bf16 %v217
      %v234 = vunpack.c.l.bf16 %v218
      %v235 = vunpack.c.l.bf16 %v219
      %v236 = vunpack.c.l.bf16 %v220
      %v237 = vunpack.c.l.bf16 %v221
      %v238 = vunpack.c.l.bf16 %v222
      %v239 = vunpack.c.l.bf16 %v223
      %v240 = vunpack.c.l.bf16 %v224
      %v241 = vunpack.c.l.bf16 %v225
      %v242 = vunpack.c.l.bf16 %v226
      %v243 = vunpack.c.l.bf16 %v227
      %v244 = vunpack.c.l.bf16 %v228
      %v245 = vunpack.c.l.bf16 %v229
      %v246 = vunpack.c.l.bf16 %v230
      %v247 = vld [vmem:[%s1] sm:$0x1]
      %v249 = vperm.slane %v247, 0
      %v251 = vmul.f32 %v231, %v249
      %v252 = vmul.f32 %v232, %v249
      %v253 = vmul.f32 %v233, %v249
      %v254 = vmul.f32 %v234, %v249
      %v255 = vmul.f32 %v235, %v249
      %v256 = vmul.f32 %v236, %v249
      %v257 = vmul.f32 %v237, %v249
      %v258 = vmul.f32 %v238, %v249
      %v259 = vmul.f32 %v239, %v249
      %v260 = vmul.f32 %v240, %v249
      %v261 = vmul.f32 %v241, %v249
      %v262 = vmul.f32 %v242, %v249
      %v263 = vmul.f32 %v243, %v249
      %v264 = vmul.f32 %v244, %v249
      %v265 = vmul.f32 %v245, %v249
      %v266 = vmul.f32 %v246, %v249
      %v267 = vld [vmem:[%s2] sm:$0x1]
      %v269 = vperm.slane %v267, 0
      %v271 = vadd.f32 %v251, %v269
      %v272 = vadd.f32 %v252, %v269
      %v273 = vadd.f32 %v253, %v269
      %v274 = vadd.f32 %v254, %v269
      %v275 = vadd.f32 %v255, %v269
      %v276 = vadd.f32 %v256, %v269
      %v277 = vadd.f32 %v257, %v269
      %v278 = vadd.f32 %v258, %v269
      %v279 = vadd.f32 %v259, %v269
      %v280 = vadd.f32 %v260, %v269
      %v281 = vadd.f32 %v261, %v269
      %v282 = vadd.f32 %v262, %v269
      %v283 = vadd.f32 %v263, %v269
      %v284 = vadd.f32 %v264, %v269
      %v285 = vadd.f32 %v265, %v269
      %v286 = vadd.f32 %v266, %v269
      %v287 = vmax.f32 %v271, 0.0
      %v288 = vmax.f32 %v272, 0.0
      %v289 = vmax.f32 %v273, 0.0
      %v290 = vmax.f32 %v274, 0.0
      %v291 = vmax.f32 %v275, 0.0
      %v292 = vmax.f32 %v276, 0.0
      %v293 = vmax.f32 %v277, 0.0
      %v294 = vmax.f32 %v278, 0.0
      %v295 = vmax.f32 %v279, 0.0
      %v296 = vmax.f32 %v280, 0.0
      %v297 = vmax.f32 %v281, 0.0
      %v298 = vmax.f32 %v282, 0.0
      %v299 = vmax.f32 %v283, 0.0
      %v300 = vmax.f32 %v284, 0.0
      %v301 = vmax.f32 %v285, 0.0
      %v302 = vmax.f32 %v286, 0.0
      %303 = vst [vmem:[%s213] sm:$0xff] %v287
      %304 = vst [vmem:[%s213 + $0x8] sm:$0xff] %v288
      %305 = vst [vmem:[%s213 + $0x10] sm:$0xff] %v289
      %306 = vst [vmem:[%s213 + $0x18] sm:$0xff] %v290
      %307 = vst [vmem:[%s213 + $0x20] sm:$0xff] %v291
      %308 = vst [vmem:[%s213 + $0x28] sm:$0xff] %v292
      %309 = vst [vmem:[%s213 + $0x30] sm:$0xff] %v293
      %310 = vst [vmem:[%s213 + $0x38] sm:$0xff] %v294
      %311 = vst [vmem:[%s213 + $0x40] sm:$0xff] %v295
      %312 = vst [vmem:[%s213 + $0x48] sm:$0xff] %v296
      %313 = vst [vmem:[%s213 + $0x50] sm:$0xff] %v297
      %314 = vst [vmem:[%s213 + $0x58] sm:$0xff] %v298
      %315 = vst [vmem:[%s213 + $0x60] sm:$0xff] %v299
      %316 = vst [vmem:[%s213 + $0x68] sm:$0xff] %v300
      %317 = vst [vmem:[%s213 + $0x70] sm:$0xff] %v301
      %318 = vst [vmem:[%s213 + $0x78] sm:$0xff] %v302
      %s319 = smul.u32 8, %s19
      %p320 = scmp.lt.s32.totalorder %s18, 1
      %s321 = scalar_select %p320, %s18, 1
      %p322 = scmp.lt.s32.totalorder %s319, 15
      %s323 = scalar_select %p322, %s319, 15
      %s324 = smul.addr %s323, 2
      %s325 = smul.addr %s321, 32
      %s326 = sadd.s32 %s324, %s325
      %s327 = smul.addr %s326, 8
      %s328 = scalar_lea.vmem %s3, %s327
      // Predicated region
      $region33: #{double_conv.5} parent=31 // pred_check
        %p329 = pneg %p116
      $region34: #{double_conv.5} parent=31 // pred_check_branch
        %331 = sbr.rel (%p329) target = $region36
      $region35: #{double_conv.5} parent=31 // pred_region
        %s332 = smul.u32 8, %s19
      $region36: #{double_conv.5} parent=31 // pred_fallthru
        _
    $region32: #{double_conv.5} parent=5 // pred_fallthru
      _
    %p333 = scmp.le.s32.totalorder 2, %s9
    // Predicated region
    $region37: #{double_conv.5} parent=5 // pred_check
      %p334 = pneg %p333
    $region38: #{double_conv.5} parent=5 // pred_check_branch
      %336 = sbr.rel (%p334) target = $region40
    $region39: #{double_conv.5} parent=5 // pred_region
      %s337 = ssub.s32 %s9, 2
      // Predicated region
      $region41: #{double_conv.5} parent=39 // pred_check
        %p338 = pneg %p122
      $region42: #{double_conv.5} parent=39 // pred_check_branch
        %340 = sbr.rel (%p338) target = $region44
      $region43: #{double_conv.5} parent=39 // pred_region
        %s341 = smul.u32 8, %s21
        %p342 = scmp.lt.s32.totalorder %s20, 1
        %s343 = scalar_select %p342, %s20, 1
        %p344 = scmp.lt.s32.totalorder %s341, 15
        %s345 = scalar_select %p344, %s341, 15
        %s346 = smul.addr %s345, 2
        %s347 = smul.addr %s343, 32
        %s348 = sadd.s32 %s346, %s347
        %s349 = smul.addr %s348, 8
        %s350 = scalar_lea.vmem %s3, %s349
      $region44: #{double_conv.5} parent=39 // pred_fallthru
        _
    $region40: #{double_conv.5} parent=5 // pred_fallthru
      _
  $region6: #{double_conv.5} parent=0 // loop_footer
    %s13 = sadd.s32 1, %s9
  $region7: #{double_conv.5} parent=0 // loop_footer_branch
    %8 = sbr.rel target = $region3
  $region8: #{double_conv.5} parent=0 // loop_exit
    _

// kernel: double_conv.3
$region0: #{double_conv.3}
  #allocation0 [shape = 'u32[]', space=smem, size = 0x4, offset = 0x4, fixed_abs, tag = 'smem constant byte address 0x4 - core index']
  #allocation1 [shape = 'u32[72,128]{1,0:T(1,128)}', space=vmem, size = 0x9000, scoped, tag = 'internal scratch']
  #allocation2 [shape = 'f32[128,128]{1,0:T(8,128)}', space=vmem, size = 0x10000, scoped, tag = 'scratch operand']
  %s0 = inlined_call_operand.vmem [shape: bf16[2,2,10,18,128], index: 0, kind: input, shape index: {}]
  %s1 = inlined_call_operand.vmem [shape: bf16[3,384,128], index: 1, kind: input, shape index: {}]
  %s2 = inlined_call_operand.vmem [shape: f32[1,128], index: 2, kind: input, shape index: {}]
  %s3 = inlined_call_operand.vmem [shape: f32[1,128], index: 3, kind: input, shape index: {}]
  %s4 = inlined_call_operand.vmem [shape: f32[1,128], index: 4, kind: input, shape index: {}]
  %s5 = inlined_call_operand.vmem [shape: bf16[2,16,16,128], index: 5, kind: output, shape index: {0}]
  %s6 = inlined_call_operand.vmem [shape: f32[2,2,2,128], index: 6, kind: output, shape index: {1}]
  %7 = xla_tuple %s5, %s6
  %s8 = sld [smem:[#allocation0]]
  $region61: #{double_conv.3} parent=0
    _
  %s10 = ssub.s32 1, %s8
  %s11 = scalar_select 0, %s10, %s8
  loop: start=0, step=1, limit=6
  $region2: #{double_conv.3} parent=0 // loop_pre_header
    _
  $region3: #{double_conv.3} parent=0 // loop_header
    %s13 = sphi 0, %s17
    %p14 = scmp.ge.s32.totalorder %s13, 6
    %s20 = sphi 0, %s32
    %s21 = sphi 0, %s28
    %s22 = sphi 0, %s20
    %s23 = sphi 0, %s21
    %s24 = sphi 0, %s22
    %s25 = sphi 0, %s23
    %s37 = sphi 0, %s39
    %s40 = sphi 0, %s37
    %s41 = sphi 0, %s40
    %s57 = sphi 0, %s41
    %s61 = sphi 0, %s61
    %s63 = sphi 0, %s61
    %s64 = sphi 0, %s63
    %s78 = sphi 0, %s64
    %s82 = sphi 0, %s82
    %s84 = sphi 0, %s82
    %s85 = sphi 0, %s84
    %s99 = sphi 0, %s85
    %s103 = sphi 0, %s103
    %s105 = sphi 0, %s103
    %s106 = sphi 0, %s105
    %s120 = sphi 0, %s106
    %s124 = sphi 0, %s124
    %s126 = sphi 0, %s124
    %s127 = sphi 0, %s126
    %s141 = sphi 0, %s127
    %s149 = sphi 0, %s151
    %s152 = sphi 0, %s149
    %s153 = sphi 0, %s152
    %s169 = sphi 0, %s153
    %s177 = sphi 0, %s179
    %s180 = sphi 0, %s177
    %s181 = sphi 0, %s180
    %s197 = sphi 0, %s181
  $region4: #{double_conv.3} parent=0 // loop_header_branch
    %16 = sbr.rel (%p14) target = $region8
  $region5: #{double_conv.3} parent=0 // loop_body
    %s18 = ssub.s32 %s13, 1
    %s19 = ssub.s32 %s13, 2
    %s26 = sadd.s32 1, %s21
    %p27 = scmp.ge.s32.totalorder %s26, 2
    %s28 = scalar_select %p27, 0, %s26
    %s29 = sadd.s32 1, %s20
    %s30 = scalar_select %p27, %s29, %s20
    %p31 = scmp.ge.s32.totalorder %s30, 2
    %s32 = scalar_select %p31, 0, %s30
    %s33 = ssub.s32 %s20, %s32
    %s34 = ssub.s32 %s21, %s28
    %s35 = sor.u32 %s33, %s34
    %p36 = scmp.eq.s32.totalorder %s35, 0
    %s38 = sadd.s32 %s37, 1
    %s39 = scalar_select %p36, %s37, %s38
    %p42 = pneg %p36
    %p43 = scmp.eq.s32.totalorder %s13, 3
    %p44 = por %p42, %p43
    %p45 = scmp.ne.s32.totalorder %s37, %s40
    %p46 = scmp.eq.s32.totalorder %s13, 0
    %p47 = por %p45, %p46
    %p48 = scmp.ne.s32.totalorder %s37, %s40
    %p49 = scmp.eq.s32.totalorder %s18, 3
    %p50 = por %p48, %p49
    %p51 = scmp.ne.s32.totalorder %s40, %s41
    %p52 = scmp.eq.s32.totalorder %s18, 0
    %p53 = por %p51, %p52
    %p54 = scmp.ne.s32.totalorder %s40, %s41
    %p55 = scmp.eq.s32.totalorder %s19, 3
    %p56 = por %p54, %p55
    %p58 = scmp.ne.s32.totalorder %s41, %s57
    %p59 = scmp.eq.s32.totalorder %s19, 0
    %p60 = por %p58, %p59
    %s62 = sadd.s32 %s61, 1
    %p65 = scmp.eq.s32.totalorder %s13, 3
    %p66 = scmp.ne.s32.totalorder %s61, %s63
    %p67 = scmp.eq.s32.totalorder %s13, 0
    %p68 = por %p66, %p67
    %p69 = scmp.ne.s32.totalorder %s61, %s63
    %p70 = scmp.eq.s32.totalorder %s18, 3
    %p71 = por %p69, %p70
    %p72 = scmp.ne.s32.totalorder %s63, %s64
    %p73 = scmp.eq.s32.totalorder %s18, 0
    %p74 = por %p72, %p73
    %p75 = scmp.ne.s32.totalorder %s63, %s64
    %p76 = scmp.eq.s32.totalorder %s19, 3
    %p77 = por %p75, %p76
    %p79 = scmp.ne.s32.totalorder %s64, %s78
    %p80 = scmp.eq.s32.totalorder %s19, 0
    %p81 = por %p79, %p80
    %s83 = sadd.s32 %s82, 1
    %p86 = scmp.eq.s32.totalorder %s13, 3
    %p87 = scmp.ne.s32.totalorder %s82, %s84
    %p88 = scmp.eq.s32.totalorder %s13, 0
    %p89 = por %p87, %p88
    %p90 = scmp.ne.s32.totalorder %s82, %s84
    %p91 = scmp.eq.s32.totalorder %s18, 3
    %p92 = por %p90, %p91
    %p93 = scmp.ne.s32.totalorder %s84, %s85
    %p94 = scmp.eq.s32.totalorder %s18, 0
    %p95 = por %p93, %p94
    %p96 = scmp.ne.s32.totalorder %s84, %s85
    %p97 = scmp.eq.s32.totalorder %s19, 3
    %p98 = por %p96, %p97
    %p100 = scmp.ne.s32.totalorder %s85, %s99
    %p101 = scmp.eq.s32.totalorder %s19, 0
    %p102 = por %p100, %p101
    %s104 = sadd.s32 %s103, 1
    %p107 = scmp.eq.s32.totalorder %s13, 3
    %p108 = scmp.ne.s32.totalorder %s103, %s105
    %p109 = scmp.eq.s32.totalorder %s13, 0
    %p110 = por %p108, %p109
    %p111 = scmp.ne.s32.totalorder %s103, %s105
    %p112 = scmp.eq.s32.totalorder %s18, 3
    %p113 = por %p111, %p112
    %p114 = scmp.ne.s32.totalorder %s105, %s106
    %p115 = scmp.eq.s32.totalorder %s18, 0
    %p116 = por %p114, %p115
    %p117 = scmp.ne.s32.totalorder %s105, %s106
    %p118 = scmp.eq.s32.totalorder %s19, 3
    %p119 = por %p117, %p118
    %p121 = scmp.ne.s32.totalorder %s106, %s120
    %p122 = scmp.eq.s32.totalorder %s19, 0
    %p123 = por %p121, %p122
    %s125 = sadd.s32 %s124, 1
    %p128 = scmp.eq.s32.totalorder %s13, 3
    %p129 = scmp.ne.s32.totalorder %s124, %s126
    %p130 = scmp.eq.s32.totalorder %s13, 0
    %p131 = por %p129, %p130
    %p132 = scmp.ne.s32.totalorder %s124, %s126
    %p133 = scmp.eq.s32.totalorder %s18, 3
    %p134 = por %p132, %p133
    %p135 = scmp.ne.s32.totalorder %s126, %s127
    %p136 = scmp.eq.s32.totalorder %s18, 0
    %p137 = por %p135, %p136
    %p138 = scmp.ne.s32.totalorder %s126, %s127
    %p139 = scmp.eq.s32.totalorder %s19, 3
    %p140 = por %p138, %p139
    %p142 = scmp.ne.s32.totalorder %s127, %s141
    %p143 = scmp.eq.s32.totalorder %s19, 0
    %p144 = por %p142, %p143
    %s145 = ssub.s32 %s20, %s32
    %s146 = ssub.s32 %s21, %s28
    %s147 = sor.u32 %s145, %s146
    %p148 = scmp.eq.s32.totalorder %s147, 0
    %s150 = sadd.s32 %s149, 1
    %s151 = scalar_select %p148, %s149, %s150
    %p154 = pneg %p148
    %p155 = scmp.eq.s32.totalorder %s13, 3
    %p156 = por %p154, %p155
    %p157 = scmp.ne.s32.totalorder %s149, %s152
    %p158 = scmp.eq.s32.totalorder %s13, 0
    %p159 = por %p157, %p158
    %p160 = scmp.ne.s32.totalorder %s149, %s152
    %p161 = scmp.eq.s32.totalorder %s18, 3
    %p162 = por %p160, %p161
    %p163 = scmp.ne.s32.totalorder %s152, %s153
    %p164 = scmp.eq.s32.totalorder %s18, 0
    %p165 = por %p163, %p164
    %p166 = scmp.ne.s32.totalorder %s152, %s153
    %p167 = scmp.eq.s32.totalorder %s19, 3
    %p168 = por %p166, %p167
    %p170 = scmp.ne.s32.totalorder %s153, %s169
    %p171 = scmp.eq.s32.totalorder %s19, 0
    %p172 = por %p170, %p171
    %s173 = ssub.s32 %s20, %s32
    %s174 = ssub.s32 %s21, %s28
    %s175 = sor.u32 %s173, %s174
    %p176 = scmp.eq.s32.totalorder %s175, 0
    %s178 = sadd.s32 %s177, 1
    %s179 = scalar_select %p176, %s177, %s178
    %p182 = pneg %p176
    %p183 = scmp.eq.s32.totalorder %s13, 3
    %p184 = por %p182, %p183
    %p185 = scmp.ne.s32.totalorder %s177, %s180
    %p186 = scmp.eq.s32.totalorder %s13, 0
    %p187 = por %p185, %p186
    %p188 = scmp.ne.s32.totalorder %s177, %s180
    %p189 = scmp.eq.s32.totalorder %s18, 3
    %p190 = por %p188, %p189
    %p191 = scmp.ne.s32.totalorder %s180, %s181
    %p192 = scmp.eq.s32.totalorder %s18, 0
    %p193 = por %p191, %p192
    %p194 = scmp.ne.s32.totalorder %s180, %s181
    %p195 = scmp.eq.s32.totalorder %s19, 3
    %p196 = por %p194, %p195
    %p198 = scmp.ne.s32.totalorder %s181, %s197
    %p199 = scmp.eq.s32.totalorder %s19, 0
    %p200 = por %p198, %p199
    %p201 = scmp.le.s32.totalorder 1, %s13
    %p202 = scmp.lt.s32.totalorder %s13, 5
    %p203 = pnand %p201, %p202
    %p204 = pneg %p203
    // Predicated region
    $region9: #{double_conv.3} parent=5 // pred_check
      _
    $region10: #{double_conv.3} parent=5 // pred_check_branch
      %206 = sbr.rel (%p203) target = $region12
    $region11: #{double_conv.3} parent=5 // pred_region
      %s207 = ssub.s32 %s13, 1
      // Predicated region
      $region13: #{double_conv.3} parent=11 // pred_check
        %p208 = pneg %p74
      $region14: #{double_conv.3} parent=11 // pred_check_branch
        %210 = sbr.rel (%p208) target = $region16
      $region15: #{double_conv.3} parent=11 // pred_region
        _
      $region16: #{double_conv.3} parent=11 // pred_fallthru
        _
      // Predicated region
      $region17: #{double_conv.3} parent=11 // pred_check
        %p211 = pneg %p95
      $region18: #{double_conv.3} parent=11 // pred_check_branch
        %213 = sbr.rel (%p211) target = $region20
      $region19: #{double_conv.3} parent=11 // pred_region
        _
      $region20: #{double_conv.3} parent=11 // pred_fallthru
        _
      // Predicated region
      $region21: #{double_conv.3} parent=11 // pred_check
        %p214 = pneg %p116
      $region22: #{double_conv.3} parent=11 // pred_check_branch
        %216 = sbr.rel (%p214) target = $region24
      $region23: #{double_conv.3} parent=11 // pred_region
        _
      $region24: #{double_conv.3} parent=11 // pred_fallthru
        _
      // Predicated region
      $region25: #{double_conv.3} parent=11 // pred_check
        %p217 = pneg %p137
      $region26: #{double_conv.3} parent=11 // pred_check_branch
        %219 = sbr.rel (%p217) target = $region28
      $region27: #{double_conv.3} parent=11 // pred_region
        _
      $region28: #{double_conv.3} parent=11 // pred_fallthru
        _
    $region12: #{double_conv.3} parent=5 // pred_fallthru
      _
    %p220 = scmp.lt.s32.totalorder %s13, 4
    // Predicated region
    $region29: #{double_conv.3} parent=5 // pred_check
      %p221 = pneg %p220
    $region30: #{double_conv.3} parent=5 // pred_check_branch
      %223 = sbr.rel (%p221) target = $region32
    $region31: #{double_conv.3} parent=5 // pred_region
      // Predicated region
      $region33: #{double_conv.3} parent=31 // pred_check
        %p224 = pneg %p47
      $region34: #{double_conv.3} parent=31 // pred_check_branch
        %226 = sbr.rel (%p224) target = $region36
      $region35: #{double_conv.3} parent=31 // pred_region
        %p227 = scmp.lt.s32.totalorder %s20, 1
        %s228 = scalar_select %p227, %s20, 1
        %p229 = scmp.lt.s32.totalorder %s21, 1
        %s230 = scalar_select %p229, %s21, 1
        %s231 = smul.addr %s230, 30
        %s232 = smul.addr %s228, 60
        %s233 = sadd.s32 %s231, %s232
        %s234 = smul.addr %s233, 4
        %s235 = scalar_lea.vmem %s0, %s234
      $region36: #{double_conv.3} parent=31 // pred_fallthru
        _
    $region32: #{double_conv.3} parent=5 // pred_fallthru
      _
    %p236 = scmp.le.s32.totalorder 1, %s13
    %p237 = scmp.lt.s32.totalorder %s13, 5
    %p238 = pnand %p236, %p237
    %p239 = pneg %p238
    // Predicated region
    $region37: #{double_conv.3} parent=5 // pred_check
      _
    $region38: #{double_conv.3} parent=5 // pred_check_branch
      %241 = sbr.rel (%p238) target = $region40
    $region39: #{double_conv.3} parent=5 // pred_region
      %s242 = ssub.s32 %s13, 1
      %p243 = scmp.lt.s32.totalorder %s22, 1
      %s244 = scalar_select %p243, %s22, 1
      %p245 = scmp.lt.s32.totalorder %s23, 1
      %s246 = scalar_select %p245, %s23, 1
      %s247 = smul.addr %s246, 30
      %s248 = smul.addr %s244, 60
      %s249 = sadd.s32 %s247, %s248
      %s250 = smul.addr %s249, 4
      %s251 = scalar_lea.vmem %s0, %s250
      %p252 = pneg %p53
      %p253 = pneg %p50
      %p254 = pneg %p74
      %p255 = pneg %p71
      %p256 = pneg %p95
      %p257 = pneg %p92
      %p258 = pneg %p116
      %p259 = pneg %p113
      %p260 = pneg %p137
      %p261 = pneg %p134
      %p262 = pneg %p165
      %p263 = pneg %p162
      %s264 = smul.u32 8, %s23
      %p265 = scmp.lt.s32.totalorder %s22, 1
      %s266 = scalar_select %p265, %s22, 1
      %p267 = scmp.lt.s32.totalorder %s264, 15
      %s268 = scalar_select %p267, %s264, 15
      %s269 = smul.addr %s268, 2
      %s270 = smul.addr %s266, 32
      %s271 = sadd.s32 %s269, %s270
      %s272 = smul.addr %s271, 4
      %s273 = scalar_lea.vmem %s5, %s272
      %p274 = pneg %p193
      %p275 = pneg %p190
      %p276 = scmp.lt.s32.totalorder %s22, 1
      %s277 = scalar_select %p276, %s22, 1
      %p278 = scmp.lt.s32.totalorder %s23, 1
      %s279 = scalar_select %p278, %s23, 1
      %s280 = smul.addr %s277, 2
      %s281 = sadd.s32 %s279, %s280
      %s282 = smul.addr %s281, 2
      %s283 = scalar_lea.vmem %s6, %s282
      %p284 = scmp.lt.s32.totalorder %s22, 1
      %s285 = scalar_select %p284, %s22, 1
      %p286 = scmp.lt.s32.totalorder %s23, 1
      %s287 = scalar_select %p286, %s23, 1
      %s288 = smul.addr %s287, 30
      %s289 = smul.addr %s285, 60
      %s290 = sadd.s32 %s288, %s289
      %s291 = smul.addr %s290, 4
      %s292 = scalar_lea.vmem %s0, %s291
      %s293 = smul.u32 8, %s23
      %p294 = scmp.lt.s32.totalorder %s22, 1
      %s295 = scalar_select %p294, %s22, 1
      %p296 = scmp.lt.s32.totalorder %s293, 15
      %s297 = scalar_select %p296, %s293, 15
      %s298 = smul.addr %s297, 2
      %s299 = smul.addr %s295, 32
      %s300 = sadd.s32 %s298, %s299
      %s301 = smul.addr %s300, 4
      %s302 = scalar_lea.vmem %s5, %s301
      %s303 = smul.u32 8, %s23
      %p304 = scmp.lt.s32.totalorder %s22, 1
      %s305 = scalar_select %p304, %s22, 1
      %p306 = scmp.lt.s32.totalorder %s23, 1
      %s307 = scalar_select %p306, %s23, 1
      %s308 = smul.addr %s305, 2
      %s309 = sadd.s32 %s307, %s308
      %s310 = smul.addr %s309, 2
      %s311 = scalar_lea.vmem %s6, %s310
      %v312 = vld [vmem:[%s292] sm:$0xf]
      %v313 = vld [vmem:[%s292 + $0x4] sm:$0xf]
      %v314 = vld [vmem:[%s292 + $0x8] sm:$0x1]
      %v315 = vld [vmem:[%s292 + $0xc] sm:$0xf]
      %v316 = vld [vmem:[%s292 + $0x10] sm:$0xf]
      %v317 = vld [vmem:[%s292 + $0x14] sm:$0x1]
      %v318 = vld [vmem:[%s292 + $0x18] sm:$0xf]
      %v319 = vld [vmem:[%s292 + $0x1c] sm:$0xf]
      %v320 = vld [vmem:[%s292 + $0x20] sm:$0x1]
      %v321 = vld [vmem:[%s292 + $0x24] sm:$0xf]
      %v322 = vld [vmem:[%s292 + $0x28] sm:$0xf]
      %v323 = vld [vmem:[%s292 + $0x2c] sm:$0x1]
      %v324 = vld [vmem:[%s292 + $0x30] sm:$0xf]
      %v325 = vld [vmem:[%s292 + $0x34] sm:$0xf]
      %v326 = vld [vmem:[%s292 + $0x38] sm:$0x1]
      %v327 = vld [vmem:[%s292 + $0x3c] sm:$0xf]
      %v328 = vld [vmem:[%s292 + $0x40] sm:$0xf]
      %v329 = vld [vmem:[%s292 + $0x44] sm:$0x1]
      %v330 = vld [vmem:[%s292 + $0x48] sm:$0xf]
      %v331 = vld [vmem:[%s292 + $0x4c] sm:$0xf]
      %v332 = vld [vmem:[%s292 + $0x50] sm:$0x1]
      %v333 = vld [vmem:[%s292 + $0x54] sm:$0xf]
      %v334 = vld [vmem:[%s292 + $0x58] sm:$0xf]
      %v335 = vld [vmem:[%s292 + $0x5c] sm:$0x1]
      %v336 = vld [vmem:[%s292 + $0x60] sm:$0xf]
      %v337 = vld [vmem:[%s292 + $0x64] sm:$0xf]
      %v338 = vld [vmem:[%s292 + $0x68] sm:$0x1]
      %v339 = vld [vmem:[%s292 + $0x6c] sm:$0xf]
      %v340 = vld [vmem:[%s292 + $0x70] sm:$0xf]
      %v341 = vld [vmem:[%s292 + $0x74] sm:$0x1]
      %v362 = vunpack.c.l.b16 %v312
      %v363 = vunpack.c.l.b16 %v313
      %v364 = vunpack.c.l.b16 %v315
      %v365 = vunpack.c.l.b16 %v316
      %v366 = vunpack.c.l.b16 %v318
      %v367 = vunpack.c.l.b16 %v319
      %v368 = vunpack.c.l.b16 %v321
      %v369 = vunpack.c.l.b16 %v322
      %v370 = vunpack.c.l.b16 %v324
      %v371 = vunpack.c.l.b16 %v325
      %v372 = vunpack.c.l.b16 %v327
      %v373 = vunpack.c.l.b16 %v328
      %v374 = vunpack.c.l.b16 %v330
      %v375 = vunpack.c.l.b16 %v331
      %v376 = vunpack.c.l.b16 %v333
      %v377 = vunpack.c.l.b16 %v334
      %v378 = vunpack.c.l.b16 %v336
      %v379 = vunpack.c.l.b16 %v337
      %v380 = vunpack.c.l.b16 %v339
      %v381 = vunpack.c.l.b16 %v340
      %v382 = vpack.c.b16 %v363, %v362
      %v383 = vpack.c.b16 %v365, %v364
      %v384 = vpack.c.b16 %v367, %v366
      %v385 = vpack.c.b16 %v369, %v368
      %v386 = vpack.c.b16 %v371, %v370
      %v387 = vpack.c.b16 %v373, %v372
      %v388 = vpack.c.b16 %v375, %v374
      %v389 = vpack.c.b16 %v377, %v376
      %v390 = vpack.c.b16 %v379, %v378
      %v391 = vpack.c.b16 %v381, %v380
      %v412 = vunpack.c.l.b16 %v314
      %v413 = vunpack.c.l.b16 %v317
      %v414 = vunpack.c.l.b16 %v320
      %v415 = vunpack.c.l.b16 %v323
      %v416 = vunpack.c.l.b16 %v326
      %v417 = vunpack.c.l.b16 %v329
      %v418 = vunpack.c.l.b16 %v332
      %v419 = vunpack.c.l.b16 %v335
      %v420 = vunpack.c.l.b16 %v338
      %v421 = vunpack.c.l.b16 %v341
      %v422 = vpack.c.b16 %v412, %v412
      %v423 = vpack.c.b16 %v413, %v413
      %v424 = vpack.c.b16 %v414, %v414
      %v425 = vpack.c.b16 %v415, %v415
      %v426 = vpack.c.b16 %v416, %v416
      %v427 = vpack.c.b16 %v417, %v417
      %v428 = vpack.c.b16 %v418, %v418
      %v429 = vpack.c.b16 %v419, %v419
      %v430 = vpack.c.b16 %v420, %v420
      %v431 = vpack.c.b16 %v421, %v421
      %vm432 = vsmask.f32 7424
      %v434 = vshrl.u32 %v382, 16
      %v436 = vshll.u32 %v382, 16
      %v438 = vrot.slane %v436, 1
      %v439 = vor.u32 %v434, %v438
      %v441 = vshll.u32 %v422, 16
      %v443 = vrot.slane %v441, 1
      %v444 = vsel %vm432, %v439, %v443
      %v446 = vshrl.u32 %v383, 16
      %v448 = vshll.u32 %v383, 16
      %v450 = vrot.slane %v448, 1
      %v451 = vor.u32 %v446, %v450
      %v453 = vshll.u32 %v423, 16
      %v455 = vrot.slane %v453, 1
      %v456 = vsel %vm432, %v451, %v455
      %v458 = vshrl.u32 %v384, 16
      %v460 = vshll.u32 %v384, 16
      %v462 = vrot.slane %v460, 1
      %v463 = vor.u32 %v458, %v462
      %v465 = vshll.u32 %v424, 16
      %v467 = vrot.slane %v465, 1
      %v468 = vsel %vm432, %v463, %v467
      %v470 = vshrl.u32 %v385, 16
      %v472 = vshll.u32 %v385, 16
      %v474 = vrot.slane %v472, 1
      %v475 = vor.u32 %v470, %v474
      %v477 = vshll.u32 %v425, 16
      %v479 = vrot.slane %v477, 1
      %v480 = vsel %vm432, %v475, %v479
      %v482 = vshrl.u32 %v386, 16
      %v484 = vshll.u32 %v386, 16
      %v486 = vrot.slane %v484, 1
      %v487 = vor.u32 %v482, %v486
      %v489 = vshll.u32 %v426, 16
      %v491 = vrot.slane %v489, 1
      %v492 = vsel %vm432, %v487, %v491
      %v494 = vshrl.u32 %v387, 16
      %v496 = vshll.u32 %v387, 16
      %v498 = vrot.slane %v496, 1
      %v499 = vor.u32 %v494, %v498
      %v501 = vshll.u32 %v427, 16
      %v503 = vrot.slane %v501, 1
      %v504 = vsel %vm432, %v499, %v503
      %v506 = vshrl.u32 %v388, 16
      %v508 = vshll.u32 %v388, 16
      %v510 = vrot.slane %v508, 1
      %v511 = vor.u32 %v506, %v510
      %v513 = vshll.u32 %v428, 16
      %v515 = vrot.slane %v513, 1
      %v516 = vsel %vm432, %v511, %v515
      %v518 = vshrl.u32 %v389, 16
      %v520 = vshll.u32 %v389, 16
      %v522 = vrot.slane %v520, 1
      %v523 = vor.u32 %v518, %v522
      %v525 = vshll.u32 %v429, 16
      %v527 = vrot.slane %v525, 1
      %v528 = vsel %vm432, %v523, %v527
      %v530 = vshrl.u32 %v390, 16
      %v532 = vshll.u32 %v390, 16
      %v534 = vrot.slane %v532, 1
      %v535 = vor.u32 %v530, %v534
      %v537 = vshll.u32 %v430, 16
      %v539 = vrot.slane %v537, 1
      %v540 = vsel %vm432, %v535, %v539
      %v542 = vshrl.u32 %v391, 16
      %v544 = vshll.u32 %v391, 16
      %v546 = vrot.slane %v544, 1
      %v547 = vor.u32 %v542, %v546
      %v549 = vshll.u32 %v431, 16
      %v551 = vrot.slane %v549, 1
      %v552 = vsel %vm432, %v547, %v551
      %vm563 = vcmask 1046528
      %v564 = vrot.slane %v382, 1
      %v565 = vrot.slane %v422, 1
      %v566 = vsel %vm563, %v564, %v565
      %v567 = vrot.slane %v383, 1
      %v568 = vrot.slane %v423, 1
      %v569 = vsel %vm563, %v567, %v568
      %v570 = vrot.slane %v384, 1
      %v571 = vrot.slane %v424, 1
      %v572 = vsel %vm563, %v570, %v571
      %v573 = vrot.slane %v385, 1
      %v574 = vrot.slane %v425, 1
      %v575 = vsel %vm563, %v573, %v574
      %v576 = vrot.slane %v386, 1
      %v577 = vrot.slane %v426, 1
      %v578 = vsel %vm563, %v576, %v577
      %v579 = vrot.slane %v387, 1
      %v580 = vrot.slane %v427, 1
      %v581 = vsel %vm563, %v579, %v580
      %v582 = vrot.slane %v388, 1
      %v583 = vrot.slane %v428, 1
      %v584 = vsel %vm563, %v582, %v583
      %v585 = vrot.slane %v389, 1
      %v586 = vrot.slane %v429, 1
      %v587 = vsel %vm563, %v585, %v586
      %v588 = vrot.slane %v390, 1
      %v589 = vrot.slane %v430, 1
      %v590 = vsel %vm563, %v588, %v589
      %v591 = vrot.slane %v391, 1
      %v592 = vrot.slane %v431, 1
      %v593 = vsel %vm563, %v591, %v592
      %v604 = vld [vmem:[%s1] sm:$0xf]
      %v605 = vld [vmem:[%s1 + $0x4] sm:$0xf]
      %v606 = vld [vmem:[%s1 + $0x8] sm:$0xf]
      %v607 = vld [vmem:[%s1 + $0xc] sm:$0xf]
      %v608 = vld [vmem:[%s1 + $0x10] sm:$0xf]
      %v609 = vld [vmem:[%s1 + $0x14] sm:$0xf]
      %v610 = vld [vmem:[%s1 + $0x18] sm:$0xf]
      %v611 = vld [vmem:[%s1 + $0x1c] sm:$0xf]
      %v612 = vld [vmem:[%s1 + $0x20] sm:$0xf]
      %v613 = vld [vmem:[%s1 + $0x24] sm:$0xf]
      %v614 = vld [vmem:[%s1 + $0x28] sm:$0xf]
      %v615 = vld [vmem:[%s1 + $0x2c] sm:$0xf]
      %v616 = vld [vmem:[%s1 + $0x30] sm:$0xf]
      %v617 = vld [vmem:[%s1 + $0x34] sm:$0xf]
      %v618 = vld [vmem:[%s1 + $0x38] sm:$0xf]
      %v619 = vld [vmem:[%s1 + $0x3c] sm:$0xf]
      %v620 = vld [vmem:[%s1 + $0x40] sm:$0xf]
      %v621 = vld [vmem:[%s1 + $0x44] sm:$0xf]
      %v622 = vld [vmem:[%s1 + $0x48] sm:$0xf]
      %v623 = vld [vmem:[%s1 + $0x4c] sm:$0xf]
      %v624 = vld [vmem:[%s1 + $0x50] sm:$0xf]
      %v625 = vld [vmem:[%s1 + $0x54] sm:$0xf]
      %v626 = vld [vmem:[%s1 + $0x58] sm:$0xf]
      %v627 = vld [vmem:[%s1 + $0x5c] sm:$0xf]
      %v628 = vld [vmem:[%s1 + $0x60] sm:$0xf]
      %v629 = vld [vmem:[%s1 + $0x64] sm:$0xf]
      %v630 = vld [vmem:[%s1 + $0x68] sm:$0xf]
      %v631 = vld [vmem:[%s1 + $0x6c] sm:$0xf]
      %v632 = vld [vmem:[%s1 + $0x70] sm:$0xf]
      %v633 = vld [vmem:[%s1 + $0x74] sm:$0xf]
      %v634 = vld [vmem:[%s1 + $0x78] sm:$0xf]
      %v635 = vld [vmem:[%s1 + $0x7c] sm:$0xf]
      %v636 = vld [vmem:[%s1 + $0x80] sm:$0xf]
      %v637 = vld [vmem:[%s1 + $0x84] sm:$0xf]
      %v638 = vld [vmem:[%s1 + $0x88] sm:$0xf]
      %v639 = vld [vmem:[%s1 + $0x8c] sm:$0xf]
      %v640 = vld [vmem:[%s1 + $0x90] sm:$0xf]
      %v641 = vld [vmem:[%s1 + $0x94] sm:$0xf]
      %v642 = vld [vmem:[%s1 + $0x98] sm:$0xf]
      %v643 = vld [vmem:[%s1 + $0x9c] sm:$0xf]
      %v644 = vld [vmem:[%s1 + $0xa0] sm:$0xf]
      %v645 = vld [vmem:[%s1 + $0xa4] sm:$0xf]
      %v646 = vld [vmem:[%s1 + $0xa8] sm:$0xf]
      %v647 = vld [vmem:[%s1 + $0xac] sm:$0xf]
      %v648 = vld [vmem:[%s1 + $0xb0] sm:$0xf]
      %v649 = vld [vmem:[%s1 + $0xb4] sm:$0xf]
      %v650 = vld [vmem:[%s1 + $0xb8] sm:$0xf]
      %v651 = vld [vmem:[%s1 + $0xbc] sm:$0xf]
      %v700 = vunpack.c.l.b16 %v604
      %v701 = vunpack.c.l.b16 %v605
      %v702 = vunpack.c.l.b16 %v606
      %v703 = vunpack.c.l.b16 %v607
      %v704 = vunpack.c.l.b16 %v608
      %v705 = vunpack.c.l.b16 %v609
      %v706 = vunpack.c.l.b16 %v610
      %v707 = vunpack.c.l.b16 %v611
      %v708 = vunpack.c.l.b16 %v612
      %v709 = vunpack.c.l.b16 %v613
      %v710 = vunpack.c.l.b16 %v614
      %v711 = vunpack.c.l.b16 %v615
      %v712 = vunpack.c.l.b16 %v616
      %v713 = vunpack.c.l.b16 %v617
      %v714 = vunpack.c.l.b16 %v618
      %v715 = vunpack.c.l.b16 %v619
      %v716 = vunpack.c.l.b16 %v620
      %v717 = vunpack.c.l.b16 %v621
      %v718 = vunpack.c.l.b16 %v622
      %v719 = vunpack.c.l.b16 %v623
      %v720 = vunpack.c.l.b16 %v624
      %v721 = vunpack.c.l.b16 %v625
      %v722 = vunpack.c.l.b16 %v626
      %v723 = vunpack.c.l.b16 %v627
      %v724 = vunpack.c.l.b16 %v628
      %v725 = vunpack.c.l.b16 %v629
      %v726 = vunpack.c.l.b16 %v630
      %v727 = vunpack.c.l.b16 %v631
      %v728 = vunpack.c.l.b16 %v632
      %v729 = vunpack.c.l.b16 %v633
      %v730 = vunpack.c.l.b16 %v634
      %v731 = vunpack.c.l.b16 %v635
      %v732 = vunpack.c.l.b16 %v636
      %v733 = vunpack.c.l.b16 %v637
      %v734 = vunpack.c.l.b16 %v638
      %v735 = vunpack.c.l.b16 %v639
      %v736 = vunpack.c.l.b16 %v640
      %v737 = vunpack.c.l.b16 %v641
      %v738 = vunpack.c.l.b16 %v642
      %v739 = vunpack.c.l.b16 %v643
      %v740 = vunpack.c.l.b16 %v644
      %v741 = vunpack.c.l.b16 %v645
      %v742 = vunpack.c.l.b16 %v646
      %v743 = vunpack.c.l.b16 %v647
      %v744 = vunpack.c.l.b16 %v648
      %v745 = vunpack.c.l.b16 %v649
      %v746 = vunpack.c.l.b16 %v650
      %v747 = vunpack.c.l.b16 %v651
      %v748 = vpack.c.b16 %v701, %v700
      %v749 = vpack.c.b16 %v703, %v702
      %v750 = vpack.c.b16 %v705, %v704
      %v751 = vpack.c.b16 %v707, %v706
      %v752 = vpack.c.b16 %v709, %v708
      %v753 = vpack.c.b16 %v711, %v710
      %v754 = vpack.c.b16 %v713, %v712
      %v755 = vpack.c.b16 %v715, %v714
      %v756 = vpack.c.b16 %v717, %v716
      %v757 = vpack.c.b16 %v719, %v718
      %v758 = vpack.c.b16 %v721, %v720
      %v759 = vpack.c.b16 %v723, %v722
      %v760 = vpack.c.b16 %v725, %v724
      %v761 = vpack.c.b16 %v727, %v726
      %v762 = vpack.c.b16 %v729, %v728
      %v763 = vpack.c.b16 %v731, %v730
      %v764 = vpack.c.b16 %v733, %v732
      %v765 = vpack.c.b16 %v735, %v734
      %v766 = vpack.c.b16 %v737, %v736
      %v767 = vpack.c.b16 %v739, %v738
      %v768 = vpack.c.b16 %v741, %v740
      %v769 = vpack.c.b16 %v743, %v742
      %v770 = vpack.c.b16 %v745, %v744
      %v771 = vpack.c.b16 %v747, %v746
      %796 = vmatpush.bf16.msra.mxu0 %v755
      %797 = vmatpush.bf16.msra.mxu0 %v754
      %798 = vmatpush.bf16.msra.mxu0 %v753
      %799 = vmatpush.bf16.msra.mxu0 %v752
      %800 = vmatpush.bf16.msra.mxu0 %v751
      %801 = vmatpush.bf16.msra.mxu0 %v750
      %802 = vmatpush.bf16.msra.mxu0 %v749
      %803 = vmatpush.bf16.msra.mxu0 %v748
      %804 = vmatmul.bf16.gmra.mxu0 %v382
      %v805 = vpop.f32.mrf.mxu0
      %v806 = vadd.f32 0.0, %v805
      %v807 = vpop.f32.mrf.mxu0
      %v808 = vadd.f32 0.0, %v807
      %809 = vmatmul.bf16.gmra.mxu0 %v383
      %v810 = vpop.f32.mrf.mxu0
      %v811 = vadd.f32 0.0, %v810
      %v812 = vpop.f32.mrf.mxu0
      %v813 = vadd.f32 0.0, %v812
      %814 = vmatmul.bf16.gmra.mxu0 %v384
      %v815 = vpop.f32.mrf.mxu0
      %v816 = vadd.f32 0.0, %v815
      %v817 = vpop.f32.mrf.mxu0
      %v818 = vadd.f32 0.0, %v817
      %819 = vmatmul.bf16.gmra.mxu0 %v385
      %v820 = vpop.f32.mrf.mxu0
      %v821 = vadd.f32 0.0, %v820
      %v822 = vpop.f32.mrf.mxu0
      %v823 = vadd.f32 0.0, %v822
      %824 = vmatmul.bf16.gmra.mxu0 %v386
      %v825 = vpop.f32.mrf.mxu0
      %v826 = vadd.f32 0.0, %v825
      %v827 = vpop.f32.mrf.mxu0
      %v828 = vadd.f32 0.0, %v827
      %829 = vmatmul.bf16.gmra.mxu0 %v387
      %v830 = vpop.f32.mrf.mxu0
      %v831 = vadd.f32 0.0, %v830
      %v832 = vpop.f32.mrf.mxu0
      %v833 = vadd.f32 0.0, %v832
      %834 = vmatmul.bf16.gmra.mxu0 %v388
      %v835 = vpop.f32.mrf.mxu0
      %v836 = vadd.f32 0.0, %v835
      %v837 = vpop.f32.mrf.mxu0
      %v838 = vadd.f32 0.0, %v837
      %839 = vmatmul.bf16.gmra.mxu0 %v389
      %v840 = vpop.f32.mrf.mxu0
      %v841 = vadd.f32 0.0, %v840
      %v842 = vpop.f32.mrf.mxu0
      %v843 = vadd.f32 0.0, %v842
      %844 = vdwg.mxu0
      %845 = vmatpush.bf16.msra.mxu0 %v763
      %846 = vmatpush.bf16.msra.mxu0 %v762
      %847 = vmatpush.bf16.msra.mxu0 %v761
      %848 = vmatpush.bf16.msra.mxu0 %v760
      %849 = vmatpush.bf16.msra.mxu0 %v759
      %850 = vmatpush.bf16.msra.mxu0 %v758
      %851 = vmatpush.bf16.msra.mxu0 %v757
      %852 = vmatpush.bf16.msra.mxu0 %v756
      %853 = vmatmul.bf16.gmra.mxu0 %v444
      %v854 = vpop.f32.mrf.mxu0
      %v855 = vadd.f32 %v806, %v854
      %v856 = vpop.f32.mrf.mxu0
      %v857 = vadd.f32 %v808, %v856
      %858 = vmatmul.bf16.gmra.mxu0 %v456
      %v859 = vpop.f32.mrf.mxu0
      %v860 = vadd.f32 %v811, %v859
      %v861 = vpop.f32.mrf.mxu0
      %v862 = vadd.f32 %v813, %v861
      %863 = vmatmul.bf16.gmra.mxu0 %v468
      %v864 = vpop.f32.mrf.mxu0
      %v865 = vadd.f32 %v816, %v864
      %v866 = vpop.f32.mrf.mxu0
      %v867 = vadd.f32 %v818, %v866
      %868 = vmatmul.bf16.gmra.mxu0 %v480
      %v869 = vpop.f32.mrf.mxu0
      %v870 = vadd.f32 %v821, %v869
      %v871 = vpop.f32.mrf.mxu0
      %v872 = vadd.f32 %v823, %v871
      %873 = vmatmul.bf16.gmra.mxu0 %v492
      %v874 = vpop.f32.mrf.mxu0
      %v875 = vadd.f32 %v826, %v874
      %v876 = vpop.f32.mrf.mxu0
      %v877 = vadd.f32 %v828, %v876
      %878 = vmatmul.bf16.gmra.mxu0 %v504
      %v879 = vpop.f32.mrf.mxu0
      %v880 = vadd.f32 %v831, %v879
      %v881 = vpop.f32.mrf.mxu0
      %v882 = vadd.f32 %v833, %v881
      %883 = vmatmul.bf16.gmra.mxu0 %v516
      %v884 = vpop.f32.mrf.mxu0
      %v885 = vadd.f32 %v836, %v884
      %v886 = vpop.f32.mrf.mxu0
      %v887 = vadd.f32 %v838, %v886
      %888 = vmatmul.bf16.gmra.mxu0 %v528
      %v889 = vpop.f32.mrf.mxu0
      %v890 = vadd.f32 %v841, %v889
      %v891 = vpop.f32.mrf.mxu0
      %v892 = vadd.f32 %v843, %v891
      %893 = vdwg.mxu0
      %894 = vmatpush.bf16.msra.mxu0 %v771
      %895 = vmatpush.bf16.msra.mxu0 %v770
      %896 = vmatpush.bf16.msra.mxu0 %v769
      %897 = vmatpush.bf16.msra.mxu0 %v768
      %898 = vmatpush.bf16.msra.mxu0 %v767
      %899 = vmatpush.bf16.msra.mxu0 %v766
      %900 = vmatpush.bf16.msra.mxu0 %v765
      %901 = vmatpush.bf16.msra.mxu0 %v764
      %902 = vmatmul.bf16.gmra.mxu0 %v566
      %v903 = vpop.f32.mrf.mxu0
      %v904 = vadd.f32 %v855, %v903
      %v905 = vpop.f32.mrf.mxu0
      %v906 = vadd.f32 %v857, %v905
      %907 = vmatmul.bf16.gmra.mxu0 %v569
      %v908 = vpop.f32.mrf.mxu0
      %v909 = vadd.f32 %v860, %v908
      %v910 = vpop.f32.mrf.mxu0
      %v911 = vadd.f32 %v862, %v910
      %912 = vmatmul.bf16.gmra.mxu0 %v572
      %v913 = vpop.f32.mrf.mxu0
      %v914 = vadd.f32 %v865, %v913
      %v915 = vpop.f32.mrf.mxu0
      %v916 = vadd.f32 %v867, %v915
      %917 = vmatmul.bf16.gmra.mxu0 %v575
      %v918 = vpop.f32.mrf.mxu0
      %v919 = vadd.f32 %v870, %v918
      %v920 = vpop.f32.mrf.mxu0
      %v921 = vadd.f32 %v872, %v920
      %922 = vmatmul.bf16.gmra.mxu0 %v578
      %v923 = vpop.f32.mrf.mxu0
      %v924 = vadd.f32 %v875, %v923
      %v925 = vpop.f32.mrf.mxu0
      %v926 = vadd.f32 %v877, %v925
      %927 = vmatmul.bf16.gmra.mxu0 %v581
      %v928 = vpop.f32.mrf.mxu0
      %v929 = vadd.f32 %v880, %v928
      %v930 = vpop.f32.mrf.mxu0
      %v931 = vadd.f32 %v882, %v930
      %932 = vmatmul.bf16.gmra.mxu0 %v584
      %v933 = vpop.f32.mrf.mxu0
      %v934 = vadd.f32 %v885, %v933
      %v935 = vpop.f32.mrf.mxu0
      %v936 = vadd.f32 %v887, %v935
      %937 = vmatmul.bf16.gmra.mxu0 %v587
      %v938 = vpop.f32.mrf.mxu0
      %v939 = vadd.f32 %v890, %v938
      %v940 = vpop.f32.mrf.mxu0
      %v941 = vadd.f32 %v892, %v940
      %942 = vdwg.mxu0
      %943 = vst [vmem:[#allocation2] sm:$0xff] %v904
      %944 = vst [vmem:[#allocation2 + $0x8] sm:$0xff] %v906
      %945 = vst [vmem:[#allocation2 + $0x10] sm:$0xff] %v909
      %946 = vst [vmem:[#allocation2 + $0x18] sm:$0xff] %v911
      %947 = vst [vmem:[#allocation2 + $0x20] sm:$0xff] %v914
      %948 = vst [vmem:[#allocation2 + $0x28] sm:$0xff] %v916
      %949 = vst [vmem:[#allocation2 + $0x30] sm:$0xff] %v919
      %950 = vst [vmem:[#allocation2 + $0x38] sm:$0xff] %v921
      %951 = vst [vmem:[#allocation2 + $0x40] sm:$0xff] %v924
      %952 = vst [vmem:[#allocation2 + $0x48] sm:$0xff] %v926
      %953 = vst [vmem:[#allocation2 + $0x50] sm:$0xff] %v929
      %954 = vst [vmem:[#allocation2 + $0x58] sm:$0xff] %v931
      %955 = vst [vmem:[#allocation2 + $0x60] sm:$0xff] %v934
      %956 = vst [vmem:[#allocation2 + $0x68] sm:$0xff] %v936
      %957 = vst [vmem:[#allocation2 + $0x70] sm:$0xff] %v939
      %958 = vst [vmem:[#allocation2 + $0x78] sm:$0xff] %v941
      %s959 = scalar_lea.vmem %s1, 192
      %v960 = vld [vmem:[%s959] sm:$0xf]
      %v961 = vld [vmem:[%s959 + $0x4] sm:$0xf]
      %v962 = vld [vmem:[%s959 + $0x8] sm:$0xf]
      %v963 = vld [vmem:[%s959 + $0xc] sm:$0xf]
      %v964 = vld [vmem:[%s959 + $0x10] sm:$0xf]
      %v965 = vld [vmem:[%s959 + $0x14] sm:$0xf]
      %v966 = vld [vmem:[%s959 + $0x18] sm:$0xf]
      %v967 = vld [vmem:[%s959 + $0x1c] sm:$0xf]
      %v968 = vld [vmem:[%s959 + $0x20] sm:$0xf]
      %v969 = vld [vmem:[%s959 + $0x24] sm:$0xf]
      %v970 = vld [vmem:[%s959 + $0x28] sm:$0xf]
      %v971 = vld [vmem:[%s959 + $0x2c] sm:$0xf]
      %v972 = vld [vmem:[%s959 + $0x30] sm:$0xf]
      %v973 = vld [vmem:[%s959 + $0x34] sm:$0xf]
      %v974 = vld [vmem:[%s959 + $0x38] sm:$0xf]
      %v975 = vld [vmem:[%s959 + $0x3c] sm:$0xf]
      %v976 = vld [vmem:[%s959 + $0x40] sm:$0xf]
      %v977 = vld [vmem:[%s959 + $0x44] sm:$0xf]
      %v978 = vld [vmem:[%s959 + $0x48] sm:$0xf]
      %v979 = vld [vmem:[%s959 + $0x4c] sm:$0xf]
      %v980 = vld [vmem:[%s959 + $0x50] sm:$0xf]
      %v981 = vld [vmem:[%s959 + $0x54] sm:$0xf]
      %v982 = vld [vmem:[%s959 + $0x58] sm:$0xf]
      %v983 = vld [vmem:[%s959 + $0x5c] sm:$0xf]
      %v984 = vld [vmem:[%s959 + $0x60] sm:$0xf]
      %v985 = vld [vmem:[%s959 + $0x64] sm:$0xf]
      %v986 = vld [vmem:[%s959 + $0x68] sm:$0xf]
      %v987 = vld [vmem:[%s959 + $0x6c] sm:$0xf]
      %v988 = vld [vmem:[%s959 + $0x70] sm:$0xf]
      %v989 = vld [vmem:[%s959 + $0x74] sm:$0xf]
      %v990 = vld [vmem:[%s959 + $0x78] sm:$0xf]
      %v991 = vld [vmem:[%s959 + $0x7c] sm:$0xf]
      %v992 = vld [vmem:[%s959 + $0x80] sm:$0xf]
      %v993 = vld [vmem:[%s959 + $0x84] sm:$0xf]
      %v994 = vld [vmem:[%s959 + $0x88] sm:$0xf]
      %v995 = vld [vmem:[%s959 + $0x8c] sm:$0xf]
      %v996 = vld [vmem:[%s959 + $0x90] sm:$0xf]
      %v997 = vld [vmem:[%s959 + $0x94] sm:$0xf]
      %v998 = vld [vmem:[%s959 + $0x98] sm:$0xf]
      %v999 = vld [vmem:[%s959 + $0x9c] sm:$0xf]
      %v1000 = vld [vmem:[%s959 + $0xa0] sm:$0xf]
      %v1001 = vld [vmem:[%s959 + $0xa4] sm:$0xf]
      %v1002 = vld [vmem:[%s959 + $0xa8] sm:$0xf]
      %v1003 = vld [vmem:[%s959 + $0xac] sm:$0xf]
      %v1004 = vld [vmem:[%s959 + $0xb0] sm:$0xf]
      %v1005 = vld [vmem:[%s959 + $0xb4] sm:$0xf]
      %v1006 = vld [vmem:[%s959 + $0xb8] sm:$0xf]
      %v1007 = vld [vmem:[%s959 + $0xbc] sm:$0xf]
      %v1056 = vunpack.c.l.b16 %v960
      %v1057 = vunpack.c.l.b16 %v961
      %v1058 = vunpack.c.l.b16 %v962
      %v1059 = vunpack.c.l.b16 %v963
      %v1060 = vunpack.c.l.b16 %v964
      %v1061 = vunpack.c.l.b16 %v965
      %v1062 = vunpack.c.l.b16 %v966
      %v1063 = vunpack.c.l.b16 %v967
      %v1064 = vunpack.c.l.b16 %v968
      %v1065 = vunpack.c.l.b16 %v969
      %v1066 = vunpack.c.l.b16 %v970
      %v1067 = vunpack.c.l.b16 %v971
      %v1068 = vunpack.c.l.b16 %v972
      %v1069 = vunpack.c.l.b16 %v973
      %v1070 = vunpack.c.l.b16 %v974
      %v1071 = vunpack.c.l.b16 %v975
      %v1072 = vunpack.c.l.b16 %v976
      %v1073 = vunpack.c.l.b16 %v977
      %v1074 = vunpack.c.l.b16 %v978
      %v1075 = vunpack.c.l.b16 %v979
      %v1076 = vunpack.c.l.b16 %v980
      %v1077 = vunpack.c.l.b16 %v981
      %v1078 = vunpack.c.l.b16 %v982
      %v1079 = vunpack.c.l.b16 %v983
      %v1080 = vunpack.c.l.b16 %v984
      %v1081 = vunpack.c.l.b16 %v985
      %v1082 = vunpack.c.l.b16 %v986
      %v1083 = vunpack.c.l.b16 %v987
      %v1084 = vunpack.c.l.b16 %v988
      %v1085 = vunpack.c.l.b16 %v989
      %v1086 = vunpack.c.l.b16 %v990
      %v1087 = vunpack.c.l.b16 %v991
      %v1088 = vunpack.c.l.b16 %v992
      %v1089 = vunpack.c.l.b16 %v993
      %v1090 = vunpack.c.l.b16 %v994
      %v1091 = vunpack.c.l.b16 %v995
      %v1092 = vunpack.c.l.b16 %v996
      %v1093 = vunpack.c.l.b16 %v997
      %v1094 = vunpack.c.l.b16 %v998
      %v1095 = vunpack.c.l.b16 %v999
      %v1096 = vunpack.c.l.b16 %v1000
      %v1097 = vunpack.c.l.b16 %v1001
      %v1098 = vunpack.c.l.b16 %v1002
      %v1099 = vunpack.c.l.b16 %v1003
      %v1100 = vunpack.c.l.b16 %v1004
      %v1101 = vunpack.c.l.b16 %v1005
      %v1102 = vunpack.c.l.b16 %v1006
      %v1103 = vunpack.c.l.b16 %v1007
      %v1104 = vpack.c.b16 %v1057, %v1056
      %v1105 = vpack.c.b16 %v1059, %v1058
      %v1106 = vpack.c.b16 %v1061, %v1060
      %v1107 = vpack.c.b16 %v1063, %v1062
      %v1108 = vpack.c.b16 %v1065, %v1064
      %v1109 = vpack.c.b16 %v1067, %v1066
      %v1110 = vpack.c.b16 %v1069, %v1068
      %v1111 = vpack.c.b16 %v1071, %v1070
      %v1112 = vpack.c.b16 %v1073, %v1072
      %v1113 = vpack.c.b16 %v1075, %v1074
      %v1114 = vpack.c.b16 %v1077, %v1076
      %v1115 = vpack.c.b16 %v1079, %v1078
      %v1116 = vpack.c.b16 %v1081, %v1080
      %v1117 = vpack.c.b16 %v1083, %v1082
      %v1118 = vpack.c.b16 %v1085, %v1084
      %v1119 = vpack.c.b16 %v1087, %v1086
      %v1120 = vpack.c.b16 %v1089, %v1088
      %v1121 = vpack.c.b16 %v1091, %v1090
      %v1122 = vpack.c.b16 %v1093, %v1092
      %v1123 = vpack.c.b16 %v1095, %v1094
      %v1124 = vpack.c.b16 %v1097, %v1096
      %v1125 = vpack.c.b16 %v1099, %v1098
      %v1126 = vpack.c.b16 %v1101, %v1100
      %v1127 = vpack.c.b16 %v1103, %v1102
      %1152 = vmatpush.bf16.msra.mxu0 %v1111
      %1153 = vmatpush.bf16.msra.mxu0 %v1110
      %1154 = vmatpush.bf16.msra.mxu0 %v1109
      %1155 = vmatpush.bf16.msra.mxu0 %v1108
      %1156 = vmatpush.bf16.msra.mxu0 %v1107
      %1157 = vmatpush.bf16.msra.mxu0 %v1106
      %1158 = vmatpush.bf16.msra.mxu0 %v1105
      %1159 = vmatpush.bf16.msra.mxu0 %v1104
      %1160 = vmatmul.bf16.gmra.mxu0 %v383
      %v1161 = vpop.f32.mrf.mxu0
      %v1162 = vadd.f32 0.0, %v1161
      %v1163 = vpop.f32.mrf.mxu0
      %v1164 = vadd.f32 0.0, %v1163
      %1165 = vmatmul.bf16.gmra.mxu0 %v384
      %v1166 = vpop.f32.mrf.mxu0
      %v1167 = vadd.f32 0.0, %v1166
      %v1168 = vpop.f32.mrf.mxu0
      %v1169 = vadd.f32 0.0, %v1168
      %1170 = vmatmul.bf16.gmra.mxu0 %v385
      %v1171 = vpop.f32.mrf.mxu0
      %v1172 = vadd.f32 0.0, %v1171
      %v1173 = vpop.f32.mrf.mxu0
      %v1174 = vadd.f32 0.0, %v1173
      %1175 = vmatmul.bf16.gmra.mxu0 %v386
      %v1176 = vpop.f32.mrf.mxu0
      %v1177 = vadd.f32 0.0, %v1176
      %v1178 = vpop.f32.mrf.mxu0
      %v1179 = vadd.f32 0.0, %v1178
      %1180 = vmatmul.bf16.gmra.mxu0 %v387
      %v1181 = vpop.f32.mrf.mxu0
      %v1182 = vadd.f32 0.0, %v1181
      %v1183 = vpop.f32.mrf.mxu0
      %v1184 = vadd.f32 0.0, %v1183
      %1185 = vmatmul.bf16.gmra.mxu0 %v388
      %v1186 = vpop.f32.mrf.mxu0
      %v1187 = vadd.f32 0.0, %v1186
      %v1188 = vpop.f32.mrf.mxu0
      %v1189 = vadd.f32 0.0, %v1188
      %1190 = vmatmul.bf16.gmra.mxu0 %v389
      %v1191 = vpop.f32.mrf.mxu0
      %v1192 = vadd.f32 0.0, %v1191
      %v1193 = vpop.f32.mrf.mxu0
      %v1194 = vadd.f32 0.0, %v1193
      %1195 = vmatmul.bf16.gmra.mxu0 %v390
      %v1196 = vpop.f32.mrf.mxu0
      %v1197 = vadd.f32 0.0, %v1196
      %v1198 = vpop.f32.mrf.mxu0
      %v1199 = vadd.f32 0.0, %v1198
      %1200 = vdwg.mxu0
      %1201 = vmatpush.bf16.msra.mxu0 %v1119
      %1202 = vmatpush.bf16.msra.mxu0 %v1118
      %1203 = vmatpush.bf16.msra.mxu0 %v1117
      %1204 = vmatpush.bf16.msra.mxu0 %v1116
      %1205 = vmatpush.bf16.msra.mxu0 %v1115
      %1206 = vmatpush.bf16.msra.mxu0 %v1114
      %1207 = vmatpush.bf16.msra.mxu0 %v1113
      %1208 = vmatpush.bf16.msra.mxu0 %v1112
      %1209 = vmatmul.bf16.gmra.mxu0 %v456
      %v1210 = vpop.f32.mrf.mxu0
      %v1211 = vadd.f32 %v1162, %v1210
      %v1212 = vpop.f32.mrf.mxu0
      %v1213 = vadd.f32 %v1164, %v1212
      %1214 = vmatmul.bf16.gmra.mxu0 %v468
      %v1215 = vpop.f32.mrf.mxu0
      %v1216 = vadd.f32 %v1167, %v1215
      %v1217 = vpop.f32.mrf.mxu0
      %v1218 = vadd.f32 %v1169, %v1217
      %1219 = vmatmul.bf16.gmra.mxu0 %v480
      %v1220 = vpop.f32.mrf.mxu0
      %v1221 = vadd.f32 %v1172, %v1220
      %v1222 = vpop.f32.mrf.mxu0
      %v1223 = vadd.f32 %v1174, %v1222
      %1224 = vmatmul.bf16.gmra.mxu0 %v492
      %v1225 = vpop.f32.mrf.mxu0
      %v1226 = vadd.f32 %v1177, %v1225
      %v1227 = vpop.f32.mrf.mxu0
      %v1228 = vadd.f32 %v1179, %v1227
      %1229 = vmatmul.bf16.gmra.mxu0 %v504
      %v1230 = vpop.f32.mrf.mxu0
      %v1231 = vadd.f32 %v1182, %v1230
      %v1232 = vpop.f32.mrf.mxu0
      %v1233 = vadd.f32 %v1184, %v1232
      %1234 = vmatmul.bf16.gmra.mxu0 %v516
      %v1235 = vpop.f32.mrf.mxu0
      %v1236 = vadd.f32 %v1187, %v1235
      %v1237 = vpop.f32.mrf.mxu0
      %v1238 = vadd.f32 %v1189, %v1237
      %1239 = vmatmul.bf16.gmra.mxu0 %v528
      %v1240 = vpop.f32.mrf.mxu0
      %v1241 = vadd.f32 %v1192, %v1240
      %v1242 = vpop.f32.mrf.mxu0
      %v1243 = vadd.f32 %v1194, %v1242
      %1244 = vmatmul.bf16.gmra.mxu0 %v540
      %v1245 = vpop.f32.mrf.mxu0
      %v1246 = vadd.f32 %v1197, %v1245
      %v1247 = vpop.f32.mrf.mxu0
      %v1248 = vadd.f32 %v1199, %v1247
      %1249 = vdwg.mxu0
      %1250 = vmatpush.bf16.msra.mxu0 %v1127
      %1251 = vmatpush.bf16.msra.mxu0 %v1126
      %1252 = vmatpush.bf16.msra.mxu0 %v1125
      %1253 = vmatpush.bf16.msra.mxu0 %v1124
      %1254 = vmatpush.bf16.msra.mxu0 %v1123
      %1255 = vmatpush.bf16.msra.mxu0 %v1122
      %1256 = vmatpush.bf16.msra.mxu0 %v1121
      %1257 = vmatpush.bf16.msra.mxu0 %v1120
      %1258 = vmatmul.bf16.gmra.mxu0 %v569
      %v1259 = vpop.f32.mrf.mxu0
      %v1260 = vadd.f32 %v1211, %v1259
      %v1261 = vpop.f32.mrf.mxu0
      %v1262 = vadd.f32 %v1213, %v1261
      %1263 = vmatmul.bf16.gmra.mxu0 %v572
      %v1264 = vpop.f32.mrf.mxu0
      %v1265 = vadd.f32 %v1216, %v1264
      %v1266 = vpop.f32.mrf.mxu0
      %v1267 = vadd.f32 %v1218, %v1266
      %1268 = vmatmul.bf16.gmra.mxu0 %v575
      %v1269 = vpop.f32.mrf.mxu0
      %v1270 = vadd.f32 %v1221, %v1269
      %v1271 = vpop.f32.mrf.mxu0
      %v1272 = vadd.f32 %v1223, %v1271
      %1273 = vmatmul.bf16.gmra.mxu0 %v578
      %v1274 = vpop.f32.mrf.mxu0
      %v1275 = vadd.f32 %v1226, %v1274
      %v1276 = vpop.f32.mrf.mxu0
      %v1277 = vadd.f32 %v1228, %v1276
      %1278 = vmatmul.bf16.gmra.mxu0 %v581
      %v1279 = vpop.f32.mrf.mxu0
      %v1280 = vadd.f32 %v1231, %v1279
      %v1281 = vpop.f32.mrf.mxu0
      %v1282 = vadd.f32 %v1233, %v1281
      %1283 = vmatmul.bf16.gmra.mxu0 %v584
      %v1284 = vpop.f32.mrf.mxu0
      %v1285 = vadd.f32 %v1236, %v1284
      %v1286 = vpop.f32.mrf.mxu0
      %v1287 = vadd.f32 %v1238, %v1286
      %1288 = vmatmul.bf16.gmra.mxu0 %v587
      %v1289 = vpop.f32.mrf.mxu0
      %v1290 = vadd.f32 %v1241, %v1289
      %v1291 = vpop.f32.mrf.mxu0
      %v1292 = vadd.f32 %v1243, %v1291
      %1293 = vmatmul.bf16.gmra.mxu0 %v590
      %v1294 = vpop.f32.mrf.mxu0
      %v1295 = vadd.f32 %v1246, %v1294
      %v1296 = vpop.f32.mrf.mxu0
      %v1297 = vadd.f32 %v1248, %v1296
      %1298 = vdwg.mxu0
      %v1299 = vld [vmem:[#allocation2] sm:$0xff]
      %v1300 = vld [vmem:[#allocation2 + $0x8] sm:$0xff]
      %v1301 = vld [vmem:[#allocation2 + $0x10] sm:$0xff]
      %v1302 = vld [vmem:[#allocation2 + $0x18] sm:$0xff]
      %v1303 = vld [vmem:[#allocation2 + $0x20] sm:$0xff]
      %v1304 = vld [vmem:[#allocation2 + $0x28] sm:$0xff]
      %v1305 = vld [vmem:[#allocation2 + $0x30] sm:$0xff]
      %v1306 = vld [vmem:[#allocation2 + $0x38] sm:$0xff]
      %v1307 = vld [vmem:[#allocation2 + $0x40] sm:$0xff]
      %v1308 = vld [vmem:[#allocation2 + $0x48] sm:$0xff]
      %v1309 = vld [vmem:[#allocation2 + $0x50] sm:$0xff]
      %v1310 = vld [vmem:[#allocation2 + $0x58] sm:$0xff]
      %v1311 = vld [vmem:[#allocation2 + $0x60] sm:$0xff]
      %v1312 = vld [vmem:[#allocation2 + $0x68] sm:$0xff]
      %v1313 = vld [vmem:[#allocation2 + $0x70] sm:$0xff]
      %v1314 = vld [vmem:[#allocation2 + $0x78] sm:$0xff]
      %v1315 = vadd.f32 %v1299, %v1260
      %v1316 = vadd.f32 %v1300, %v1262
      %v1317 = vadd.f32 %v1301, %v1265
      %v1318 = vadd.f32 %v1302, %v1267
      %v1319 = vadd.f32 %v1303, %v1270
      %v1320 = vadd.f32 %v1304, %v1272
      %v1321 = vadd.f32 %v1305, %v1275
      %v1322 = vadd.f32 %v1306, %v1277
      %v1323 = vadd.f32 %v1307, %v1280
      %v1324 = vadd.f32 %v1308, %v1282
      %v1325 = vadd.f32 %v1309, %v1285
      %v1326 = vadd.f32 %v1310, %v1287
      %v1327 = vadd.f32 %v1311, %v1290
      %v1328 = vadd.f32 %v1312, %v1292
      %v1329 = vadd.f32 %v1313, %v1295
      %v1330 = vadd.f32 %v1314, %v1297
      %1331 = vst [vmem:[#allocation2] sm:$0xff] %v1315
      %1332 = vst [vmem:[#allocation2 + $0x8] sm:$0xff] %v1316
      %1333 = vst [vmem:[#allocation2 + $0x10] sm:$0xff] %v1317
      %1334 = vst [vmem:[#allocation2 + $0x18] sm:$0xff] %v1318
      %1335 = vst [vmem:[#allocation2 + $0x20] sm:$0xff] %v1319
      %1336 = vst [vmem:[#allocation2 + $0x28] sm:$0xff] %v1320
      %1337 = vst [vmem:[#allocation2 + $0x30] sm:$0xff] %v1321
      %1338 = vst [vmem:[#allocation2 + $0x38] sm:$0xff] %v1322
      %1339 = vst [vmem:[#allocation2 + $0x40] sm:$0xff] %v1323
      %1340 = vst [vmem:[#allocation2 + $0x48] sm:$0xff] %v1324
      %1341 = vst [vmem:[#allocation2 + $0x50] sm:$0xff] %v1325
      %1342 = vst [vmem:[#allocation2 + $0x58] sm:$0xff] %v1326
      %1343 = vst [vmem:[#allocation2 + $0x60] sm:$0xff] %v1327
      %1344 = vst [vmem:[#allocation2 + $0x68] sm:$0xff] %v1328
      %1345 = vst [vmem:[#allocation2 + $0x70] sm:$0xff] %v1329
      %1346 = vst [vmem:[#allocation2 + $0x78] sm:$0xff] %v1330
      %s1347 = scalar_lea.vmem %s1, 384
      %v1348 = vld [vmem:[%s1347] sm:$0xf]
      %v1349 = vld [vmem:[%s1347 + $0x4] sm:$0xf]
      %v1350 = vld [vmem:[%s1347 + $0x8] sm:$0xf]
      %v1351 = vld [vmem:[%s1347 + $0xc] sm:$0xf]
      %v1352 = vld [vmem:[%s1347 + $0x10] sm:$0xf]
      %v1353 = vld [vmem:[%s1347 + $0x14] sm:$0xf]
      %v1354 = vld [vmem:[%s1347 + $0x18] sm:$0xf]
      %v1355 = vld [vmem:[%s1347 + $0x1c] sm:$0xf]
      %v1356 = vld [vmem:[%s1347 + $0x20] sm:$0xf]
      %v1357 = vld [vmem:[%s1347 + $0x24] sm:$0xf]
      %v1358 = vld [vmem:[%s1347 + $0x28] sm:$0xf]
      %v1359 = vld [vmem:[%s1347 + $0x2c] sm:$0xf]
      %v1360 = vld [vmem:[%s1347 + $0x30] sm:$0xf]
      %v1361 = vld [vmem:[%s1347 + $0x34] sm:$0xf]
      %v1362 = vld [vmem:[%s1347 + $0x38] sm:$0xf]
      %v1363 = vld [vmem:[%s1347 + $0x3c] sm:$0xf]
      %v1364 = vld [vmem:[%s1347 + $0x40] sm:$0xf]
      %v1365 = vld [vmem:[%s1347 + $0x44] sm:$0xf]
      %v1366 = vld [vmem:[%s1347 + $0x48] sm:$0xf]
      %v1367 = vld [vmem:[%s1347 + $0x4c] sm:$0xf]
      %v1368 = vld [vmem:[%s1347 + $0x50] sm:$0xf]
      %v1369 = vld [vmem:[%s1347 + $0x54] sm:$0xf]
      %v1370 = vld [vmem:[%s1347 + $0x58] sm:$0xf]
      %v1371 = vld [vmem:[%s1347 + $0x5c] sm:$0xf]
      %v1372 = vld [vmem:[%s1347 + $0x60] sm:$0xf]
      %v1373 = vld [vmem:[%s1347 + $0x64] sm:$0xf]
      %v1374 = vld [vmem:[%s1347 + $0x68] sm:$0xf]
      %v1375 = vld [vmem:[%s1347 + $0x6c] sm:$0xf]
      %v1376 = vld [vmem:[%s1347 + $0x70] sm:$0xf]
      %v1377 = vld [vmem:[%s1347 + $0x74] sm:$0xf]
      %v1378 = vld [vmem:[%s1347 + $0x78] sm:$0xf]
      %v1379 = vld [vmem:[%s1347 + $0x7c] sm:$0xf]
      %v1380 = vld [vmem:[%s1347 + $0x80] sm:$0xf]
      %v1381 = vld [vmem:[%s1347 + $0x84] sm:$0xf]
      %v1382 = vld [vmem:[%s1347 + $0x88] sm:$0xf]
      %v1383 = vld [vmem:[%s1347 + $0x8c] sm:$0xf]
      %v1384 = vld [vmem:[%s1347 + $0x90] sm:$0xf]
      %v1385 = vld [vmem:[%s1347 + $0x94] sm:$0xf]
      %v1386 = vld [vmem:[%s1347 + $0x98] sm:$0xf]
      %v1387 = vld [vmem:[%s1347 + $0x9c] sm:$0xf]
      %v1388 = vld [vmem:[%s1347 + $0xa0] sm:$0xf]
      %v1389 = vld [vmem:[%s1347 + $0xa4] sm:$0xf]
      %v1390 = vld [vmem:[%s1347 + $0xa8] sm:$0xf]
      %v1391 = vld [vmem:[%s1347 + $0xac] sm:$0xf]
      %v1392 = vld [vmem:[%s1347 + $0xb0] sm:$0xf]
      %v1393 = vld [vmem:[%s1347 + $0xb4] sm:$0xf]
      %v1394 = vld [vmem:[%s1347 + $0xb8] sm:$0xf]
      %v1395 = vld [vmem:[%s1347 + $0xbc] sm:$0xf]
      %v1444 = vunpack.c.l.b16 %v1348
      %v1445 = vunpack.c.l.b16 %v1349
      %v1446 = vunpack.c.l.b16 %v1350
      %v1447 = vunpack.c.l.b16 %v1351
      %v1448 = vunpack.c.l.b16 %v1352
      %v1449 = vunpack.c.l.b16 %v1353
      %v1450 = vunpack.c.l.b16 %v1354
      %v1451 = vunpack.c.l.b16 %v1355
      %v1452 = vunpack.c.l.b16 %v1356
      %v1453 = vunpack.c.l.b16 %v1357
      %v1454 = vunpack.c.l.b16 %v1358
      %v1455 = vunpack.c.l.b16 %v1359
      %v1456 = vunpack.c.l.b16 %v1360
      %v1457 = vunpack.c.l.b16 %v1361
      %v1458 = vunpack.c.l.b16 %v1362
      %v1459 = vunpack.c.l.b16 %v1363
      %v1460 = vunpack.c.l.b16 %v1364
      %v1461 = vunpack.c.l.b16 %v1365
      %v1462 = vunpack.c.l.b16 %v1366
      %v1463 = vunpack.c.l.b16 %v1367
      %v1464 = vunpack.c.l.b16 %v1368
      %v1465 = vunpack.c.l.b16 %v1369
      %v1466 = vunpack.c.l.b16 %v1370
      %v1467 = vunpack.c.l.b16 %v1371
      %v1468 = vunpack.c.l.b16 %v1372
      %v1469 = vunpack.c.l.b16 %v1373
      %v1470 = vunpack.c.l.b16 %v1374
      %v1471 = vunpack.c.l.b16 %v1375
      %v1472 = vunpack.c.l.b16 %v1376
      %v1473 = vunpack.c.l.b16 %v1377
      %v1474 = vunpack.c.l.b16 %v1378
      %v1475 = vunpack.c.l.b16 %v1379
      %v1476 = vunpack.c.l.b16 %v1380
      %v1477 = vunpack.c.l.b16 %v1381
      %v1478 = vunpack.c.l.b16 %v1382
      %v1479 = vunpack.c.l.b16 %v1383
      %v1480 = vunpack.c.l.b16 %v1384
      %v1481 = vunpack.c.l.b16 %v1385
      %v1482 = vunpack.c.l.b16 %v1386
      %v1483 = vunpack.c.l.b16 %v1387
      %v1484 = vunpack.c.l.b16 %v1388
      %v1485 = vunpack.c.l.b16 %v1389
      %v1486 = vunpack.c.l.b16 %v1390
      %v1487 = vunpack.c.l.b16 %v1391
      %v1488 = vunpack.c.l.b16 %v1392
      %v1489 = vunpack.c.l.b16 %v1393
      %v1490 = vunpack.c.l.b16 %v1394
      %v1491 = vunpack.c.l.b16 %v1395
      %v1492 = vpack.c.b16 %v1445, %v1444
      %v1493 = vpack.c.b16 %v1447, %v1446
      %v1494 = vpack.c.b16 %v1449, %v1448
      %v1495 = vpack.c.b16 %v1451, %v1450
      %v1496 = vpack.c.b16 %v1453, %v1452
      %v1497 = vpack.c.b16 %v1455, %v1454
      %v1498 = vpack.c.b16 %v1457, %v1456
      %v1499 = vpack.c.b16 %v1459, %v1458
      %v1500 = vpack.c.b16 %v1461, %v1460
      %v1501 = vpack.c.b16 %v1463, %v1462
      %v1502 = vpack.c.b16 %v1465, %v1464
      %v1503 = vpack.c.b16 %v1467, %v1466
      %v1504 = vpack.c.b16 %v1469, %v1468
      %v1505 = vpack.c.b16 %v1471, %v1470
      %v1506 = vpack.c.b16 %v1473, %v1472
      %v1507 = vpack.c.b16 %v1475, %v1474
      %v1508 = vpack.c.b16 %v1477, %v1476
      %v1509 = vpack.c.b16 %v1479, %v1478
      %v1510 = vpack.c.b16 %v1481, %v1480
      %v1511 = vpack.c.b16 %v1483, %v1482
      %v1512 = vpack.c.b16 %v1485, %v1484
      %v1513 = vpack.c.b16 %v1487, %v1486
      %v1514 = vpack.c.b16 %v1489, %v1488
      %v1515 = vpack.c.b16 %v1491, %v1490
      %1540 = vmatpush.bf16.msra.mxu0 %v1499
      %1541 = vmatpush.bf16.msra.mxu0 %v1498
      %1542 = vmatpush.bf16.msra.mxu0 %v1497
      %1543 = vmatpush.bf16.msra.mxu0 %v1496
      %1544 = vmatpush.bf16.msra.mxu0 %v1495
      %1545 = vmatpush.bf16.msra.mxu0 %v1494
      %1546 = vmatpush.bf16.msra.mxu0 %v1493
      %1547 = vmatpush.bf16.msra.mxu0 %v1492
      %1548 = vmatmul.bf16.gmra.mxu0 %v384
      %v1549 = vpop.f32.mrf.mxu0
      %v1550 = vadd.f32 0.0, %v1549
      %v1551 = vpop.f32.mrf.mxu0
      %v1552 = vadd.f32 0.0, %v1551
      %1553 = vmatmul.bf16.gmra.mxu0 %v385
      %v1554 = vpop.f32.mrf.mxu0
      %v1555 = vadd.f32 0.0, %v1554
      %v1556 = vpop.f32.mrf.mxu0
      %v1557 = vadd.f32 0.0, %v1556
      %1558 = vmatmul.bf16.gmra.mxu0 %v386
      %v1559 = vpop.f32.mrf.mxu0
      %v1560 = vadd.f32 0.0, %v1559
      %v1561 = vpop.f32.mrf.mxu0
      %v1562 = vadd.f32 0.0, %v1561
      %1563 = vmatmul.bf16.gmra.mxu0 %v387
      %v1564 = vpop.f32.mrf.mxu0
      %v1565 = vadd.f32 0.0, %v1564
      %v1566 = vpop.f32.mrf.mxu0
      %v1567 = vadd.f32 0.0, %v1566
      %1568 = vmatmul.bf16.gmra.mxu0 %v388
      %v1569 = vpop.f32.mrf.mxu0
      %v1570 = vadd.f32 0.0, %v1569
      %v1571 = vpop.f32.mrf.mxu0
      %v1572 = vadd.f32 0.0, %v1571
      %1573 = vmatmul.bf16.gmra.mxu0 %v389
      %v1574 = vpop.f32.mrf.mxu0
      %v1575 = vadd.f32 0.0, %v1574
      %v1576 = vpop.f32.mrf.mxu0
      %v1577 = vadd.f32 0.0, %v1576
      %1578 = vmatmul.bf16.gmra.mxu0 %v390
      %v1579 = vpop.f32.mrf.mxu0
      %v1580 = vadd.f32 0.0, %v1579
      %v1581 = vpop.f32.mrf.mxu0
      %v1582 = vadd.f32 0.0, %v1581
      %1583 = vmatmul.bf16.gmra.mxu0 %v391
      %v1584 = vpop.f32.mrf.mxu0
      %v1585 = vadd.f32 0.0, %v1584
      %v1586 = vpop.f32.mrf.mxu0
      %v1587 = vadd.f32 0.0, %v1586
      %1588 = vdwg.mxu0
      %1589 = vmatpush.bf16.msra.mxu0 %v1507
      %1590 = vmatpush.bf16.msra.mxu0 %v1506
      %1591 = vmatpush.bf16.msra.mxu0 %v1505
      %1592 = vmatpush.bf16.msra.mxu0 %v1504
      %1593 = vmatpush.bf16.msra.mxu0 %v1503
      %1594 = vmatpush.bf16.msra.mxu0 %v1502
      %1595 = vmatpush.bf16.msra.mxu0 %v1501
      %1596 = vmatpush.bf16.msra.mxu0 %v1500
      %1597 = vmatmul.bf16.gmra.mxu0 %v468
      %v1598 = vpop.f32.mrf.mxu0
      %v1599 = vadd.f32 %v1550, %v1598
      %v1600 = vpop.f32.mrf.mxu0
      %v1601 = vadd.f32 %v1552, %v1600
      %1602 = vmatmul.bf16.gmra.mxu0 %v480
      %v1603 = vpop.f32.mrf.mxu0
      %v1604 = vadd.f32 %v1555, %v1603
      %v1605 = vpop.f32.mrf.mxu0
      %v1606 = vadd.f32 %v1557, %v1605
      %1607 = vmatmul.bf16.gmra.mxu0 %v492
      %v1608 = vpop.f32.mrf.mxu0
      %v1609 = vadd.f32 %v1560, %v1608
      %v1610 = vpop.f32.mrf.mxu0
      %v1611 = vadd.f32 %v1562, %v1610
      %1612 = vmatmul.bf16.gmra.mxu0 %v504
      %v1613 = vpop.f32.mrf.mxu0
      %v1614 = vadd.f32 %v1565, %v1613
      %v1615 = vpop.f32.mrf.mxu0
      %v1616 = vadd.f32 %v1567, %v1615
      %1617 = vmatmul.bf16.gmra.mxu0 %v516
      %v1618 = vpop.f32.mrf.mxu0
      %v1619 = vadd.f32 %v1570, %v1618
      %v1620 = vpop.f32.mrf.mxu0
      %v1621 = vadd.f32 %v1572, %v1620
      %1622 = vmatmul.bf16.gmra.mxu0 %v528
      %v1623 = vpop.f32.mrf.mxu0
      %v1624 = vadd.f32 %v1575, %v1623
      %v1625 = vpop.f32.mrf.mxu0
      %v1626 = vadd.f32 %v1577, %v1625
      %1627 = vmatmul.bf16.gmra.mxu0 %v540
      %v1628 = vpop.f32.mrf.mxu0
      %v1629 = vadd.f32 %v1580, %v1628
      %v1630 = vpop.f32.mrf.mxu0
      %v1631 = vadd.f32 %v1582, %v1630
      %1632 = vmatmul.bf16.gmra.mxu0 %v552
      %v1633 = vpop.f32.mrf.mxu0
      %v1634 = vadd.f32 %v1585, %v1633
      %v1635 = vpop.f32.mrf.mxu0
      %v1636 = vadd.f32 %v1587, %v1635
      %1637 = vdwg.mxu0
      %1638 = vmatpush.bf16.msra.mxu0 %v1515
      %1639 = vmatpush.bf16.msra.mxu0 %v1514
      %1640 = vmatpush.bf16.msra.mxu0 %v1513
      %1641 = vmatpush.bf16.msra.mxu0 %v1512
      %1642 = vmatpush.bf16.msra.mxu0 %v1511
      %1643 = vmatpush.bf16.msra.mxu0 %v1510
      %1644 = vmatpush.bf16.msra.mxu0 %v1509
      %1645 = vmatpush.bf16.msra.mxu0 %v1508
      %1646 = vmatmul.bf16.gmra.mxu0 %v572
      %v1647 = vpop.f32.mrf.mxu0
      %v1648 = vadd.f32 %v1599, %v1647
      %v1649 = vpop.f32.mrf.mxu0
      %v1650 = vadd.f32 %v1601, %v1649
      %1651 = vmatmul.bf16.gmra.mxu0 %v575
      %v1652 = vpop.f32.mrf.mxu0
      %v1653 = vadd.f32 %v1604, %v1652
      %v1654 = vpop.f32.mrf.mxu0
      %v1655 = vadd.f32 %v1606, %v1654
      %1656 = vmatmul.bf16.gmra.mxu0 %v578
      %v1657 = vpop.f32.mrf.mxu0
      %v1658 = vadd.f32 %v1609, %v1657
      %v1659 = vpop.f32.mrf.mxu0
      %v1660 = vadd.f32 %v1611, %v1659
      %1661 = vmatmul.bf16.gmra.mxu0 %v581
      %v1662 = vpop.f32.mrf.mxu0
      %v1663 = vadd.f32 %v1614, %v1662
      %v1664 = vpop.f32.mrf.mxu0
      %v1665 = vadd.f32 %v1616, %v1664
      %1666 = vmatmul.bf16.gmra.mxu0 %v584
      %v1667 = vpop.f32.mrf.mxu0
      %v1668 = vadd.f32 %v1619, %v1667
      %v1669 = vpop.f32.mrf.mxu0
      %v1670 = vadd.f32 %v1621, %v1669
      %1671 = vmatmul.bf16.gmra.mxu0 %v587
      %v1672 = vpop.f32.mrf.mxu0
      %v1673 = vadd.f32 %v1624, %v1672
      %v1674 = vpop.f32.mrf.mxu0
      %v1675 = vadd.f32 %v1626, %v1674
      %1676 = vmatmul.bf16.gmra.mxu0 %v590
      %v1677 = vpop.f32.mrf.mxu0
      %v1678 = vadd.f32 %v1629, %v1677
      %v1679 = vpop.f32.mrf.mxu0
      %v1680 = vadd.f32 %v1631, %v1679
      %1681 = vmatmul.bf16.gmra.mxu0 %v593
      %v1682 = vpop.f32.mrf.mxu0
      %v1683 = vadd.f32 %v1634, %v1682
      %v1684 = vpop.f32.mrf.mxu0
      %v1685 = vadd.f32 %v1636, %v1684
      %1686 = vdwg.mxu0
      %v1687 = vld [vmem:[#allocation2] sm:$0xff]
      %v1688 = vld [vmem:[#allocation2 + $0x8] sm:$0xff]
      %v1689 = vld [vmem:[#allocation2 + $0x10] sm:$0xff]
      %v1690 = vld [vmem:[#allocation2 + $0x18] sm:$0xff]
      %v1691 = vld [vmem:[#allocation2 + $0x20] sm:$0xff]
      %v1692 = vld [vmem:[#allocation2 + $0x28] sm:$0xff]
      %v1693 = vld [vmem:[#allocation2 + $0x30] sm:$0xff]
      %v1694 = vld [vmem:[#allocation2 + $0x38] sm:$0xff]
      %v1695 = vld [vmem:[#allocation2 + $0x40] sm:$0xff]
      %v1696 = vld [vmem:[#allocation2 + $0x48] sm:$0xff]
      %v1697 = vld [vmem:[#allocation2 + $0x50] sm:$0xff]
      %v1698 = vld [vmem:[#allocation2 + $0x58] sm:$0xff]
      %v1699 = vld [vmem:[#allocation2 + $0x60] sm:$0xff]
      %v1700 = vld [vmem:[#allocation2 + $0x68] sm:$0xff]
      %v1701 = vld [vmem:[#allocation2 + $0x70] sm:$0xff]
      %v1702 = vld [vmem:[#allocation2 + $0x78] sm:$0xff]
      %v1703 = vadd.f32 %v1687, %v1648
      %v1704 = vadd.f32 %v1688, %v1650
      %v1705 = vadd.f32 %v1689, %v1653
      %v1706 = vadd.f32 %v1690, %v1655
      %v1707 = vadd.f32 %v1691, %v1658
      %v1708 = vadd.f32 %v1692, %v1660
      %v1709 = vadd.f32 %v1693, %v1663
      %v1710 = vadd.f32 %v1694, %v1665
      %v1711 = vadd.f32 %v1695, %v1668
      %v1712 = vadd.f32 %v1696, %v1670
      %v1713 = vadd.f32 %v1697, %v1673
      %v1714 = vadd.f32 %v1698, %v1675
      %v1715 = vadd.f32 %v1699, %v1678
      %v1716 = vadd.f32 %v1700, %v1680
      %v1717 = vadd.f32 %v1701, %v1683
      %v1718 = vadd.f32 %v1702, %v1685
      %1719 = vst [vmem:[#allocation2] sm:$0xff] %v1703
      %1720 = vst [vmem:[#allocation2 + $0x8] sm:$0xff] %v1704
      %1721 = vst [vmem:[#allocation2 + $0x10] sm:$0xff] %v1705
      %1722 = vst [vmem:[#allocation2 + $0x18] sm:$0xff] %v1706
      %1723 = vst [vmem:[#allocation2 + $0x20] sm:$0xff] %v1707
      %1724 = vst [vmem:[#allocation2 + $0x28] sm:$0xff] %v1708
      %1725 = vst [vmem:[#allocation2 + $0x30] sm:$0xff] %v1709
      %1726 = vst [vmem:[#allocation2 + $0x38] sm:$0xff] %v1710
      %1727 = vst [vmem:[#allocation2 + $0x40] sm:$0xff] %v1711
      %1728 = vst [vmem:[#allocation2 + $0x48] sm:$0xff] %v1712
      %1729 = vst [vmem:[#allocation2 + $0x50] sm:$0xff] %v1713
      %1730 = vst [vmem:[#allocation2 + $0x58] sm:$0xff] %v1714
      %1731 = vst [vmem:[#allocation2 + $0x60] sm:$0xff] %v1715
      %1732 = vst [vmem:[#allocation2 + $0x68] sm:$0xff] %v1716
      %1733 = vst [vmem:[#allocation2 + $0x70] sm:$0xff] %v1717
      %1734 = vst [vmem:[#allocation2 + $0x78] sm:$0xff] %v1718
      %v1735 = vld [vmem:[#allocation2] sm:$0xff]
      %v1736 = vld [vmem:[#allocation2 + $0x8] sm:$0xff]
      %v1737 = vld [vmem:[#allocation2 + $0x10] sm:$0xff]
      %v1738 = vld [vmem:[#allocation2 + $0x18] sm:$0xff]
      %v1739 = vld [vmem:[#allocation2 + $0x20] sm:$0xff]
      %v1740 = vld [vmem:[#allocation2 + $0x28] sm:$0xff]
      %v1741 = vld [vmem:[#allocation2 + $0x30] sm:$0xff]
      %v1742 = vld [vmem:[#allocation2 + $0x38] sm:$0xff]
      %v1743 = vld [vmem:[#allocation2 + $0x40] sm:$0xff]
      %v1744 = vld [vmem:[#allocation2 + $0x48] sm:$0xff]
      %v1745 = vld [vmem:[#allocation2 + $0x50] sm:$0xff]
      %v1746 = vld [vmem:[#allocation2 + $0x58] sm:$0xff]
      %v1747 = vld [vmem:[#allocation2 + $0x60] sm:$0xff]
      %v1748 = vld [vmem:[#allocation2 + $0x68] sm:$0xff]
      %v1749 = vld [vmem:[#allocation2 + $0x70] sm:$0xff]
      %v1750 = vld [vmem:[#allocation2 + $0x78] sm:$0xff]
      %v1751 = vld [vmem:[%s2] sm:$0x1]
      %v1753 = vperm.slane %v1751, 0
      %v1755 = vadd.f32 %v1735, %v1753
      %v1756 = vadd.f32 %v1736, %v1753
      %v1757 = vadd.f32 %v1737, %v1753
      %v1758 = vadd.f32 %v1738, %v1753
      %v1759 = vadd.f32 %v1739, %v1753
      %v1760 = vadd.f32 %v1740, %v1753
      %v1761 = vadd.f32 %v1741, %v1753
      %v1762 = vadd.f32 %v1742, %v1753
      %v1763 = vadd.f32 %v1743, %v1753
      %v1764 = vadd.f32 %v1744, %v1753
      %v1765 = vadd.f32 %v1745, %v1753
      %v1766 = vadd.f32 %v1746, %v1753
      %v1767 = vadd.f32 %v1747, %v1753
      %v1768 = vadd.f32 %v1748, %v1753
      %v1769 = vadd.f32 %v1749, %v1753
      %v1770 = vadd.f32 %v1750, %v1753
      %v1771 = vadd.f32 %v1755, %v1756
      %v1772 = vadd.f32 %v1771, %v1757
      %v1773 = vadd.f32 %v1772, %v1758
      %v1774 = vadd.f32 %v1773, %v1759
      %v1775 = vadd.f32 %v1774, %v1760
      %v1776 = vadd.f32 %v1775, %v1761
      %v1777 = vadd.f32 %v1776, %v1762
      %v1778 = vadd.f32 %v1777, %v1763
      %v1779 = vadd.f32 %v1778, %v1764
      %v1780 = vadd.f32 %v1779, %v1765
      %v1781 = vadd.f32 %v1780, %v1766
      %v1782 = vadd.f32 %v1781, %v1767
      %v1783 = vadd.f32 %v1782, %v1768
      %v1784 = vadd.f32 %v1783, %v1769
      %v1785 = vadd.f32 %v1784, %v1770
      %v1786 = vrot.slane %v1785, 4
      %v1787 = vadd.f32 %v1785, %v1786
      %v1788 = vrot.slane %v1787, 2
      %v1789 = vadd.f32 %v1787, %v1788
      %v1790 = vrot.slane %v1789, 1
      %v1791 = vadd.f32 %v1789, %v1790
      %v1792 = vmul.f32 %v1755, %v1755
      %v1793 = vmul.f32 %v1756, %v1756
      %v1794 = vmul.f32 %v1757, %v1757
      %v1795 = vmul.f32 %v1758, %v1758
      %v1796 = vmul.f32 %v1759, %v1759
      %v1797 = vmul.f32 %v1760, %v1760
      %v1798 = vmul.f32 %v1761, %v1761
      %v1799 = vmul.f32 %v1762, %v1762
      %v1800 = vmul.f32 %v1763, %v1763
      %v1801 = vmul.f32 %v1764, %v1764
      %v1802 = vmul.f32 %v1765, %v1765
      %v1803 = vmul.f32 %v1766, %v1766
      %v1804 = vmul.f32 %v1767, %v1767
      %v1805 = vmul.f32 %v1768, %v1768
      %v1806 = vmul.f32 %v1769, %v1769
      %v1807 = vmul.f32 %v1770, %v1770
      %v1808 = vadd.f32 %v1792, %v1793
      %v1809 = vadd.f32 %v1808, %v1794
      %v1810 = vadd.f32 %v1809, %v1795
      %v1811 = vadd.f32 %v1810, %v1796
      %v1812 = vadd.f32 %v1811, %v1797
      %v1813 = vadd.f32 %v1812, %v1798
      %v1814 = vadd.f32 %v1813, %v1799
      %v1815 = vadd.f32 %v1814, %v1800
      %v1816 = vadd.f32 %v1815, %v1801
      %v1817 = vadd.f32 %v1816, %v1802
      %v1818 = vadd.f32 %v1817, %v1803
      %v1819 = vadd.f32 %v1818, %v1804
      %v1820 = vadd.f32 %v1819, %v1805
      %v1821 = vadd.f32 %v1820, %v1806
      %v1822 = vadd.f32 %v1821, %v1807
      %v1823 = vrot.slane %v1822, 4
      %v1824 = vadd.f32 %v1822, %v1823
      %v1825 = vrot.slane %v1824, 2
      %v1826 = vadd.f32 %v1824, %v1825
      %v1827 = vrot.slane %v1826, 1
      %v1828 = vadd.f32 %v1826, %v1827
      %vm1829 = vcmask 1040384
      %v1830 = vsel %vm1829, %v1791, %v1828
      %1831 = vst [vmem:[%s311] sm:$0x3] %v1830
      %v1832 = vpack.c.bf16 %v1755, %v1755
      %v1833 = vpack.c.bf16 %v1756, %v1756
      %v1834 = vpack.c.bf16 %v1757, %v1757
      %v1835 = vpack.c.bf16 %v1758, %v1758
      %v1836 = vpack.c.bf16 %v1759, %v1759
      %v1837 = vpack.c.bf16 %v1760, %v1760
      %v1838 = vpack.c.bf16 %v1761, %v1761
      %v1839 = vpack.c.bf16 %v1762, %v1762
      %v1840 = vpack.c.bf16 %v1763, %v1763
      %v1841 = vpack.c.bf16 %v1764, %v1764
      %v1842 = vpack.c.bf16 %v1765, %v1765
      %v1843 = vpack.c.bf16 %v1766, %v1766
      %v1844 = vpack.c.bf16 %v1767, %v1767
      %v1845 = vpack.c.bf16 %v1768, %v1768
      %v1846 = vpack.c.bf16 %v1769, %v1769
      %v1847 = vpack.c.bf16 %v1770, %v1770
      %1848 = vst [vmem:[%s302] sm:$0xf] %v1832
      %1849 = vst [vmem:[%s302 + $0x4] sm:$0xf] %v1833
      %1850 = vst [vmem:[%s302 + $0x8] sm:$0xf] %v1834
      %1851 = vst [vmem:[%s302 + $0xc] sm:$0xf] %v1835
      %1852 = vst [vmem:[%s302 + $0x10] sm:$0xf] %v1836
      %1853 = vst [vmem:[%s302 + $0x14] sm:$0xf] %v1837
      %1854 = vst [vmem:[%s302 + $0x18] sm:$0xf] %v1838
      %1855 = vst [vmem:[%s302 + $0x1c] sm:$0xf] %v1839
      %1856 = vst [vmem:[%s302 + $0x20] sm:$0xf] %v1840
      %1857 = vst [vmem:[%s302 + $0x24] sm:$0xf] %v1841
      %1858 = vst [vmem:[%s302 + $0x28] sm:$0xf] %v1842
      %1859 = vst [vmem:[%s302 + $0x2c] sm:$0xf] %v1843
      %1860 = vst [vmem:[%s302 + $0x30] sm:$0xf] %v1844
      %1861 = vst [vmem:[%s302 + $0x34] sm:$0xf] %v1845
      %1862 = vst [vmem:[%s302 + $0x38] sm:$0xf] %v1846
      %1863 = vst [vmem:[%s302 + $0x3c] sm:$0xf] %v1847
      %s1864 = smul.u32 8, %s23
      %p1865 = scmp.lt.s32.totalorder %s22, 1
      %s1866 = scalar_select %p1865, %s22, 1
      %p1867 = scmp.lt.s32.totalorder %s1864, 15
      %s1868 = scalar_select %p1867, %s1864, 15
      %s1869 = smul.addr %s1868, 2
      %s1870 = smul.addr %s1866, 32
      %s1871 = sadd.s32 %s1869, %s1870
      %s1872 = smul.addr %s1871, 4
      %s1873 = scalar_lea.vmem %s5, %s1872
      %p1874 = scmp.lt.s32.totalorder %s22, 1
      %s1875 = scalar_select %p1874, %s22, 1
      %p1876 = scmp.lt.s32.totalorder %s23, 1
      %s1877 = scalar_select %p1876, %s23, 1
      %s1878 = smul.addr %s1875, 2
      %s1879 = sadd.s32 %s1877, %s1878
      %s1880 = smul.addr %s1879, 2
      %s1881 = scalar_lea.vmem %s6, %s1880
      // Predicated region
      $region41: #{double_conv.3} parent=39 // pred_check
        %p1882 = pneg %p162
      $region42: #{double_conv.3} parent=39 // pred_check_branch
        %1884 = sbr.rel (%p1882) target = $region44
      $region43: #{double_conv.3} parent=39 // pred_region
        %s1885 = smul.u32 8, %s23
      $region44: #{double_conv.3} parent=39 // pred_fallthru
        _
      // Predicated region
      $region45: #{double_conv.3} parent=39 // pred_check
        %p1886 = pneg %p190
      $region46: #{double_conv.3} parent=39 // pred_check_branch
        %1888 = sbr.rel (%p1886) target = $region48
      $region47: #{double_conv.3} parent=39 // pred_region
        _
      $region48: #{double_conv.3} parent=39 // pred_fallthru
        _
    $region40: #{double_conv.3} parent=5 // pred_fallthru
      _
    %p1889 = scmp.le.s32.totalorder 2, %s13
    // Predicated region
    $region49: #{double_conv.3} parent=5 // pred_check
      %p1890 = pneg %p1889
    $region50: #{double_conv.3} parent=5 // pred_check_branch
      %1892 = sbr.rel (%p1890) target = $region52
    $region51: #{double_conv.3} parent=5 // pred_region
      %s1893 = ssub.s32 %s13, 2
      // Predicated region
      $region53: #{double_conv.3} parent=51 // pred_check
        %p1894 = pneg %p168
      $region54: #{double_conv.3} parent=51 // pred_check_branch
        %1896 = sbr.rel (%p1894) target = $region56
      $region55: #{double_conv.3} parent=51 // pred_region
        %s1897 = smul.u32 8, %s25
        %p1898 = scmp.lt.s32.totalorder %s24, 1
        %s1899 = scalar_select %p1898, %s24, 1
        %p1900 = scmp.lt.s32.totalorder %s1897, 15
        %s1901 = scalar_select %p1900, %s1897, 15
        %s1902 = smul.addr %s1901, 2
        %s1903 = smul.addr %s1899, 32
        %s1904 = sadd.s32 %s1902, %s1903
        %s1905 = smul.addr %s1904, 4
        %s1906 = scalar_lea.vmem %s5, %s1905
      $region56: #{double_conv.3} parent=51 // pred_fallthru
        _
      // Predicated region
      $region57: #{double_conv.3} parent=51 // pred_check
        %p1907 = pneg %p196
      $region58: #{double_conv.3} parent=51 // pred_check_branch
        %1909 = sbr.rel (%p1907) target = $region60
      $region59: #{double_conv.3} parent=51 // pred_region
        %p1910 = scmp.lt.s32.totalorder %s24, 1
        %s1911 = scalar_select %p1910, %s24, 1
        %p1912 = scmp.lt.s32.totalorder %s25, 1
        %s1913 = scalar_select %p1912, %s25, 1
        %s1914 = smul.addr %s1911, 2
        %s1915 = sadd.s32 %s1913, %s1914
        %s1916 = smul.addr %s1915, 2
        %s1917 = scalar_lea.vmem %s6, %s1916
      $region60: #{double_conv.3} parent=51 // pred_fallthru
        _
    $region52: #{double_conv.3} parent=5 // pred_fallthru
      _
  $region6: #{double_conv.3} parent=0 // loop_footer
    %s17 = sadd.s32 1, %s13
  $region7: #{double_conv.3} parent=0 // loop_footer_branch
    %12 = sbr.rel target = $region3
  $region8: #{double_conv.3} parent=0 // loop_exit
    _

// kernel: double_conv.4
$region0: #{double_conv.4}
  #allocation0 [shape = 'u32[]', space=smem, size = 0x4, offset = 0x4, fixed_abs, tag = 'smem constant byte address 0x4 - core index']
  #allocation1 [shape = 'u32[72,128]{1,0:T(1,128)}', space=vmem, size = 0x9000, scoped, tag = 'internal scratch']
  #allocation2 [shape = 'f32[128,128]{1,0:T(8,128)}', space=vmem, size = 0x10000, scoped, tag = 'scratch operand']
  %s0 = inlined_call_operand.vmem [shape: bf16[2,2,10,18,128], index: 0, kind: input, shape index: {}]
  %s1 = inlined_call_operand.vmem [shape: bf16[3,384,128], index: 1, kind: input, shape index: {}]
  %s2 = inlined_call_operand.vmem [shape: f32[1,128], index: 2, kind: input, shape index: {}]
  %s3 = inlined_call_operand.vmem [shape: f32[1,128], index: 3, kind: input, shape index: {}]
  %s4 = inlined_call_operand.vmem [shape: f32[1,128], index: 4, kind: input, shape index: {}]
  %s5 = inlined_call_operand.vmem [shape: bf16[2,16,16,128], index: 5, kind: output, shape index: {0}]
  %s6 = inlined_call_operand.vmem [shape: f32[2,2,2,128], index: 6, kind: output, shape index: {1}]
  %7 = xla_tuple %s5, %s6
  %s8 = sld [smem:[#allocation0]]
  $region61: #{double_conv.4} parent=0
    _
  %s10 = ssub.s32 1, %s8
  %s11 = scalar_select 0, %s10, %s8
  loop: start=0, step=1, limit=6
  $region2: #{double_conv.4} parent=0 // loop_pre_header
    _
  $region3: #{double_conv.4} parent=0 // loop_header
    %s13 = sphi 0, %s17
    %p14 = scmp.ge.s32.totalorder %s13, 6
    %s20 = sphi 0, %s32
    %s21 = sphi 0, %s28
    %s22 = sphi 0, %s20
    %s23 = sphi 0, %s21
    %s24 = sphi 0, %s22
    %s25 = sphi 0, %s23
    %s37 = sphi 0, %s39
    %s40 = sphi 0, %s37
    %s41 = sphi 0, %s40
    %s57 = sphi 0, %s41
    %s61 = sphi 0, %s61
    %s63 = sphi 0, %s61
    %s64 = sphi 0, %s63
    %s78 = sphi 0, %s64
    %s82 = sphi 0, %s82
    %s84 = sphi 0, %s82
    %s85 = sphi 0, %s84
    %s99 = sphi 0, %s85
    %s103 = sphi 0, %s103
    %s105 = sphi 0, %s103
    %s106 = sphi 0, %s105
    %s120 = sphi 0, %s106
    %s124 = sphi 0, %s124
    %s126 = sphi 0, %s124
    %s127 = sphi 0, %s126
    %s141 = sphi 0, %s127
    %s149 = sphi 0, %s151
    %s152 = sphi 0, %s149
    %s153 = sphi 0, %s152
    %s169 = sphi 0, %s153
    %s177 = sphi 0, %s179
    %s180 = sphi 0, %s177
    %s181 = sphi 0, %s180
    %s197 = sphi 0, %s181
  $region4: #{double_conv.4} parent=0 // loop_header_branch
    %16 = sbr.rel (%p14) target = $region8
  $region5: #{double_conv.4} parent=0 // loop_body
    %s18 = ssub.s32 %s13, 1
    %s19 = ssub.s32 %s13, 2
    %s26 = sadd.s32 1, %s21
    %p27 = scmp.ge.s32.totalorder %s26, 2
    %s28 = scalar_select %p27, 0, %s26
    %s29 = sadd.s32 1, %s20
    %s30 = scalar_select %p27, %s29, %s20
    %p31 = scmp.ge.s32.totalorder %s30, 2
    %s32 = scalar_select %p31, 0, %s30
    %s33 = ssub.s32 %s20, %s32
    %s34 = ssub.s32 %s21, %s28
    %s35 = sor.u32 %s33, %s34
    %p36 = scmp.eq.s32.totalorder %s35, 0
    %s38 = sadd.s32 %s37, 1
    %s39 = scalar_select %p36, %s37, %s38
    %p42 = pneg %p36
    %p43 = scmp.eq.s32.totalorder %s13, 3
    %p44 = por %p42, %p43
    %p45 = scmp.ne.s32.totalorder %s37, %s40
    %p46 = scmp.eq.s32.totalorder %s13, 0
    %p47 = por %p45, %p46
    %p48 = scmp.ne.s32.totalorder %s37, %s40
    %p49 = scmp.eq.s32.totalorder %s18, 3
    %p50 = por %p48, %p49
    %p51 = scmp.ne.s32.totalorder %s40, %s41
    %p52 = scmp.eq.s32.totalorder %s18, 0
    %p53 = por %p51, %p52
    %p54 = scmp.ne.s32.totalorder %s40, %s41
    %p55 = scmp.eq.s32.totalorder %s19, 3
    %p56 = por %p54, %p55
    %p58 = scmp.ne.s32.totalorder %s41, %s57
    %p59 = scmp.eq.s32.totalorder %s19, 0
    %p60 = por %p58, %p59
    %s62 = sadd.s32 %s61, 1
    %p65 = scmp.eq.s32.totalorder %s13, 3
    %p66 = scmp.ne.s32.totalorder %s61, %s63
    %p67 = scmp.eq.s32.totalorder %s13, 0
    %p68 = por %p66, %p67
    %p69 = scmp.ne.s32.totalorder %s61, %s63
    %p70 = scmp.eq.s32.totalorder %s18, 3
    %p71 = por %p69, %p70
    %p72 = scmp.ne.s32.totalorder %s63, %s64
    %p73 = scmp.eq.s32.totalorder %s18, 0
    %p74 = por %p72, %p73
    %p75 = scmp.ne.s32.totalorder %s63, %s64
    %p76 = scmp.eq.s32.totalorder %s19, 3
    %p77 = por %p75, %p76
    %p79 = scmp.ne.s32.totalorder %s64, %s78
    %p80 = scmp.eq.s32.totalorder %s19, 0
    %p81 = por %p79, %p80
    %s83 = sadd.s32 %s82, 1
    %p86 = scmp.eq.s32.totalorder %s13, 3
    %p87 = scmp.ne.s32.totalorder %s82, %s84
    %p88 = scmp.eq.s32.totalorder %s13, 0
    %p89 = por %p87, %p88
    %p90 = scmp.ne.s32.totalorder %s82, %s84
    %p91 = scmp.eq.s32.totalorder %s18, 3
    %p92 = por %p90, %p91
    %p93 = scmp.ne.s32.totalorder %s84, %s85
    %p94 = scmp.eq.s32.totalorder %s18, 0
    %p95 = por %p93, %p94
    %p96 = scmp.ne.s32.totalorder %s84, %s85
    %p97 = scmp.eq.s32.totalorder %s19, 3
    %p98 = por %p96, %p97
    %p100 = scmp.ne.s32.totalorder %s85, %s99
    %p101 = scmp.eq.s32.totalorder %s19, 0
    %p102 = por %p100, %p101
    %s104 = sadd.s32 %s103, 1
    %p107 = scmp.eq.s32.totalorder %s13, 3
    %p108 = scmp.ne.s32.totalorder %s103, %s105
    %p109 = scmp.eq.s32.totalorder %s13, 0
    %p110 = por %p108, %p109
    %p111 = scmp.ne.s32.totalorder %s103, %s105
    %p112 = scmp.eq.s32.totalorder %s18, 3
    %p113 = por %p111, %p112
    %p114 = scmp.ne.s32.totalorder %s105, %s106
    %p115 = scmp.eq.s32.totalorder %s18, 0
    %p116 = por %p114, %p115
    %p117 = scmp.ne.s32.totalorder %s105, %s106
    %p118 = scmp.eq.s32.totalorder %s19, 3
    %p119 = por %p117, %p118
    %p121 = scmp.ne.s32.totalorder %s106, %s120
    %p122 = scmp.eq.s32.totalorder %s19, 0
    %p123 = por %p121, %p122
    %s125 = sadd.s32 %s124, 1
    %p128 = scmp.eq.s32.totalorder %s13, 3
    %p129 = scmp.ne.s32.totalorder %s124, %s126
    %p130 = scmp.eq.s32.totalorder %s13, 0
    %p131 = por %p129, %p130
    %p132 = scmp.ne.s32.totalorder %s124, %s126
    %p133 = scmp.eq.s32.totalorder %s18, 3
    %p134 = por %p132, %p133
    %p135 = scmp.ne.s32.totalorder %s126, %s127
    %p136 = scmp.eq.s32.totalorder %s18, 0
    %p137 = por %p135, %p136
    %p138 = scmp.ne.s32.totalorder %s126, %s127
    %p139 = scmp.eq.s32.totalorder %s19, 3
    %p140 = por %p138, %p139
    %p142 = scmp.ne.s32.totalorder %s127, %s141
    %p143 = scmp.eq.s32.totalorder %s19, 0
    %p144 = por %p142, %p143
    %s145 = ssub.s32 %s20, %s32
    %s146 = ssub.s32 %s21, %s28
    %s147 = sor.u32 %s145, %s146
    %p148 = scmp.eq.s32.totalorder %s147, 0
    %s150 = sadd.s32 %s149, 1
    %s151 = scalar_select %p148, %s149, %s150
    %p154 = pneg %p148
    %p155 = scmp.eq.s32.totalorder %s13, 3
    %p156 = por %p154, %p155
    %p157 = scmp.ne.s32.totalorder %s149, %s152
    %p158 = scmp.eq.s32.totalorder %s13, 0
    %p159 = por %p157, %p158
    %p160 = scmp.ne.s32.totalorder %s149, %s152
    %p161 = scmp.eq.s32.totalorder %s18, 3
    %p162 = por %p160, %p161
    %p163 = scmp.ne.s32.totalorder %s152, %s153
    %p164 = scmp.eq.s32.totalorder %s18, 0
    %p165 = por %p163, %p164
    %p166 = scmp.ne.s32.totalorder %s152, %s153
    %p167 = scmp.eq.s32.totalorder %s19, 3
    %p168 = por %p166, %p167
    %p170 = scmp.ne.s32.totalorder %s153, %s169
    %p171 = scmp.eq.s32.totalorder %s19, 0
    %p172 = por %p170, %p171
    %s173 = ssub.s32 %s20, %s32
    %s174 = ssub.s32 %s21, %s28
    %s175 = sor.u32 %s173, %s174
    %p176 = scmp.eq.s32.totalorder %s175, 0
    %s178 = sadd.s32 %s177, 1
    %s179 = scalar_select %p176, %s177, %s178
    %p182 = pneg %p176
    %p183 = scmp.eq.s32.totalorder %s13, 3
    %p184 = por %p182, %p183
    %p185 = scmp.ne.s32.totalorder %s177, %s180
    %p186 = scmp.eq.s32.totalorder %s13, 0
    %p187 = por %p185, %p186
    %p188 = scmp.ne.s32.totalorder %s177, %s180
    %p189 = scmp.eq.s32.totalorder %s18, 3
    %p190 = por %p188, %p189
    %p191 = scmp.ne.s32.totalorder %s180, %s181
    %p192 = scmp.eq.s32.totalorder %s18, 0
    %p193 = por %p191, %p192
    %p194 = scmp.ne.s32.totalorder %s180, %s181
    %p195 = scmp.eq.s32.totalorder %s19, 3
    %p196 = por %p194, %p195
    %p198 = scmp.ne.s32.totalorder %s181, %s197
    %p199 = scmp.eq.s32.totalorder %s19, 0
    %p200 = por %p198, %p199
    %p201 = scmp.le.s32.totalorder 1, %s13
    %p202 = scmp.lt.s32.totalorder %s13, 5
    %p203 = pnand %p201, %p202
    %p204 = pneg %p203
    // Predicated region
    $region9: #{double_conv.4} parent=5 // pred_check
      _
    $region10: #{double_conv.4} parent=5 // pred_check_branch
      %206 = sbr.rel (%p203) target = $region12
    $region11: #{double_conv.4} parent=5 // pred_region
      %s207 = ssub.s32 %s13, 1
      // Predicated region
      $region13: #{double_conv.4} parent=11 // pred_check
        %p208 = pneg %p74
      $region14: #{double_conv.4} parent=11 // pred_check_branch
        %210 = sbr.rel (%p208) target = $region16
      $region15: #{double_conv.4} parent=11 // pred_region
        _
      $region16: #{double_conv.4} parent=11 // pred_fallthru
        _
      // Predicated region
      $region17: #{double_conv.4} parent=11 // pred_check
        %p211 = pneg %p95
      $region18: #{double_conv.4} parent=11 // pred_check_branch
        %213 = sbr.rel (%p211) target = $region20
      $region19: #{double_conv.4} parent=11 // pred_region
        _
      $region20: #{double_conv.4} parent=11 // pred_fallthru
        _
      // Predicated region
      $region21: #{double_conv.4} parent=11 // pred_check
        %p214 = pneg %p116
      $region22: #{double_conv.4} parent=11 // pred_check_branch
        %216 = sbr.rel (%p214) target = $region24
      $region23: #{double_conv.4} parent=11 // pred_region
        _
      $region24: #{double_conv.4} parent=11 // pred_fallthru
        _
      // Predicated region
      $region25: #{double_conv.4} parent=11 // pred_check
        %p217 = pneg %p137
      $region26: #{double_conv.4} parent=11 // pred_check_branch
        %219 = sbr.rel (%p217) target = $region28
      $region27: #{double_conv.4} parent=11 // pred_region
        _
      $region28: #{double_conv.4} parent=11 // pred_fallthru
        _
    $region12: #{double_conv.4} parent=5 // pred_fallthru
      _
    %p220 = scmp.lt.s32.totalorder %s13, 4
    // Predicated region
    $region29: #{double_conv.4} parent=5 // pred_check
      %p221 = pneg %p220
    $region30: #{double_conv.4} parent=5 // pred_check_branch
      %223 = sbr.rel (%p221) target = $region32
    $region31: #{double_conv.4} parent=5 // pred_region
      // Predicated region
      $region33: #{double_conv.4} parent=31 // pred_check
        %p224 = pneg %p47
      $region34: #{double_conv.4} parent=31 // pred_check_branch
        %226 = sbr.rel (%p224) target = $region36
      $region35: #{double_conv.4} parent=31 // pred_region
        %p227 = scmp.lt.s32.totalorder %s20, 1
        %s228 = scalar_select %p227, %s20, 1
        %p229 = scmp.lt.s32.totalorder %s21, 1
        %s230 = scalar_select %p229, %s21, 1
        %s231 = smul.addr %s230, 30
        %s232 = smul.addr %s228, 60
        %s233 = sadd.s32 %s231, %s232
        %s234 = smul.addr %s233, 4
        %s235 = scalar_lea.vmem %s0, %s234
      $region36: #{double_conv.4} parent=31 // pred_fallthru
        _
    $region32: #{double_conv.4} parent=5 // pred_fallthru
      _
    %p236 = scmp.le.s32.totalorder 1, %s13
    %p237 = scmp.lt.s32.totalorder %s13, 5
    %p238 = pnand %p236, %p237
    %p239 = pneg %p238
    // Predicated region
    $region37: #{double_conv.4} parent=5 // pred_check
      _
    $region38: #{double_conv.4} parent=5 // pred_check_branch
      %241 = sbr.rel (%p238) target = $region40
    $region39: #{double_conv.4} parent=5 // pred_region
      %s242 = ssub.s32 %s13, 1
      %p243 = scmp.lt.s32.totalorder %s22, 1
      %s244 = scalar_select %p243, %s22, 1
      %p245 = scmp.lt.s32.totalorder %s23, 1
      %s246 = scalar_select %p245, %s23, 1
      %s247 = smul.addr %s246, 30
      %s248 = smul.addr %s244, 60
      %s249 = sadd.s32 %s247, %s248
      %s250 = smul.addr %s249, 4
      %s251 = scalar_lea.vmem %s0, %s250
      %p252 = pneg %p53
      %p253 = pneg %p50
      %p254 = pneg %p74
      %p255 = pneg %p71
      %p256 = pneg %p95
      %p257 = pneg %p92
      %p258 = pneg %p116
      %p259 = pneg %p113
      %p260 = pneg %p137
      %p261 = pneg %p134
      %p262 = pneg %p165
      %p263 = pneg %p162
      %s264 = smul.u32 8, %s23
      %p265 = scmp.lt.s32.totalorder %s22, 1
      %s266 = scalar_select %p265, %s22, 1
      %p267 = scmp.lt.s32.totalorder %s264, 15
      %s268 = scalar_select %p267, %s264, 15
      %s269 = smul.addr %s268, 2
      %s270 = smul.addr %s266, 32
      %s271 = sadd.s32 %s269, %s270
      %s272 = smul.addr %s271, 4
      %s273 = scalar_lea.vmem %s5, %s272
      %p274 = pneg %p193
      %p275 = pneg %p190
      %p276 = scmp.lt.s32.totalorder %s22, 1
      %s277 = scalar_select %p276, %s22, 1
      %p278 = scmp.lt.s32.totalorder %s23, 1
      %s279 = scalar_select %p278, %s23, 1
      %s280 = smul.addr %s277, 2
      %s281 = sadd.s32 %s279, %s280
      %s282 = smul.addr %s281, 2
      %s283 = scalar_lea.vmem %s6, %s282
      %p284 = scmp.lt.s32.totalorder %s22, 1
      %s285 = scalar_select %p284, %s22, 1
      %p286 = scmp.lt.s32.totalorder %s23, 1
      %s287 = scalar_select %p286, %s23, 1
      %s288 = smul.addr %s287, 30
      %s289 = smul.addr %s285, 60
      %s290 = sadd.s32 %s288, %s289
      %s291 = smul.addr %s290, 4
      %s292 = scalar_lea.vmem %s0, %s291
      %s293 = smul.u32 8, %s23
      %p294 = scmp.lt.s32.totalorder %s22, 1
      %s295 = scalar_select %p294, %s22, 1
      %p296 = scmp.lt.s32.totalorder %s293, 15
      %s297 = scalar_select %p296, %s293, 15
      %s298 = smul.addr %s297, 2
      %s299 = smul.addr %s295, 32
      %s300 = sadd.s32 %s298, %s299
      %s301 = smul.addr %s300, 4
      %s302 = scalar_lea.vmem %s5, %s301
      %s303 = smul.u32 8, %s23
      %p304 = scmp.lt.s32.totalorder %s22, 1
      %s305 = scalar_select %p304, %s22, 1
      %p306 = scmp.lt.s32.totalorder %s23, 1
      %s307 = scalar_select %p306, %s23, 1
      %s308 = smul.addr %s305, 2
      %s309 = sadd.s32 %s307, %s308
      %s310 = smul.addr %s309, 2
      %s311 = scalar_lea.vmem %s6, %s310
      %v312 = vld [vmem:[%s292] sm:$0xf]
      %v313 = vld [vmem:[%s292 + $0x4] sm:$0xf]
      %v314 = vld [vmem:[%s292 + $0x8] sm:$0x1]
      %v315 = vld [vmem:[%s292 + $0xc] sm:$0xf]
      %v316 = vld [vmem:[%s292 + $0x10] sm:$0xf]
      %v317 = vld [vmem:[%s292 + $0x14] sm:$0x1]
      %v318 = vld [vmem:[%s292 + $0x18] sm:$0xf]
      %v319 = vld [vmem:[%s292 + $0x1c] sm:$0xf]
      %v320 = vld [vmem:[%s292 + $0x20] sm:$0x1]
      %v321 = vld [vmem:[%s292 + $0x24] sm:$0xf]
      %v322 = vld [vmem:[%s292 + $0x28] sm:$0xf]
      %v323 = vld [vmem:[%s292 + $0x2c] sm:$0x1]
      %v324 = vld [vmem:[%s292 + $0x30] sm:$0xf]
      %v325 = vld [vmem:[%s292 + $0x34] sm:$0xf]
      %v326 = vld [vmem:[%s292 + $0x38] sm:$0x1]
      %v327 = vld [vmem:[%s292 + $0x3c] sm:$0xf]
      %v328 = vld [vmem:[%s292 + $0x40] sm:$0xf]
      %v329 = vld [vmem:[%s292 + $0x44] sm:$0x1]
      %v330 = vld [vmem:[%s292 + $0x48] sm:$0xf]
      %v331 = vld [vmem:[%s292 + $0x4c] sm:$0xf]
      %v332 = vld [vmem:[%s292 + $0x50] sm:$0x1]
      %v333 = vld [vmem:[%s292 + $0x54] sm:$0xf]
      %v334 = vld [vmem:[%s292 + $0x58] sm:$0xf]
      %v335 = vld [vmem:[%s292 + $0x5c] sm:$0x1]
      %v336 = vld [vmem:[%s292 + $0x60] sm:$0xf]
      %v337 = vld [vmem:[%s292 + $0x64] sm:$0xf]
      %v338 = vld [vmem:[%s292 + $0x68] sm:$0x1]
      %v339 = vld [vmem:[%s292 + $0x6c] sm:$0xf]
      %v340 = vld [vmem:[%s292 + $0x70] sm:$0xf]
      %v341 = vld [vmem:[%s292 + $0x74] sm:$0x1]
      %v342 = vunpack.c.l.bf16 %v312
      %v343 = vunpack.c.l.bf16 %v313
      %v344 = vunpack.c.l.bf16 %v314
      %v345 = vunpack.c.l.bf16 %v315
      %v346 = vunpack.c.l.bf16 %v316
      %v347 = vunpack.c.l.bf16 %v317
      %v348 = vunpack.c.l.bf16 %v318
      %v349 = vunpack.c.l.bf16 %v319
      %v350 = vunpack.c.l.bf16 %v320
      %v351 = vunpack.c.l.bf16 %v321
      %v352 = vunpack.c.l.bf16 %v322
      %v353 = vunpack.c.l.bf16 %v323
      %v354 = vunpack.c.l.bf16 %v324
      %v355 = vunpack.c.l.bf16 %v325
      %v356 = vunpack.c.l.bf16 %v326
      %v357 = vunpack.c.l.bf16 %v327
      %v358 = vunpack.c.l.bf16 %v328
      %v359 = vunpack.c.l.bf16 %v329
      %v360 = vunpack.c.l.bf16 %v330
      %v361 = vunpack.c.l.bf16 %v331
      %v362 = vunpack.c.l.bf16 %v332
      %v363 = vunpack.c.l.bf16 %v333
      %v364 = vunpack.c.l.bf16 %v334
      %v365 = vunpack.c.l.bf16 %v335
      %v366 = vunpack.c.l.bf16 %v336
      %v367 = vunpack.c.l.bf16 %v337
      %v368 = vunpack.c.l.bf16 %v338
      %v369 = vunpack.c.l.bf16 %v339
      %v370 = vunpack.c.l.bf16 %v340
      %v371 = vunpack.c.l.bf16 %v341
      %v372 = vld [vmem:[%s3] sm:$0x1]
      %v374 = vperm.slane %v372, 0
      %v376 = vmul.f32 %v342, %v374
      %v377 = vmul.f32 %v343, %v374
      %v378 = vmul.f32 %v344, %v374
      %v379 = vmul.f32 %v345, %v374
      %v380 = vmul.f32 %v346, %v374
      %v381 = vmul.f32 %v347, %v374
      %v382 = vmul.f32 %v348, %v374
      %v383 = vmul.f32 %v349, %v374
      %v384 = vmul.f32 %v350, %v374
      %v385 = vmul.f32 %v351, %v374
      %v386 = vmul.f32 %v352, %v374
      %v387 = vmul.f32 %v353, %v374
      %v388 = vmul.f32 %v354, %v374
      %v389 = vmul.f32 %v355, %v374
      %v390 = vmul.f32 %v356, %v374
      %v391 = vmul.f32 %v357, %v374
      %v392 = vmul.f32 %v358, %v374
      %v393 = vmul.f32 %v359, %v374
      %v394 = vmul.f32 %v360, %v374
      %v395 = vmul.f32 %v361, %v374
      %v396 = vmul.f32 %v362, %v374
      %v397 = vmul.f32 %v363, %v374
      %v398 = vmul.f32 %v364, %v374
      %v399 = vmul.f32 %v365, %v374
      %v400 = vmul.f32 %v366, %v374
      %v401 = vmul.f32 %v367, %v374
      %v402 = vmul.f32 %v368, %v374
      %v403 = vmul.f32 %v369, %v374
      %v404 = vmul.f32 %v370, %v374
      %v405 = vmul.f32 %v371, %v374
      %v406 = vld [vmem:[%s4] sm:$0x1]
      %v408 = vperm.slane %v406, 0
      %v410 = vadd.f32 %v376, %v408
      %v411 = vadd.f32 %v377, %v408
      %v412 = vadd.f32 %v378, %v408
      %v413 = vadd.f32 %v379, %v408
      %v414 = vadd.f32 %v380, %v408
      %v415 = vadd.f32 %v381, %v408
      %v416 = vadd.f32 %v382, %v408
      %v417 = vadd.f32 %v383, %v408
      %v418 = vadd.f32 %v384, %v408
      %v419 = vadd.f32 %v385, %v408
      %v420 = vadd.f32 %v386, %v408
      %v421 = vadd.f32 %v387, %v408
      %v422 = vadd.f32 %v388, %v408
      %v423 = vadd.f32 %v389, %v408
      %v424 = vadd.f32 %v390, %v408
      %v425 = vadd.f32 %v391, %v408
      %v426 = vadd.f32 %v392, %v408
      %v427 = vadd.f32 %v393, %v408
      %v428 = vadd.f32 %v394, %v408
      %v429 = vadd.f32 %v395, %v408
      %v430 = vadd.f32 %v396, %v408
      %v431 = vadd.f32 %v397, %v408
      %v432 = vadd.f32 %v398, %v408
      %v433 = vadd.f32 %v399, %v408
      %v434 = vadd.f32 %v400, %v408
      %v435 = vadd.f32 %v401, %v408
      %v436 = vadd.f32 %v402, %v408
      %v437 = vadd.f32 %v403, %v408
      %v438 = vadd.f32 %v404, %v408
      %v439 = vadd.f32 %v405, %v408
      %v440 = vmax.f32 %v410, 0.0
      %v441 = vmax.f32 %v411, 0.0
      %v442 = vmax.f32 %v412, 0.0
      %v443 = vmax.f32 %v413, 0.0
      %v444 = vmax.f32 %v414, 0.0
      %v445 = vmax.f32 %v415, 0.0
      %v446 = vmax.f32 %v416, 0.0
      %v447 = vmax.f32 %v417, 0.0
      %v448 = vmax.f32 %v418, 0.0
      %v449 = vmax.f32 %v419, 0.0
      %v450 = vmax.f32 %v420, 0.0
      %v451 = vmax.f32 %v421, 0.0
      %v452 = vmax.f32 %v422, 0.0
      %v453 = vmax.f32 %v423, 0.0
      %v454 = vmax.f32 %v424, 0.0
      %v455 = vmax.f32 %v425, 0.0
      %v456 = vmax.f32 %v426, 0.0
      %v457 = vmax.f32 %v427, 0.0
      %v458 = vmax.f32 %v428, 0.0
      %v459 = vmax.f32 %v429, 0.0
      %v460 = vmax.f32 %v430, 0.0
      %v461 = vmax.f32 %v431, 0.0
      %v462 = vmax.f32 %v432, 0.0
      %v463 = vmax.f32 %v433, 0.0
      %v464 = vmax.f32 %v434, 0.0
      %v465 = vmax.f32 %v435, 0.0
      %v466 = vmax.f32 %v436, 0.0
      %v467 = vmax.f32 %v437, 0.0
      %v468 = vmax.f32 %v438, 0.0
      %v469 = vmax.f32 %v439, 0.0
      %v470 = vlaneseq
      %v471 = vshrl.u32 %v470, 7
      %v472 = vadd.s32 %v471, 8
      %v473 = vadd.s32 %v471, 16
      %vm474 = vcmp.gt.s32.totalorder %v471, 0
      %vm475 = vcmp.gt.s32.totalorder %v472, 0
      %vm476 = vcmp.gt.s32.totalorder %v473, 0
      %vm477 = vcmp.lt.s32.totalorder %v471, 17
      %vm478 = vcmp.lt.s32.totalorder %v472, 17
      %vm479 = vcmp.lt.s32.totalorder %v473, 17
      %vm480 = vmand %vm474, %vm477
      %vm481 = vmand %vm475, %vm478
      %vm482 = vmand %vm476, %vm479
      %p483 = scmp.eq.s32.totalorder %s23, 0
      %s484 = scalar_select %p483, 1, 0
      %v485 = vstv %s484
      %vm486 = vcmp.eq.s32.totalorder %v485, 1
      %vm487 = vmxor %vm486, 1
      %vm488 = vmand %vm480, %vm487
      %vm489 = vmand %vm481, %vm487
      %vm490 = vmand %vm482, %vm487
      %vm491 = vmand %vm480, 1
      %vm492 = vmand %vm481, 1
      %vm493 = vmand %vm482, 1
      %p494 = scmp.eq.s32.totalorder %s23, 1
      %s495 = scalar_select %p494, 1, 0
      %v496 = vstv %s495
      %vm497 = vcmp.eq.s32.totalorder %v496, 1
      %vm498 = vmxor %vm497, 1
      %vm499 = vmand %vm488, 1
      %vm500 = vmand %vm489, 1
      %vm501 = vmand %vm490, 1
      %vm502 = vmand %vm491, %vm498
      %vm503 = vmand %vm492, %vm498
      %vm504 = vmand %vm493, %vm498
      %v505 = vsel %vm499, %v440, 0.0
      %v506 = vsel %vm500, %v441, 0.0
      %v507 = vsel %vm501, %v442, 0.0
      %v508 = vsel %vm491, %v443, 0.0
      %v509 = vsel %vm492, %v444, 0.0
      %v510 = vsel %vm493, %v445, 0.0
      %v511 = vsel %vm491, %v446, 0.0
      %v512 = vsel %vm492, %v447, 0.0
      %v513 = vsel %vm493, %v448, 0.0
      %v514 = vsel %vm491, %v449, 0.0
      %v515 = vsel %vm492, %v450, 0.0
      %v516 = vsel %vm493, %v451, 0.0
      %v517 = vsel %vm491, %v452, 0.0
      %v518 = vsel %vm492, %v453, 0.0
      %v519 = vsel %vm493, %v454, 0.0
      %v520 = vsel %vm491, %v455, 0.0
      %v521 = vsel %vm492, %v456, 0.0
      %v522 = vsel %vm493, %v457, 0.0
      %v523 = vsel %vm491, %v458, 0.0
      %v524 = vsel %vm492, %v459, 0.0
      %v525 = vsel %vm493, %v460, 0.0
      %v526 = vsel %vm491, %v461, 0.0
      %v527 = vsel %vm492, %v462, 0.0
      %v528 = vsel %vm493, %v463, 0.0
      %v529 = vsel %vm491, %v464, 0.0
      %v530 = vsel %vm492, %v465, 0.0
      %v531 = vsel %vm493, %v466, 0.0
      %v532 = vsel %vm502, %v467, 0.0
      %v533 = vsel %vm503, %v468, 0.0
      %v534 = vsel %vm504, %v469, 0.0
      %v535 = vpack.c.bf16 %v505, %v505
      %v536 = vpack.c.bf16 %v506, %v506
      %v537 = vpack.c.bf16 %v507, %v507
      %v538 = vpack.c.bf16 %v508, %v508
      %v539 = vpack.c.bf16 %v509, %v509
      %v540 = vpack.c.bf16 %v510, %v510
      %v541 = vpack.c.bf16 %v511, %v511
      %v542 = vpack.c.bf16 %v512, %v512
      %v543 = vpack.c.bf16 %v513, %v513
      %v544 = vpack.c.bf16 %v514, %v514
      %v545 = vpack.c.bf16 %v515, %v515
      %v546 = vpack.c.bf16 %v516, %v516
      %v547 = vpack.c.bf16 %v517, %v517
      %v548 = vpack.c.bf16 %v518, %v518
      %v549 = vpack.c.bf16 %v519, %v519
      %v550 = vpack.c.bf16 %v520, %v520
      %v551 = vpack.c.bf16 %v521, %v521
      %v552 = vpack.c.bf16 %v522, %v522
      %v553 = vpack.c.bf16 %v523, %v523
      %v554 = vpack.c.bf16 %v524, %v524
      %v555 = vpack.c.bf16 %v525, %v525
      %v556 = vpack.c.bf16 %v526, %v526
      %v557 = vpack.c.bf16 %v527, %v527
      %v558 = vpack.c.bf16 %v528, %v528
      %v559 = vpack.c.bf16 %v529, %v529
      %v560 = vpack.c.bf16 %v530, %v530
      %v561 = vpack.c.bf16 %v531, %v531
      %v562 = vpack.c.bf16 %v532, %v532
      %v563 = vpack.c.bf16 %v533, %v533
      %v564 = vpack.c.bf16 %v534, %v534
      %v585 = vunpack.c.l.b16 %v535
      %v586 = vunpack.c.l.b16 %v536
      %v587 = vunpack.c.l.b16 %v538
      %v588 = vunpack.c.l.b16 %v539
      %v589 = vunpack.c.l.b16 %v541
      %v590 = vunpack.c.l.b16 %v542
      %v591 = vunpack.c.l.b16 %v544
      %v592 = vunpack.c.l.b16 %v545
      %v593 = vunpack.c.l.b16 %v547
      %v594 = vunpack.c.l.b16 %v548
      %v595 = vunpack.c.l.b16 %v550
      %v596 = vunpack.c.l.b16 %v551
      %v597 = vunpack.c.l.b16 %v553
      %v598 = vunpack.c.l.b16 %v554
      %v599 = vunpack.c.l.b16 %v556
      %v600 = vunpack.c.l.b16 %v557
      %v601 = vunpack.c.l.b16 %v559
      %v602 = vunpack.c.l.b16 %v560
      %v603 = vunpack.c.l.b16 %v562
      %v604 = vunpack.c.l.b16 %v563
      %v605 = vpack.c.b16 %v586, %v585
      %v606 = vpack.c.b16 %v588, %v587
      %v607 = vpack.c.b16 %v590, %v589
      %v608 = vpack.c.b16 %v592, %v591
      %v609 = vpack.c.b16 %v594, %v593
      %v610 = vpack.c.b16 %v596, %v595
      %v611 = vpack.c.b16 %v598, %v597
      %v612 = vpack.c.b16 %v600, %v599
      %v613 = vpack.c.b16 %v602, %v601
      %v614 = vpack.c.b16 %v604, %v603
      %v635 = vunpack.c.l.b16 %v537
      %v636 = vunpack.c.l.b16 %v540
      %v637 = vunpack.c.l.b16 %v543
      %v638 = vunpack.c.l.b16 %v546
      %v639 = vunpack.c.l.b16 %v549
      %v640 = vunpack.c.l.b16 %v552
      %v641 = vunpack.c.l.b16 %v555
      %v642 = vunpack.c.l.b16 %v558
      %v643 = vunpack.c.l.b16 %v561
      %v644 = vunpack.c.l.b16 %v564
      %v645 = vpack.c.b16 %v635, %v635
      %v646 = vpack.c.b16 %v636, %v636
      %v647 = vpack.c.b16 %v637, %v637
      %v648 = vpack.c.b16 %v638, %v638
      %v649 = vpack.c.b16 %v639, %v639
      %v650 = vpack.c.b16 %v640, %v640
      %v651 = vpack.c.b16 %v641, %v641
      %v652 = vpack.c.b16 %v642, %v642
      %v653 = vpack.c.b16 %v643, %v643
      %v654 = vpack.c.b16 %v644, %v644
      %vm655 = vsmask.f32 7424
      %v657 = vshrl.u32 %v605, 16
      %v659 = vshll.u32 %v605, 16
      %v661 = vrot.slane %v659, 1
      %v662 = vor.u32 %v657, %v661
      %v664 = vshll.u32 %v645, 16
      %v666 = vrot.slane %v664, 1
      %v667 = vsel %vm655, %v662, %v666
      %v669 = vshrl.u32 %v606, 16
      %v671 = vshll.u32 %v606, 16
      %v673 = vrot.slane %v671, 1
      %v674 = vor.u32 %v669, %v673
      %v676 = vshll.u32 %v646, 16
      %v678 = vrot.slane %v676, 1
      %v679 = vsel %vm655, %v674, %v678
      %v681 = vshrl.u32 %v607, 16
      %v683 = vshll.u32 %v607, 16
      %v685 = vrot.slane %v683, 1
      %v686 = vor.u32 %v681, %v685
      %v688 = vshll.u32 %v647, 16
      %v690 = vrot.slane %v688, 1
      %v691 = vsel %vm655, %v686, %v690
      %v693 = vshrl.u32 %v608, 16
      %v695 = vshll.u32 %v608, 16
      %v697 = vrot.slane %v695, 1
      %v698 = vor.u32 %v693, %v697
      %v700 = vshll.u32 %v648, 16
      %v702 = vrot.slane %v700, 1
      %v703 = vsel %vm655, %v698, %v702
      %v705 = vshrl.u32 %v609, 16
      %v707 = vshll.u32 %v609, 16
      %v709 = vrot.slane %v707, 1
      %v710 = vor.u32 %v705, %v709
      %v712 = vshll.u32 %v649, 16
      %v714 = vrot.slane %v712, 1
      %v715 = vsel %vm655, %v710, %v714
      %v717 = vshrl.u32 %v610, 16
      %v719 = vshll.u32 %v610, 16
      %v721 = vrot.slane %v719, 1
      %v722 = vor.u32 %v717, %v721
      %v724 = vshll.u32 %v650, 16
      %v726 = vrot.slane %v724, 1
      %v727 = vsel %vm655, %v722, %v726
      %v729 = vshrl.u32 %v611, 16
      %v731 = vshll.u32 %v611, 16
      %v733 = vrot.slane %v731, 1
      %v734 = vor.u32 %v729, %v733
      %v736 = vshll.u32 %v651, 16
      %v738 = vrot.slane %v736, 1
      %v739 = vsel %vm655, %v734, %v738
      %v741 = vshrl.u32 %v612, 16
      %v743 = vshll.u32 %v612, 16
      %v745 = vrot.slane %v743, 1
      %v746 = vor.u32 %v741, %v745
      %v748 = vshll.u32 %v652, 16
      %v750 = vrot.slane %v748, 1
      %v751 = vsel %vm655, %v746, %v750
      %v753 = vshrl.u32 %v613, 16
      %v755 = vshll.u32 %v613, 16
      %v757 = vrot.slane %v755, 1
      %v758 = vor.u32 %v753, %v757
      %v760 = vshll.u32 %v653, 16
      %v762 = vrot.slane %v760, 1
      %v763 = vsel %vm655, %v758, %v762
      %v765 = vshrl.u32 %v614, 16
      %v767 = vshll.u32 %v614, 16
      %v769 = vrot.slane %v767, 1
      %v770 = vor.u32 %v765, %v769
      %v772 = vshll.u32 %v654, 16
      %v774 = vrot.slane %v772, 1
      %v775 = vsel %vm655, %v770, %v774
      %vm786 = vcmask 1046528
      %v787 = vrot.slane %v605, 1
      %v788 = vrot.slane %v645, 1
      %v789 = vsel %vm786, %v787, %v788
      %v790 = vrot.slane %v606, 1
      %v791 = vrot.slane %v646, 1
      %v792 = vsel %vm786, %v790, %v791
      %v793 = vrot.slane %v607, 1
      %v794 = vrot.slane %v647, 1
      %v795 = vsel %vm786, %v793, %v794
      %v796 = vrot.slane %v608, 1
      %v797 = vrot.slane %v648, 1
      %v798 = vsel %vm786, %v796, %v797
      %v799 = vrot.slane %v609, 1
      %v800 = vrot.slane %v649, 1
      %v801 = vsel %vm786, %v799, %v800
      %v802 = vrot.slane %v610, 1
      %v803 = vrot.slane %v650, 1
      %v804 = vsel %vm786, %v802, %v803
      %v805 = vrot.slane %v611, 1
      %v806 = vrot.slane %v651, 1
      %v807 = vsel %vm786, %v805, %v806
      %v808 = vrot.slane %v612, 1
      %v809 = vrot.slane %v652, 1
      %v810 = vsel %vm786, %v808, %v809
      %v811 = vrot.slane %v613, 1
      %v812 = vrot.slane %v653, 1
      %v813 = vsel %vm786, %v811, %v812
      %v814 = vrot.slane %v614, 1
      %v815 = vrot.slane %v654, 1
      %v816 = vsel %vm786, %v814, %v815
      %v827 = vld [vmem:[%s1] sm:$0xf]
      %v828 = vld [vmem:[%s1 + $0x4] sm:$0xf]
      %v829 = vld [vmem:[%s1 + $0x8] sm:$0xf]
      %v830 = vld [vmem:[%s1 + $0xc] sm:$0xf]
      %v831 = vld [vmem:[%s1 + $0x10] sm:$0xf]
      %v832 = vld [vmem:[%s1 + $0x14] sm:$0xf]
      %v833 = vld [vmem:[%s1 + $0x18] sm:$0xf]
      %v834 = vld [vmem:[%s1 + $0x1c] sm:$0xf]
      %v835 = vld [vmem:[%s1 + $0x20] sm:$0xf]
      %v836 = vld [vmem:[%s1 + $0x24] sm:$0xf]
      %v837 = vld [vmem:[%s1 + $0x28] sm:$0xf]
      %v838 = vld [vmem:[%s1 + $0x2c] sm:$0xf]
      %v839 = vld [vmem:[%s1 + $0x30] sm:$0xf]
      %v840 = vld [vmem:[%s1 + $0x34] sm:$0xf]
      %v841 = vld [vmem:[%s1 + $0x38] sm:$0xf]
      %v842 = vld [vmem:[%s1 + $0x3c] sm:$0xf]
      %v843 = vld [vmem:[%s1 + $0x40] sm:$0xf]
      %v844 = vld [vmem:[%s1 + $0x44] sm:$0xf]
      %v845 = vld [vmem:[%s1 + $0x48] sm:$0xf]
      %v846 = vld [vmem:[%s1 + $0x4c] sm:$0xf]
      %v847 = vld [vmem:[%s1 + $0x50] sm:$0xf]
      %v848 = vld [vmem:[%s1 + $0x54] sm:$0xf]
      %v849 = vld [vmem:[%s1 + $0x58] sm:$0xf]
      %v850 = vld [vmem:[%s1 + $0x5c] sm:$0xf]
      %v851 = vld [vmem:[%s1 + $0x60] sm:$0xf]
      %v852 = vld [vmem:[%s1 + $0x64] sm:$0xf]
      %v853 = vld [vmem:[%s1 + $0x68] sm:$0xf]
      %v854 = vld [vmem:[%s1 + $0x6c] sm:$0xf]
      %v855 = vld [vmem:[%s1 + $0x70] sm:$0xf]
      %v856 = vld [vmem:[%s1 + $0x74] sm:$0xf]
      %v857 = vld [vmem:[%s1 + $0x78] sm:$0xf]
      %v858 = vld [vmem:[%s1 + $0x7c] sm:$0xf]
      %v859 = vld [vmem:[%s1 + $0x80] sm:$0xf]
      %v860 = vld [vmem:[%s1 + $0x84] sm:$0xf]
      %v861 = vld [vmem:[%s1 + $0x88] sm:$0xf]
      %v862 = vld [vmem:[%s1 + $0x8c] sm:$0xf]
      %v863 = vld [vmem:[%s1 + $0x90] sm:$0xf]
      %v864 = vld [vmem:[%s1 + $0x94] sm:$0xf]
      %v865 = vld [vmem:[%s1 + $0x98] sm:$0xf]
      %v866 = vld [vmem:[%s1 + $0x9c] sm:$0xf]
      %v867 = vld [vmem:[%s1 + $0xa0] sm:$0xf]
      %v868 = vld [vmem:[%s1 + $0xa4] sm:$0xf]
      %v869 = vld [vmem:[%s1 + $0xa8] sm:$0xf]
      %v870 = vld [vmem:[%s1 + $0xac] sm:$0xf]
      %v871 = vld [vmem:[%s1 + $0xb0] sm:$0xf]
      %v872 = vld [vmem:[%s1 + $0xb4] sm:$0xf]
      %v873 = vld [vmem:[%s1 + $0xb8] sm:$0xf]
      %v874 = vld [vmem:[%s1 + $0xbc] sm:$0xf]
      %v923 = vunpack.c.l.b16 %v827
      %v924 = vunpack.c.l.b16 %v828
      %v925 = vunpack.c.l.b16 %v829
      %v926 = vunpack.c.l.b16 %v830
      %v927 = vunpack.c.l.b16 %v831
      %v928 = vunpack.c.l.b16 %v832
      %v929 = vunpack.c.l.b16 %v833
      %v930 = vunpack.c.l.b16 %v834
      %v931 = vunpack.c.l.b16 %v835
      %v932 = vunpack.c.l.b16 %v836
      %v933 = vunpack.c.l.b16 %v837
      %v934 = vunpack.c.l.b16 %v838
      %v935 = vunpack.c.l.b16 %v839
      %v936 = vunpack.c.l.b16 %v840
      %v937 = vunpack.c.l.b16 %v841
      %v938 = vunpack.c.l.b16 %v842
      %v939 = vunpack.c.l.b16 %v843
      %v940 = vunpack.c.l.b16 %v844
      %v941 = vunpack.c.l.b16 %v845
      %v942 = vunpack.c.l.b16 %v846
      %v943 = vunpack.c.l.b16 %v847
      %v944 = vunpack.c.l.b16 %v848
      %v945 = vunpack.c.l.b16 %v849
      %v946 = vunpack.c.l.b16 %v850
      %v947 = vunpack.c.l.b16 %v851
      %v948 = vunpack.c.l.b16 %v852
      %v949 = vunpack.c.l.b16 %v853
      %v950 = vunpack.c.l.b16 %v854
      %v951 = vunpack.c.l.b16 %v855
      %v952 = vunpack.c.l.b16 %v856
      %v953 = vunpack.c.l.b16 %v857
      %v954 = vunpack.c.l.b16 %v858
      %v955 = vunpack.c.l.b16 %v859
      %v956 = vunpack.c.l.b16 %v860
      %v957 = vunpack.c.l.b16 %v861
      %v958 = vunpack.c.l.b16 %v862
      %v959 = vunpack.c.l.b16 %v863
      %v960 = vunpack.c.l.b16 %v864
      %v961 = vunpack.c.l.b16 %v865
      %v962 = vunpack.c.l.b16 %v866
      %v963 = vunpack.c.l.b16 %v867
      %v964 = vunpack.c.l.b16 %v868
      %v965 = vunpack.c.l.b16 %v869
      %v966 = vunpack.c.l.b16 %v870
      %v967 = vunpack.c.l.b16 %v871
      %v968 = vunpack.c.l.b16 %v872
      %v969 = vunpack.c.l.b16 %v873
      %v970 = vunpack.c.l.b16 %v874
      %v971 = vpack.c.b16 %v924, %v923
      %v972 = vpack.c.b16 %v926, %v925
      %v973 = vpack.c.b16 %v928, %v927
      %v974 = vpack.c.b16 %v930, %v929
      %v975 = vpack.c.b16 %v932, %v931
      %v976 = vpack.c.b16 %v934, %v933
      %v977 = vpack.c.b16 %v936, %v935
      %v978 = vpack.c.b16 %v938, %v937
      %v979 = vpack.c.b16 %v940, %v939
      %v980 = vpack.c.b16 %v942, %v941
      %v981 = vpack.c.b16 %v944, %v943
      %v982 = vpack.c.b16 %v946, %v945
      %v983 = vpack.c.b16 %v948, %v947
      %v984 = vpack.c.b16 %v950, %v949
      %v985 = vpack.c.b16 %v952, %v951
      %v986 = vpack.c.b16 %v954, %v953
      %v987 = vpack.c.b16 %v956, %v955
      %v988 = vpack.c.b16 %v958, %v957
      %v989 = vpack.c.b16 %v960, %v959
      %v990 = vpack.c.b16 %v962, %v961
      %v991 = vpack.c.b16 %v964, %v963
      %v992 = vpack.c.b16 %v966, %v965
      %v993 = vpack.c.b16 %v968, %v967
      %v994 = vpack.c.b16 %v970, %v969
      %1019 = vmatpush.bf16.msra.mxu0 %v978
      %1020 = vmatpush.bf16.msra.mxu0 %v977
      %1021 = vmatpush.bf16.msra.mxu0 %v976
      %1022 = vmatpush.bf16.msra.mxu0 %v975
      %1023 = vmatpush.bf16.msra.mxu0 %v974
      %1024 = vmatpush.bf16.msra.mxu0 %v973
      %1025 = vmatpush.bf16.msra.mxu0 %v972
      %1026 = vmatpush.bf16.msra.mxu0 %v971
      %1027 = vmatmul.bf16.gmra.mxu0 %v605
      %v1028 = vpop.f32.mrf.mxu0
      %v1029 = vadd.f32 0.0, %v1028
      %v1030 = vpop.f32.mrf.mxu0
      %v1031 = vadd.f32 0.0, %v1030
      %1032 = vmatmul.bf16.gmra.mxu0 %v606
      %v1033 = vpop.f32.mrf.mxu0
      %v1034 = vadd.f32 0.0, %v1033
      %v1035 = vpop.f32.mrf.mxu0
      %v1036 = vadd.f32 0.0, %v1035
      %1037 = vmatmul.bf16.gmra.mxu0 %v607
      %v1038 = vpop.f32.mrf.mxu0
      %v1039 = vadd.f32 0.0, %v1038
      %v1040 = vpop.f32.mrf.mxu0
      %v1041 = vadd.f32 0.0, %v1040
      %1042 = vmatmul.bf16.gmra.mxu0 %v608
      %v1043 = vpop.f32.mrf.mxu0
      %v1044 = vadd.f32 0.0, %v1043
      %v1045 = vpop.f32.mrf.mxu0
      %v1046 = vadd.f32 0.0, %v1045
      %1047 = vmatmul.bf16.gmra.mxu0 %v609
      %v1048 = vpop.f32.mrf.mxu0
      %v1049 = vadd.f32 0.0, %v1048
      %v1050 = vpop.f32.mrf.mxu0
      %v1051 = vadd.f32 0.0, %v1050
      %1052 = vmatmul.bf16.gmra.mxu0 %v610
      %v1053 = vpop.f32.mrf.mxu0
      %v1054 = vadd.f32 0.0, %v1053
      %v1055 = vpop.f32.mrf.mxu0
      %v1056 = vadd.f32 0.0, %v1055
      %1057 = vmatmul.bf16.gmra.mxu0 %v611
      %v1058 = vpop.f32.mrf.mxu0
      %v1059 = vadd.f32 0.0, %v1058
      %v1060 = vpop.f32.mrf.mxu0
      %v1061 = vadd.f32 0.0, %v1060
      %1062 = vmatmul.bf16.gmra.mxu0 %v612
      %v1063 = vpop.f32.mrf.mxu0
      %v1064 = vadd.f32 0.0, %v1063
      %v1065 = vpop.f32.mrf.mxu0
      %v1066 = vadd.f32 0.0, %v1065
      %1067 = vdwg.mxu0
      %1068 = vmatpush.bf16.msra.mxu0 %v986
      %1069 = vmatpush.bf16.msra.mxu0 %v985
      %1070 = vmatpush.bf16.msra.mxu0 %v984
      %1071 = vmatpush.bf16.msra.mxu0 %v983
      %1072 = vmatpush.bf16.msra.mxu0 %v982
      %1073 = vmatpush.bf16.msra.mxu0 %v981
      %1074 = vmatpush.bf16.msra.mxu0 %v980
      %1075 = vmatpush.bf16.msra.mxu0 %v979
      %1076 = vmatmul.bf16.gmra.mxu0 %v667
      %v1077 = vpop.f32.mrf.mxu0
      %v1078 = vadd.f32 %v1029, %v1077
      %v1079 = vpop.f32.mrf.mxu0
      %v1080 = vadd.f32 %v1031, %v1079
      %1081 = vmatmul.bf16.gmra.mxu0 %v679
      %v1082 = vpop.f32.mrf.mxu0
      %v1083 = vadd.f32 %v1034, %v1082
      %v1084 = vpop.f32.mrf.mxu0
      %v1085 = vadd.f32 %v1036, %v1084
      %1086 = vmatmul.bf16.gmra.mxu0 %v691
      %v1087 = vpop.f32.mrf.mxu0
      %v1088 = vadd.f32 %v1039, %v1087
      %v1089 = vpop.f32.mrf.mxu0
      %v1090 = vadd.f32 %v1041, %v1089
      %1091 = vmatmul.bf16.gmra.mxu0 %v703
      %v1092 = vpop.f32.mrf.mxu0
      %v1093 = vadd.f32 %v1044, %v1092
      %v1094 = vpop.f32.mrf.mxu0
      %v1095 = vadd.f32 %v1046, %v1094
      %1096 = vmatmul.bf16.gmra.mxu0 %v715
      %v1097 = vpop.f32.mrf.mxu0
      %v1098 = vadd.f32 %v1049, %v1097
      %v1099 = vpop.f32.mrf.mxu0
      %v1100 = vadd.f32 %v1051, %v1099
      %1101 = vmatmul.bf16.gmra.mxu0 %v727
      %v1102 = vpop.f32.mrf.mxu0
      %v1103 = vadd.f32 %v1054, %v1102
      %v1104 = vpop.f32.mrf.mxu0
      %v1105 = vadd.f32 %v1056, %v1104
      %1106 = vmatmul.bf16.gmra.mxu0 %v739
      %v1107 = vpop.f32.mrf.mxu0
      %v1108 = vadd.f32 %v1059, %v1107
      %v1109 = vpop.f32.mrf.mxu0
      %v1110 = vadd.f32 %v1061, %v1109
      %1111 = vmatmul.bf16.gmra.mxu0 %v751
      %v1112 = vpop.f32.mrf.mxu0
      %v1113 = vadd.f32 %v1064, %v1112
      %v1114 = vpop.f32.mrf.mxu0
      %v1115 = vadd.f32 %v1066, %v1114
      %1116 = vdwg.mxu0
      %1117 = vmatpush.bf16.msra.mxu0 %v994
      %1118 = vmatpush.bf16.msra.mxu0 %v993
      %1119 = vmatpush.bf16.msra.mxu0 %v992
      %1120 = vmatpush.bf16.msra.mxu0 %v991
      %1121 = vmatpush.bf16.msra.mxu0 %v990
      %1122 = vmatpush.bf16.msra.mxu0 %v989
      %1123 = vmatpush.bf16.msra.mxu0 %v988
      %1124 = vmatpush.bf16.msra.mxu0 %v987
      %1125 = vmatmul.bf16.gmra.mxu0 %v789
      %v1126 = vpop.f32.mrf.mxu0
      %v1127 = vadd.f32 %v1078, %v1126
      %v1128 = vpop.f32.mrf.mxu0
      %v1129 = vadd.f32 %v1080, %v1128
      %1130 = vmatmul.bf16.gmra.mxu0 %v792
      %v1131 = vpop.f32.mrf.mxu0
      %v1132 = vadd.f32 %v1083, %v1131
      %v1133 = vpop.f32.mrf.mxu0
      %v1134 = vadd.f32 %v1085, %v1133
      %1135 = vmatmul.bf16.gmra.mxu0 %v795
      %v1136 = vpop.f32.mrf.mxu0
      %v1137 = vadd.f32 %v1088, %v1136
      %v1138 = vpop.f32.mrf.mxu0
      %v1139 = vadd.f32 %v1090, %v1138
      %1140 = vmatmul.bf16.gmra.mxu0 %v798
      %v1141 = vpop.f32.mrf.mxu0
      %v1142 = vadd.f32 %v1093, %v1141
      %v1143 = vpop.f32.mrf.mxu0
      %v1144 = vadd.f32 %v1095, %v1143
      %1145 = vmatmul.bf16.gmra.mxu0 %v801
      %v1146 = vpop.f32.mrf.mxu0
      %v1147 = vadd.f32 %v1098, %v1146
      %v1148 = vpop.f32.mrf.mxu0
      %v1149 = vadd.f32 %v1100, %v1148
      %1150 = vmatmul.bf16.gmra.mxu0 %v804
      %v1151 = vpop.f32.mrf.mxu0
      %v1152 = vadd.f32 %v1103, %v1151
      %v1153 = vpop.f32.mrf.mxu0
      %v1154 = vadd.f32 %v1105, %v1153
      %1155 = vmatmul.bf16.gmra.mxu0 %v807
      %v1156 = vpop.f32.mrf.mxu0
      %v1157 = vadd.f32 %v1108, %v1156
      %v1158 = vpop.f32.mrf.mxu0
      %v1159 = vadd.f32 %v1110, %v1158
      %1160 = vmatmul.bf16.gmra.mxu0 %v810
      %v1161 = vpop.f32.mrf.mxu0
      %v1162 = vadd.f32 %v1113, %v1161
      %v1163 = vpop.f32.mrf.mxu0
      %v1164 = vadd.f32 %v1115, %v1163
      %1165 = vdwg.mxu0
      %1166 = vst [vmem:[#allocation2] sm:$0xff] %v1127
      %1167 = vst [vmem:[#allocation2 + $0x8] sm:$0xff] %v1129
      %1168 = vst [vmem:[#allocation2 + $0x10] sm:$0xff] %v1132
      %1169 = vst [vmem:[#allocation2 + $0x18] sm:$0xff] %v1134
      %1170 = vst [vmem:[#allocation2 + $0x20] sm:$0xff] %v1137
      %1171 = vst [vmem:[#allocation2 + $0x28] sm:$0xff] %v1139
      %1172 = vst [vmem:[#allocation2 + $0x30] sm:$0xff] %v1142
      %1173 = vst [vmem:[#allocation2 + $0x38] sm:$0xff] %v1144
      %1174 = vst [vmem:[#allocation2 + $0x40] sm:$0xff] %v1147
      %1175 = vst [vmem:[#allocation2 + $0x48] sm:$0xff] %v1149
      %1176 = vst [vmem:[#allocation2 + $0x50] sm:$0xff] %v1152
      %1177 = vst [vmem:[#allocation2 + $0x58] sm:$0xff] %v1154
      %1178 = vst [vmem:[#allocation2 + $0x60] sm:$0xff] %v1157
      %1179 = vst [vmem:[#allocation2 + $0x68] sm:$0xff] %v1159
      %1180 = vst [vmem:[#allocation2 + $0x70] sm:$0xff] %v1162
      %1181 = vst [vmem:[#allocation2 + $0x78] sm:$0xff] %v1164
      %s1182 = scalar_lea.vmem %s1, 192
      %v1183 = vld [vmem:[%s1182] sm:$0xf]
      %v1184 = vld [vmem:[%s1182 + $0x4] sm:$0xf]
      %v1185 = vld [vmem:[%s1182 + $0x8] sm:$0xf]
      %v1186 = vld [vmem:[%s1182 + $0xc] sm:$0xf]
      %v1187 = vld [vmem:[%s1182 + $0x10] sm:$0xf]
      %v1188 = vld [vmem:[%s1182 + $0x14] sm:$0xf]
      %v1189 = vld [vmem:[%s1182 + $0x18] sm:$0xf]
      %v1190 = vld [vmem:[%s1182 + $0x1c] sm:$0xf]
      %v1191 = vld [vmem:[%s1182 + $0x20] sm:$0xf]
      %v1192 = vld [vmem:[%s1182 + $0x24] sm:$0xf]
      %v1193 = vld [vmem:[%s1182 + $0x28] sm:$0xf]
      %v1194 = vld [vmem:[%s1182 + $0x2c] sm:$0xf]
      %v1195 = vld [vmem:[%s1182 + $0x30] sm:$0xf]
      %v1196 = vld [vmem:[%s1182 + $0x34] sm:$0xf]
      %v1197 = vld [vmem:[%s1182 + $0x38] sm:$0xf]
      %v1198 = vld [vmem:[%s1182 + $0x3c] sm:$0xf]
      %v1199 = vld [vmem:[%s1182 + $0x40] sm:$0xf]
      %v1200 = vld [vmem:[%s1182 + $0x44] sm:$0xf]
      %v1201 = vld [vmem:[%s1182 + $0x48] sm:$0xf]
      %v1202 = vld [vmem:[%s1182 + $0x4c] sm:$0xf]
      %v1203 = vld [vmem:[%s1182 + $0x50] sm:$0xf]
      %v1204 = vld [vmem:[%s1182 + $0x54] sm:$0xf]
      %v1205 = vld [vmem:[%s1182 + $0x58] sm:$0xf]
      %v1206 = vld [vmem:[%s1182 + $0x5c] sm:$0xf]
      %v1207 = vld [vmem:[%s1182 + $0x60] sm:$0xf]
      %v1208 = vld [vmem:[%s1182 + $0x64] sm:$0xf]
      %v1209 = vld [vmem:[%s1182 + $0x68] sm:$0xf]
      %v1210 = vld [vmem:[%s1182 + $0x6c] sm:$0xf]
      %v1211 = vld [vmem:[%s1182 + $0x70] sm:$0xf]
      %v1212 = vld [vmem:[%s1182 + $0x74] sm:$0xf]
      %v1213 = vld [vmem:[%s1182 + $0x78] sm:$0xf]
      %v1214 = vld [vmem:[%s1182 + $0x7c] sm:$0xf]
      %v1215 = vld [vmem:[%s1182 + $0x80] sm:$0xf]
      %v1216 = vld [vmem:[%s1182 + $0x84] sm:$0xf]
      %v1217 = vld [vmem:[%s1182 + $0x88] sm:$0xf]
      %v1218 = vld [vmem:[%s1182 + $0x8c] sm:$0xf]
      %v1219 = vld [vmem:[%s1182 + $0x90] sm:$0xf]
      %v1220 = vld [vmem:[%s1182 + $0x94] sm:$0xf]
      %v1221 = vld [vmem:[%s1182 + $0x98] sm:$0xf]
      %v1222 = vld [vmem:[%s1182 + $0x9c] sm:$0xf]
      %v1223 = vld [vmem:[%s1182 + $0xa0] sm:$0xf]
      %v1224 = vld [vmem:[%s1182 + $0xa4] sm:$0xf]
      %v1225 = vld [vmem:[%s1182 + $0xa8] sm:$0xf]
      %v1226 = vld [vmem:[%s1182 + $0xac] sm:$0xf]
      %v1227 = vld [vmem:[%s1182 + $0xb0] sm:$0xf]
      %v1228 = vld [vmem:[%s1182 + $0xb4] sm:$0xf]
      %v1229 = vld [vmem:[%s1182 + $0xb8] sm:$0xf]
      %v1230 = vld [vmem:[%s1182 + $0xbc] sm:$0xf]
      %v1279 = vunpack.c.l.b16 %v1183
      %v1280 = vunpack.c.l.b16 %v1184
      %v1281 = vunpack.c.l.b16 %v1185
      %v1282 = vunpack.c.l.b16 %v1186
      %v1283 = vunpack.c.l.b16 %v1187
      %v1284 = vunpack.c.l.b16 %v1188
      %v1285 = vunpack.c.l.b16 %v1189
      %v1286 = vunpack.c.l.b16 %v1190
      %v1287 = vunpack.c.l.b16 %v1191
      %v1288 = vunpack.c.l.b16 %v1192
      %v1289 = vunpack.c.l.b16 %v1193
      %v1290 = vunpack.c.l.b16 %v1194
      %v1291 = vunpack.c.l.b16 %v1195
      %v1292 = vunpack.c.l.b16 %v1196
      %v1293 = vunpack.c.l.b16 %v1197
      %v1294 = vunpack.c.l.b16 %v1198
      %v1295 = vunpack.c.l.b16 %v1199
      %v1296 = vunpack.c.l.b16 %v1200
      %v1297 = vunpack.c.l.b16 %v1201
      %v1298 = vunpack.c.l.b16 %v1202
      %v1299 = vunpack.c.l.b16 %v1203
      %v1300 = vunpack.c.l.b16 %v1204
      %v1301 = vunpack.c.l.b16 %v1205
      %v1302 = vunpack.c.l.b16 %v1206
      %v1303 = vunpack.c.l.b16 %v1207
      %v1304 = vunpack.c.l.b16 %v1208
      %v1305 = vunpack.c.l.b16 %v1209
      %v1306 = vunpack.c.l.b16 %v1210
      %v1307 = vunpack.c.l.b16 %v1211
      %v1308 = vunpack.c.l.b16 %v1212
      %v1309 = vunpack.c.l.b16 %v1213
      %v1310 = vunpack.c.l.b16 %v1214
      %v1311 = vunpack.c.l.b16 %v1215
      %v1312 = vunpack.c.l.b16 %v1216
      %v1313 = vunpack.c.l.b16 %v1217
      %v1314 = vunpack.c.l.b16 %v1218
      %v1315 = vunpack.c.l.b16 %v1219
      %v1316 = vunpack.c.l.b16 %v1220
      %v1317 = vunpack.c.l.b16 %v1221
      %v1318 = vunpack.c.l.b16 %v1222
      %v1319 = vunpack.c.l.b16 %v1223
      %v1320 = vunpack.c.l.b16 %v1224
      %v1321 = vunpack.c.l.b16 %v1225
      %v1322 = vunpack.c.l.b16 %v1226
      %v1323 = vunpack.c.l.b16 %v1227
      %v1324 = vunpack.c.l.b16 %v1228
      %v1325 = vunpack.c.l.b16 %v1229
      %v1326 = vunpack.c.l.b16 %v1230
      %v1327 = vpack.c.b16 %v1280, %v1279
      %v1328 = vpack.c.b16 %v1282, %v1281
      %v1329 = vpack.c.b16 %v1284, %v1283
      %v1330 = vpack.c.b16 %v1286, %v1285
      %v1331 = vpack.c.b16 %v1288, %v1287
      %v1332 = vpack.c.b16 %v1290, %v1289
      %v1333 = vpack.c.b16 %v1292, %v1291
      %v1334 = vpack.c.b16 %v1294, %v1293
      %v1335 = vpack.c.b16 %v1296, %v1295
      %v1336 = vpack.c.b16 %v1298, %v1297
      %v1337 = vpack.c.b16 %v1300, %v1299
      %v1338 = vpack.c.b16 %v1302, %v1301
      %v1339 = vpack.c.b16 %v1304, %v1303
      %v1340 = vpack.c.b16 %v1306, %v1305
      %v1341 = vpack.c.b16 %v1308, %v1307
      %v1342 = vpack.c.b16 %v1310, %v1309
      %v1343 = vpack.c.b16 %v1312, %v1311
      %v1344 = vpack.c.b16 %v1314, %v1313
      %v1345 = vpack.c.b16 %v1316, %v1315
      %v1346 = vpack.c.b16 %v1318, %v1317
      %v1347 = vpack.c.b16 %v1320, %v1319
      %v1348 = vpack.c.b16 %v1322, %v1321
      %v1349 = vpack.c.b16 %v1324, %v1323
      %v1350 = vpack.c.b16 %v1326, %v1325
      %1375 = vmatpush.bf16.msra.mxu0 %v1334
      %1376 = vmatpush.bf16.msra.mxu0 %v1333
      %1377 = vmatpush.bf16.msra.mxu0 %v1332
      %1378 = vmatpush.bf16.msra.mxu0 %v1331
      %1379 = vmatpush.bf16.msra.mxu0 %v1330
      %1380 = vmatpush.bf16.msra.mxu0 %v1329
      %1381 = vmatpush.bf16.msra.mxu0 %v1328
      %1382 = vmatpush.bf16.msra.mxu0 %v1327
      %1383 = vmatmul.bf16.gmra.mxu0 %v606
      %v1384 = vpop.f32.mrf.mxu0
      %v1385 = vadd.f32 0.0, %v1384
      %v1386 = vpop.f32.mrf.mxu0
      %v1387 = vadd.f32 0.0, %v1386
      %1388 = vmatmul.bf16.gmra.mxu0 %v607
      %v1389 = vpop.f32.mrf.mxu0
      %v1390 = vadd.f32 0.0, %v1389
      %v1391 = vpop.f32.mrf.mxu0
      %v1392 = vadd.f32 0.0, %v1391
      %1393 = vmatmul.bf16.gmra.mxu0 %v608
      %v1394 = vpop.f32.mrf.mxu0
      %v1395 = vadd.f32 0.0, %v1394
      %v1396 = vpop.f32.mrf.mxu0
      %v1397 = vadd.f32 0.0, %v1396
      %1398 = vmatmul.bf16.gmra.mxu0 %v609
      %v1399 = vpop.f32.mrf.mxu0
      %v1400 = vadd.f32 0.0, %v1399
      %v1401 = vpop.f32.mrf.mxu0
      %v1402 = vadd.f32 0.0, %v1401
      %1403 = vmatmul.bf16.gmra.mxu0 %v610
      %v1404 = vpop.f32.mrf.mxu0
      %v1405 = vadd.f32 0.0, %v1404
      %v1406 = vpop.f32.mrf.mxu0
      %v1407 = vadd.f32 0.0, %v1406
      %1408 = vmatmul.bf16.gmra.mxu0 %v611
      %v1409 = vpop.f32.mrf.mxu0
      %v1410 = vadd.f32 0.0, %v1409
      %v1411 = vpop.f32.mrf.mxu0
      %v1412 = vadd.f32 0.0, %v1411
      %1413 = vmatmul.bf16.gmra.mxu0 %v612
      %v1414 = vpop.f32.mrf.mxu0
      %v1415 = vadd.f32 0.0, %v1414
      %v1416 = vpop.f32.mrf.mxu0
      %v1417 = vadd.f32 0.0, %v1416
      %1418 = vmatmul.bf16.gmra.mxu0 %v613
      %v1419 = vpop.f32.mrf.mxu0
      %v1420 = vadd.f32 0.0, %v1419
      %v1421 = vpop.f32.mrf.mxu0
      %v1422 = vadd.f32 0.0, %v1421
      %1423 = vdwg.mxu0
      %1424 = vmatpush.bf16.msra.mxu0 %v1342
      %1425 = vmatpush.bf16.msra.mxu0 %v1341
      %1426 = vmatpush.bf16.msra.mxu0 %v1340
      %1427 = vmatpush.bf16.msra.mxu0 %v1339
      %1428 = vmatpush.bf16.msra.mxu0 %v1338
      %1429 = vmatpush.bf16.msra.mxu0 %v1337
      %1430 = vmatpush.bf16.msra.mxu0 %v1336
      %1431 = vmatpush.bf16.msra.mxu0 %v1335
      %1432 = vmatmul.bf16.gmra.mxu0 %v679
      %v1433 = vpop.f32.mrf.mxu0
      %v1434 = vadd.f32 %v1385, %v1433
      %v1435 = vpop.f32.mrf.mxu0
      %v1436 = vadd.f32 %v1387, %v1435
      %1437 = vmatmul.bf16.gmra.mxu0 %v691
      %v1438 = vpop.f32.mrf.mxu0
      %v1439 = vadd.f32 %v1390, %v1438
      %v1440 = vpop.f32.mrf.mxu0
      %v1441 = vadd.f32 %v1392, %v1440
      %1442 = vmatmul.bf16.gmra.mxu0 %v703
      %v1443 = vpop.f32.mrf.mxu0
      %v1444 = vadd.f32 %v1395, %v1443
      %v1445 = vpop.f32.mrf.mxu0
      %v1446 = vadd.f32 %v1397, %v1445
      %1447 = vmatmul.bf16.gmra.mxu0 %v715
      %v1448 = vpop.f32.mrf.mxu0
      %v1449 = vadd.f32 %v1400, %v1448
      %v1450 = vpop.f32.mrf.mxu0
      %v1451 = vadd.f32 %v1402, %v1450
      %1452 = vmatmul.bf16.gmra.mxu0 %v727
      %v1453 = vpop.f32.mrf.mxu0
      %v1454 = vadd.f32 %v1405, %v1453
      %v1455 = vpop.f32.mrf.mxu0
      %v1456 = vadd.f32 %v1407, %v1455
      %1457 = vmatmul.bf16.gmra.mxu0 %v739
      %v1458 = vpop.f32.mrf.mxu0
      %v1459 = vadd.f32 %v1410, %v1458
      %v1460 = vpop.f32.mrf.mxu0
      %v1461 = vadd.f32 %v1412, %v1460
      %1462 = vmatmul.bf16.gmra.mxu0 %v751
      %v1463 = vpop.f32.mrf.mxu0
      %v1464 = vadd.f32 %v1415, %v1463
      %v1465 = vpop.f32.mrf.mxu0
      %v1466 = vadd.f32 %v1417, %v1465
      %1467 = vmatmul.bf16.gmra.mxu0 %v763
      %v1468 = vpop.f32.mrf.mxu0
      %v1469 = vadd.f32 %v1420, %v1468
      %v1470 = vpop.f32.mrf.mxu0
      %v1471 = vadd.f32 %v1422, %v1470
      %1472 = vdwg.mxu0
      %1473 = vmatpush.bf16.msra.mxu0 %v1350
      %1474 = vmatpush.bf16.msra.mxu0 %v1349
      %1475 = vmatpush.bf16.msra.mxu0 %v1348
      %1476 = vmatpush.bf16.msra.mxu0 %v1347
      %1477 = vmatpush.bf16.msra.mxu0 %v1346
      %1478 = vmatpush.bf16.msra.mxu0 %v1345
      %1479 = vmatpush.bf16.msra.mxu0 %v1344
      %1480 = vmatpush.bf16.msra.mxu0 %v1343
      %1481 = vmatmul.bf16.gmra.mxu0 %v792
      %v1482 = vpop.f32.mrf.mxu0
      %v1483 = vadd.f32 %v1434, %v1482
      %v1484 = vpop.f32.mrf.mxu0
      %v1485 = vadd.f32 %v1436, %v1484
      %1486 = vmatmul.bf16.gmra.mxu0 %v795
      %v1487 = vpop.f32.mrf.mxu0
      %v1488 = vadd.f32 %v1439, %v1487
      %v1489 = vpop.f32.mrf.mxu0
      %v1490 = vadd.f32 %v1441, %v1489
      %1491 = vmatmul.bf16.gmra.mxu0 %v798
      %v1492 = vpop.f32.mrf.mxu0
      %v1493 = vadd.f32 %v1444, %v1492
      %v1494 = vpop.f32.mrf.mxu0
      %v1495 = vadd.f32 %v1446, %v1494
      %1496 = vmatmul.bf16.gmra.mxu0 %v801
      %v1497 = vpop.f32.mrf.mxu0
      %v1498 = vadd.f32 %v1449, %v1497
      %v1499 = vpop.f32.mrf.mxu0
      %v1500 = vadd.f32 %v1451, %v1499
      %1501 = vmatmul.bf16.gmra.mxu0 %v804
      %v1502 = vpop.f32.mrf.mxu0
      %v1503 = vadd.f32 %v1454, %v1502
      %v1504 = vpop.f32.mrf.mxu0
      %v1505 = vadd.f32 %v1456, %v1504
      %1506 = vmatmul.bf16.gmra.mxu0 %v807
      %v1507 = vpop.f32.mrf.mxu0
      %v1508 = vadd.f32 %v1459, %v1507
      %v1509 = vpop.f32.mrf.mxu0
      %v1510 = vadd.f32 %v1461, %v1509
      %1511 = vmatmul.bf16.gmra.mxu0 %v810
      %v1512 = vpop.f32.mrf.mxu0
      %v1513 = vadd.f32 %v1464, %v1512
      %v1514 = vpop.f32.mrf.mxu0
      %v1515 = vadd.f32 %v1466, %v1514
      %1516 = vmatmul.bf16.gmra.mxu0 %v813
      %v1517 = vpop.f32.mrf.mxu0
      %v1518 = vadd.f32 %v1469, %v1517
      %v1519 = vpop.f32.mrf.mxu0
      %v1520 = vadd.f32 %v1471, %v1519
      %1521 = vdwg.mxu0
      %v1522 = vld [vmem:[#allocation2] sm:$0xff]
      %v1523 = vld [vmem:[#allocation2 + $0x8] sm:$0xff]
      %v1524 = vld [vmem:[#allocation2 + $0x10] sm:$0xff]
      %v1525 = vld [vmem:[#allocation2 + $0x18] sm:$0xff]
      %v1526 = vld [vmem:[#allocation2 + $0x20] sm:$0xff]
      %v1527 = vld [vmem:[#allocation2 + $0x28] sm:$0xff]
      %v1528 = vld [vmem:[#allocation2 + $0x30] sm:$0xff]
      %v1529 = vld [vmem:[#allocation2 + $0x38] sm:$0xff]
      %v1530 = vld [vmem:[#allocation2 + $0x40] sm:$0xff]
      %v1531 = vld [vmem:[#allocation2 + $0x48] sm:$0xff]
      %v1532 = vld [vmem:[#allocation2 + $0x50] sm:$0xff]
      %v1533 = vld [vmem:[#allocation2 + $0x58] sm:$0xff]
      %v1534 = vld [vmem:[#allocation2 + $0x60] sm:$0xff]
      %v1535 = vld [vmem:[#allocation2 + $0x68] sm:$0xff]
      %v1536 = vld [vmem:[#allocation2 + $0x70] sm:$0xff]
      %v1537 = vld [vmem:[#allocation2 + $0x78] sm:$0xff]
      %v1538 = vadd.f32 %v1522, %v1483
      %v1539 = vadd.f32 %v1523, %v1485
      %v1540 = vadd.f32 %v1524, %v1488
      %v1541 = vadd.f32 %v1525, %v1490
      %v1542 = vadd.f32 %v1526, %v1493
      %v1543 = vadd.f32 %v1527, %v1495
      %v1544 = vadd.f32 %v1528, %v1498
      %v1545 = vadd.f32 %v1529, %v1500
      %v1546 = vadd.f32 %v1530, %v1503
      %v1547 = vadd.f32 %v1531, %v1505
      %v1548 = vadd.f32 %v1532, %v1508
      %v1549 = vadd.f32 %v1533, %v1510
      %v1550 = vadd.f32 %v1534, %v1513
      %v1551 = vadd.f32 %v1535, %v1515
      %v1552 = vadd.f32 %v1536, %v1518
      %v1553 = vadd.f32 %v1537, %v1520
      %1554 = vst [vmem:[#allocation2] sm:$0xff] %v1538
      %1555 = vst [vmem:[#allocation2 + $0x8] sm:$0xff] %v1539
      %1556 = vst [vmem:[#allocation2 + $0x10] sm:$0xff] %v1540
      %1557 = vst [vmem:[#allocation2 + $0x18] sm:$0xff] %v1541
      %1558 = vst [vmem:[#allocation2 + $0x20] sm:$0xff] %v1542
      %1559 = vst [vmem:[#allocation2 + $0x28] sm:$0xff] %v1543
      %1560 = vst [vmem:[#allocation2 + $0x30] sm:$0xff] %v1544
      %1561 = vst [vmem:[#allocation2 + $0x38] sm:$0xff] %v1545
      %1562 = vst [vmem:[#allocation2 + $0x40] sm:$0xff] %v1546
      %1563 = vst [vmem:[#allocation2 + $0x48] sm:$0xff] %v1547
      %1564 = vst [vmem:[#allocation2 + $0x50] sm:$0xff] %v1548
      %1565 = vst [vmem:[#allocation2 + $0x58] sm:$0xff] %v1549
      %1566 = vst [vmem:[#allocation2 + $0x60] sm:$0xff] %v1550
      %1567 = vst [vmem:[#allocation2 + $0x68] sm:$0xff] %v1551
      %1568 = vst [vmem:[#allocation2 + $0x70] sm:$0xff] %v1552
      %1569 = vst [vmem:[#allocation2 + $0x78] sm:$0xff] %v1553
      %s1570 = scalar_lea.vmem %s1, 384
      %v1571 = vld [vmem:[%s1570] sm:$0xf]
      %v1572 = vld [vmem:[%s1570 + $0x4] sm:$0xf]
      %v1573 = vld [vmem:[%s1570 + $0x8] sm:$0xf]
      %v1574 = vld [vmem:[%s1570 + $0xc] sm:$0xf]
      %v1575 = vld [vmem:[%s1570 + $0x10] sm:$0xf]
      %v1576 = vld [vmem:[%s1570 + $0x14] sm:$0xf]
      %v1577 = vld [vmem:[%s1570 + $0x18] sm:$0xf]
      %v1578 = vld [vmem:[%s1570 + $0x1c] sm:$0xf]
      %v1579 = vld [vmem:[%s1570 + $0x20] sm:$0xf]
      %v1580 = vld [vmem:[%s1570 + $0x24] sm:$0xf]
      %v1581 = vld [vmem:[%s1570 + $0x28] sm:$0xf]
      %v1582 = vld [vmem:[%s1570 + $0x2c] sm:$0xf]
      %v1583 = vld [vmem:[%s1570 + $0x30] sm:$0xf]
      %v1584 = vld [vmem:[%s1570 + $0x34] sm:$0xf]
      %v1585 = vld [vmem:[%s1570 + $0x38] sm:$0xf]
      %v1586 = vld [vmem:[%s1570 + $0x3c] sm:$0xf]
      %v1587 = vld [vmem:[%s1570 + $0x40] sm:$0xf]
      %v1588 = vld [vmem:[%s1570 + $0x44] sm:$0xf]
      %v1589 = vld [vmem:[%s1570 + $0x48] sm:$0xf]
      %v1590 = vld [vmem:[%s1570 + $0x4c] sm:$0xf]
      %v1591 = vld [vmem:[%s1570 + $0x50] sm:$0xf]
      %v1592 = vld [vmem:[%s1570 + $0x54] sm:$0xf]
      %v1593 = vld [vmem:[%s1570 + $0x58] sm:$0xf]
      %v1594 = vld [vmem:[%s1570 + $0x5c] sm:$0xf]
      %v1595 = vld [vmem:[%s1570 + $0x60] sm:$0xf]
      %v1596 = vld [vmem:[%s1570 + $0x64] sm:$0xf]
      %v1597 = vld [vmem:[%s1570 + $0x68] sm:$0xf]
      %v1598 = vld [vmem:[%s1570 + $0x6c] sm:$0xf]
      %v1599 = vld [vmem:[%s1570 + $0x70] sm:$0xf]
      %v1600 = vld [vmem:[%s1570 + $0x74] sm:$0xf]
      %v1601 = vld [vmem:[%s1570 + $0x78] sm:$0xf]
      %v1602 = vld [vmem:[%s1570 + $0x7c] sm:$0xf]
      %v1603 = vld [vmem:[%s1570 + $0x80] sm:$0xf]
      %v1604 = vld [vmem:[%s1570 + $0x84] sm:$0xf]
      %v1605 = vld [vmem:[%s1570 + $0x88] sm:$0xf]
      %v1606 = vld [vmem:[%s1570 + $0x8c] sm:$0xf]
      %v1607 = vld [vmem:[%s1570 + $0x90] sm:$0xf]
      %v1608 = vld [vmem:[%s1570 + $0x94] sm:$0xf]
      %v1609 = vld [vmem:[%s1570 + $0x98] sm:$0xf]
      %v1610 = vld [vmem:[%s1570 + $0x9c] sm:$0xf]
      %v1611 = vld [vmem:[%s1570 + $0xa0] sm:$0xf]
      %v1612 = vld [vmem:[%s1570 + $0xa4] sm:$0xf]
      %v1613 = vld [vmem:[%s1570 + $0xa8] sm:$0xf]
      %v1614 = vld [vmem:[%s1570 + $0xac] sm:$0xf]
      %v1615 = vld [vmem:[%s1570 + $0xb0] sm:$0xf]
      %v1616 = vld [vmem:[%s1570 + $0xb4] sm:$0xf]
      %v1617 = vld [vmem:[%s1570 + $0xb8] sm:$0xf]
      %v1618 = vld [vmem:[%s1570 + $0xbc] sm:$0xf]
      %v1667 = vunpack.c.l.b16 %v1571
      %v1668 = vunpack.c.l.b16 %v1572
      %v1669 = vunpack.c.l.b16 %v1573
      %v1670 = vunpack.c.l.b16 %v1574
      %v1671 = vunpack.c.l.b16 %v1575
      %v1672 = vunpack.c.l.b16 %v1576
      %v1673 = vunpack.c.l.b16 %v1577
      %v1674 = vunpack.c.l.b16 %v1578
      %v1675 = vunpack.c.l.b16 %v1579
      %v1676 = vunpack.c.l.b16 %v1580
      %v1677 = vunpack.c.l.b16 %v1581
      %v1678 = vunpack.c.l.b16 %v1582
      %v1679 = vunpack.c.l.b16 %v1583
      %v1680 = vunpack.c.l.b16 %v1584
      %v1681 = vunpack.c.l.b16 %v1585
      %v1682 = vunpack.c.l.b16 %v1586
      %v1683 = vunpack.c.l.b16 %v1587
      %v1684 = vunpack.c.l.b16 %v1588
      %v1685 = vunpack.c.l.b16 %v1589
      %v1686 = vunpack.c.l.b16 %v1590
      %v1687 = vunpack.c.l.b16 %v1591
      %v1688 = vunpack.c.l.b16 %v1592
      %v1689 = vunpack.c.l.b16 %v1593
      %v1690 = vunpack.c.l.b16 %v1594
      %v1691 = vunpack.c.l.b16 %v1595
      %v1692 = vunpack.c.l.b16 %v1596
      %v1693 = vunpack.c.l.b16 %v1597
      %v1694 = vunpack.c.l.b16 %v1598
      %v1695 = vunpack.c.l.b16 %v1599
      %v1696 = vunpack.c.l.b16 %v1600
      %v1697 = vunpack.c.l.b16 %v1601
      %v1698 = vunpack.c.l.b16 %v1602
      %v1699 = vunpack.c.l.b16 %v1603
      %v1700 = vunpack.c.l.b16 %v1604
      %v1701 = vunpack.c.l.b16 %v1605
      %v1702 = vunpack.c.l.b16 %v1606
      %v1703 = vunpack.c.l.b16 %v1607
      %v1704 = vunpack.c.l.b16 %v1608
      %v1705 = vunpack.c.l.b16 %v1609
      %v1706 = vunpack.c.l.b16 %v1610
      %v1707 = vunpack.c.l.b16 %v1611
      %v1708 = vunpack.c.l.b16 %v1612
      %v1709 = vunpack.c.l.b16 %v1613
      %v1710 = vunpack.c.l.b16 %v1614
      %v1711 = vunpack.c.l.b16 %v1615
      %v1712 = vunpack.c.l.b16 %v1616
      %v1713 = vunpack.c.l.b16 %v1617
      %v1714 = vunpack.c.l.b16 %v1618
      %v1715 = vpack.c.b16 %v1668, %v1667
      %v1716 = vpack.c.b16 %v1670, %v1669
      %v1717 = vpack.c.b16 %v1672, %v1671
      %v1718 = vpack.c.b16 %v1674, %v1673
      %v1719 = vpack.c.b16 %v1676, %v1675
      %v1720 = vpack.c.b16 %v1678, %v1677
      %v1721 = vpack.c.b16 %v1680, %v1679
      %v1722 = vpack.c.b16 %v1682, %v1681
      %v1723 = vpack.c.b16 %v1684, %v1683
      %v1724 = vpack.c.b16 %v1686, %v1685
      %v1725 = vpack.c.b16 %v1688, %v1687
      %v1726 = vpack.c.b16 %v1690, %v1689
      %v1727 = vpack.c.b16 %v1692, %v1691
      %v1728 = vpack.c.b16 %v1694, %v1693
      %v1729 = vpack.c.b16 %v1696, %v1695
      %v1730 = vpack.c.b16 %v1698, %v1697
      %v1731 = vpack.c.b16 %v1700, %v1699
      %v1732 = vpack.c.b16 %v1702, %v1701
      %v1733 = vpack.c.b16 %v1704, %v1703
      %v1734 = vpack.c.b16 %v1706, %v1705
      %v1735 = vpack.c.b16 %v1708, %v1707
      %v1736 = vpack.c.b16 %v1710, %v1709
      %v1737 = vpack.c.b16 %v1712, %v1711
      %v1738 = vpack.c.b16 %v1714, %v1713
      %1763 = vmatpush.bf16.msra.mxu0 %v1722
      %1764 = vmatpush.bf16.msra.mxu0 %v1721
      %1765 = vmatpush.bf16.msra.mxu0 %v1720
      %1766 = vmatpush.bf16.msra.mxu0 %v1719
      %1767 = vmatpush.bf16.msra.mxu0 %v1718
      %1768 = vmatpush.bf16.msra.mxu0 %v1717
      %1769 = vmatpush.bf16.msra.mxu0 %v1716
      %1770 = vmatpush.bf16.msra.mxu0 %v1715
      %1771 = vmatmul.bf16.gmra.mxu0 %v607
      %v1772 = vpop.f32.mrf.mxu0
      %v1773 = vadd.f32 0.0, %v1772
      %v1774 = vpop.f32.mrf.mxu0
      %v1775 = vadd.f32 0.0, %v1774
      %1776 = vmatmul.bf16.gmra.mxu0 %v608
      %v1777 = vpop.f32.mrf.mxu0
      %v1778 = vadd.f32 0.0, %v1777
      %v1779 = vpop.f32.mrf.mxu0
      %v1780 = vadd.f32 0.0, %v1779
      %1781 = vmatmul.bf16.gmra.mxu0 %v609
      %v1782 = vpop.f32.mrf.mxu0
      %v1783 = vadd.f32 0.0, %v1782
      %v1784 = vpop.f32.mrf.mxu0
      %v1785 = vadd.f32 0.0, %v1784
      %1786 = vmatmul.bf16.gmra.mxu0 %v610
      %v1787 = vpop.f32.mrf.mxu0
      %v1788 = vadd.f32 0.0, %v1787
      %v1789 = vpop.f32.mrf.mxu0
      %v1790 = vadd.f32 0.0, %v1789
      %1791 = vmatmul.bf16.gmra.mxu0 %v611
      %v1792 = vpop.f32.mrf.mxu0
      %v1793 = vadd.f32 0.0, %v1792
      %v1794 = vpop.f32.mrf.mxu0
      %v1795 = vadd.f32 0.0, %v1794
      %1796 = vmatmul.bf16.gmra.mxu0 %v612
      %v1797 = vpop.f32.mrf.mxu0
      %v1798 = vadd.f32 0.0, %v1797
      %v1799 = vpop.f32.mrf.mxu0
      %v1800 = vadd.f32 0.0, %v1799
      %1801 = vmatmul.bf16.gmra.mxu0 %v613
      %v1802 = vpop.f32.mrf.mxu0
      %v1803 = vadd.f32 0.0, %v1802
      %v1804 = vpop.f32.mrf.mxu0
      %v1805 = vadd.f32 0.0, %v1804
      %1806 = vmatmul.bf16.gmra.mxu0 %v614
      %v1807 = vpop.f32.mrf.mxu0
      %v1808 = vadd.f32 0.0, %v1807
      %v1809 = vpop.f32.mrf.mxu0
      %v1810 = vadd.f32 0.0, %v1809
      %1811 = vdwg.mxu0
      %1812 = vmatpush.bf16.msra.mxu0 %v1730
      %1813 = vmatpush.bf16.msra.mxu0 %v1729
      %1814 = vmatpush.bf16.msra.mxu0 %v1728
      %1815 = vmatpush.bf16.msra.mxu0 %v1727
      %1816 = vmatpush.bf16.msra.mxu0 %v1726
      %1817 = vmatpush.bf16.msra.mxu0 %v1725
      %1818 = vmatpush.bf16.msra.mxu0 %v1724
      %1819 = vmatpush.bf16.msra.mxu0 %v1723
      %1820 = vmatmul.bf16.gmra.mxu0 %v691
      %v1821 = vpop.f32.mrf.mxu0
      %v1822 = vadd.f32 %v1773, %v1821
      %v1823 = vpop.f32.mrf.mxu0
      %v1824 = vadd.f32 %v1775, %v1823
      %1825 = vmatmul.bf16.gmra.mxu0 %v703
      %v1826 = vpop.f32.mrf.mxu0
      %v1827 = vadd.f32 %v1778, %v1826
      %v1828 = vpop.f32.mrf.mxu0
      %v1829 = vadd.f32 %v1780, %v1828
      %1830 = vmatmul.bf16.gmra.mxu0 %v715
      %v1831 = vpop.f32.mrf.mxu0
      %v1832 = vadd.f32 %v1783, %v1831
      %v1833 = vpop.f32.mrf.mxu0
      %v1834 = vadd.f32 %v1785, %v1833
      %1835 = vmatmul.bf16.gmra.mxu0 %v727
      %v1836 = vpop.f32.mrf.mxu0
      %v1837 = vadd.f32 %v1788, %v1836
      %v1838 = vpop.f32.mrf.mxu0
      %v1839 = vadd.f32 %v1790, %v1838
      %1840 = vmatmul.bf16.gmra.mxu0 %v739
      %v1841 = vpop.f32.mrf.mxu0
      %v1842 = vadd.f32 %v1793, %v1841
      %v1843 = vpop.f32.mrf.mxu0
      %v1844 = vadd.f32 %v1795, %v1843
      %1845 = vmatmul.bf16.gmra.mxu0 %v751
      %v1846 = vpop.f32.mrf.mxu0
      %v1847 = vadd.f32 %v1798, %v1846
      %v1848 = vpop.f32.mrf.mxu0
      %v1849 = vadd.f32 %v1800, %v1848
      %1850 = vmatmul.bf16.gmra.mxu0 %v763
      %v1851 = vpop.f32.mrf.mxu0
      %v1852 = vadd.f32 %v1803, %v1851
      %v1853 = vpop.f32.mrf.mxu0
      %v1854 = vadd.f32 %v1805, %v1853
      %1855 = vmatmul.bf16.gmra.mxu0 %v775
      %v1856 = vpop.f32.mrf.mxu0
      %v1857 = vadd.f32 %v1808, %v1856
      %v1858 = vpop.f32.mrf.mxu0
      %v1859 = vadd.f32 %v1810, %v1858
      %1860 = vdwg.mxu0
      %1861 = vmatpush.bf16.msra.mxu0 %v1738
      %1862 = vmatpush.bf16.msra.mxu0 %v1737
      %1863 = vmatpush.bf16.msra.mxu0 %v1736
      %1864 = vmatpush.bf16.msra.mxu0 %v1735
      %1865 = vmatpush.bf16.msra.mxu0 %v1734
      %1866 = vmatpush.bf16.msra.mxu0 %v1733
      %1867 = vmatpush.bf16.msra.mxu0 %v1732
      %1868 = vmatpush.bf16.msra.mxu0 %v1731
      %1869 = vmatmul.bf16.gmra.mxu0 %v795
      %v1870 = vpop.f32.mrf.mxu0
      %v1871 = vadd.f32 %v1822, %v1870
      %v1872 = vpop.f32.mrf.mxu0
      %v1873 = vadd.f32 %v1824, %v1872
      %1874 = vmatmul.bf16.gmra.mxu0 %v798
      %v1875 = vpop.f32.mrf.mxu0
      %v1876 = vadd.f32 %v1827, %v1875
      %v1877 = vpop.f32.mrf.mxu0
      %v1878 = vadd.f32 %v1829, %v1877
      %1879 = vmatmul.bf16.gmra.mxu0 %v801
      %v1880 = vpop.f32.mrf.mxu0
      %v1881 = vadd.f32 %v1832, %v1880
      %v1882 = vpop.f32.mrf.mxu0
      %v1883 = vadd.f32 %v1834, %v1882
      %1884 = vmatmul.bf16.gmra.mxu0 %v804
      %v1885 = vpop.f32.mrf.mxu0
      %v1886 = vadd.f32 %v1837, %v1885
      %v1887 = vpop.f32.mrf.mxu0
      %v1888 = vadd.f32 %v1839, %v1887
      %1889 = vmatmul.bf16.gmra.mxu0 %v807
      %v1890 = vpop.f32.mrf.mxu0
      %v1891 = vadd.f32 %v1842, %v1890
      %v1892 = vpop.f32.mrf.mxu0
      %v1893 = vadd.f32 %v1844, %v1892
      %1894 = vmatmul.bf16.gmra.mxu0 %v810
      %v1895 = vpop.f32.mrf.mxu0
      %v1896 = vadd.f32 %v1847, %v1895
      %v1897 = vpop.f32.mrf.mxu0
      %v1898 = vadd.f32 %v1849, %v1897
      %1899 = vmatmul.bf16.gmra.mxu0 %v813
      %v1900 = vpop.f32.mrf.mxu0
      %v1901 = vadd.f32 %v1852, %v1900
      %v1902 = vpop.f32.mrf.mxu0
      %v1903 = vadd.f32 %v1854, %v1902
      %1904 = vmatmul.bf16.gmra.mxu0 %v816
      %v1905 = vpop.f32.mrf.mxu0
      %v1906 = vadd.f32 %v1857, %v1905
      %v1907 = vpop.f32.mrf.mxu0
      %v1908 = vadd.f32 %v1859, %v1907
      %1909 = vdwg.mxu0
      %v1910 = vld [vmem:[#allocation2] sm:$0xff]
      %v1911 = vld [vmem:[#allocation2 + $0x8] sm:$0xff]
      %v1912 = vld [vmem:[#allocation2 + $0x10] sm:$0xff]
      %v1913 = vld [vmem:[#allocation2 + $0x18] sm:$0xff]
      %v1914 = vld [vmem:[#allocation2 + $0x20] sm:$0xff]
      %v1915 = vld [vmem:[#allocation2 + $0x28] sm:$0xff]
      %v1916 = vld [vmem:[#allocation2 + $0x30] sm:$0xff]
      %v1917 = vld [vmem:[#allocation2 + $0x38] sm:$0xff]
      %v1918 = vld [vmem:[#allocation2 + $0x40] sm:$0xff]
      %v1919 = vld [vmem:[#allocation2 + $0x48] sm:$0xff]
      %v1920 = vld [vmem:[#allocation2 + $0x50] sm:$0xff]
      %v1921 = vld [vmem:[#allocation2 + $0x58] sm:$0xff]
      %v1922 = vld [vmem:[#allocation2 + $0x60] sm:$0xff]
      %v1923 = vld [vmem:[#allocation2 + $0x68] sm:$0xff]
      %v1924 = vld [vmem:[#allocation2 + $0x70] sm:$0xff]
      %v1925 = vld [vmem:[#allocation2 + $0x78] sm:$0xff]
      %v1926 = vadd.f32 %v1910, %v1871
      %v1927 = vadd.f32 %v1911, %v1873
      %v1928 = vadd.f32 %v1912, %v1876
      %v1929 = vadd.f32 %v1913, %v1878
      %v1930 = vadd.f32 %v1914, %v1881
      %v1931 = vadd.f32 %v1915, %v1883
      %v1932 = vadd.f32 %v1916, %v1886
      %v1933 = vadd.f32 %v1917, %v1888
      %v1934 = vadd.f32 %v1918, %v1891
      %v1935 = vadd.f32 %v1919, %v1893
      %v1936 = vadd.f32 %v1920, %v1896
      %v1937 = vadd.f32 %v1921, %v1898
      %v1938 = vadd.f32 %v1922, %v1901
      %v1939 = vadd.f32 %v1923, %v1903
      %v1940 = vadd.f32 %v1924, %v1906
      %v1941 = vadd.f32 %v1925, %v1908
      %1942 = vst [vmem:[#allocation2] sm:$0xff] %v1926
      %1943 = vst [vmem:[#allocation2 + $0x8] sm:$0xff] %v1927
      %1944 = vst [vmem:[#allocation2 + $0x10] sm:$0xff] %v1928
      %1945 = vst [vmem:[#allocation2 + $0x18] sm:$0xff] %v1929
      %1946 = vst [vmem:[#allocation2 + $0x20] sm:$0xff] %v1930
      %1947 = vst [vmem:[#allocation2 + $0x28] sm:$0xff] %v1931
      %1948 = vst [vmem:[#allocation2 + $0x30] sm:$0xff] %v1932
      %1949 = vst [vmem:[#allocation2 + $0x38] sm:$0xff] %v1933
      %1950 = vst [vmem:[#allocation2 + $0x40] sm:$0xff] %v1934
      %1951 = vst [vmem:[#allocation2 + $0x48] sm:$0xff] %v1935
      %1952 = vst [vmem:[#allocation2 + $0x50] sm:$0xff] %v1936
      %1953 = vst [vmem:[#allocation2 + $0x58] sm:$0xff] %v1937
      %1954 = vst [vmem:[#allocation2 + $0x60] sm:$0xff] %v1938
      %1955 = vst [vmem:[#allocation2 + $0x68] sm:$0xff] %v1939
      %1956 = vst [vmem:[#allocation2 + $0x70] sm:$0xff] %v1940
      %1957 = vst [vmem:[#allocation2 + $0x78] sm:$0xff] %v1941
      %v1958 = vld [vmem:[#allocation2] sm:$0xff]
      %v1959 = vld [vmem:[#allocation2 + $0x8] sm:$0xff]
      %v1960 = vld [vmem:[#allocation2 + $0x10] sm:$0xff]
      %v1961 = vld [vmem:[#allocation2 + $0x18] sm:$0xff]
      %v1962 = vld [vmem:[#allocation2 + $0x20] sm:$0xff]
      %v1963 = vld [vmem:[#allocation2 + $0x28] sm:$0xff]
      %v1964 = vld [vmem:[#allocation2 + $0x30] sm:$0xff]
      %v1965 = vld [vmem:[#allocation2 + $0x38] sm:$0xff]
      %v1966 = vld [vmem:[#allocation2 + $0x40] sm:$0xff]
      %v1967 = vld [vmem:[#allocation2 + $0x48] sm:$0xff]
      %v1968 = vld [vmem:[#allocation2 + $0x50] sm:$0xff]
      %v1969 = vld [vmem:[#allocation2 + $0x58] sm:$0xff]
      %v1970 = vld [vmem:[#allocation2 + $0x60] sm:$0xff]
      %v1971 = vld [vmem:[#allocation2 + $0x68] sm:$0xff]
      %v1972 = vld [vmem:[#allocation2 + $0x70] sm:$0xff]
      %v1973 = vld [vmem:[#allocation2 + $0x78] sm:$0xff]
      %v1974 = vld [vmem:[%s2] sm:$0x1]
      %v1976 = vperm.slane %v1974, 0
      %v1978 = vadd.f32 %v1958, %v1976
      %v1979 = vadd.f32 %v1959, %v1976
      %v1980 = vadd.f32 %v1960, %v1976
      %v1981 = vadd.f32 %v1961, %v1976
      %v1982 = vadd.f32 %v1962, %v1976
      %v1983 = vadd.f32 %v1963, %v1976
      %v1984 = vadd.f32 %v1964, %v1976
      %v1985 = vadd.f32 %v1965, %v1976
      %v1986 = vadd.f32 %v1966, %v1976
      %v1987 = vadd.f32 %v1967, %v1976
      %v1988 = vadd.f32 %v1968, %v1976
      %v1989 = vadd.f32 %v1969, %v1976
      %v1990 = vadd.f32 %v1970, %v1976
      %v1991 = vadd.f32 %v1971, %v1976
      %v1992 = vadd.f32 %v1972, %v1976
      %v1993 = vadd.f32 %v1973, %v1976
      %v1994 = vadd.f32 %v1978, %v1979
      %v1995 = vadd.f32 %v1994, %v1980
      %v1996 = vadd.f32 %v1995, %v1981
      %v1997 = vadd.f32 %v1996, %v1982
      %v1998 = vadd.f32 %v1997, %v1983
      %v1999 = vadd.f32 %v1998, %v1984
      %v2000 = vadd.f32 %v1999, %v1985
      %v2001 = vadd.f32 %v2000, %v1986
      %v2002 = vadd.f32 %v2001, %v1987
      %v2003 = vadd.f32 %v2002, %v1988
      %v2004 = vadd.f32 %v2003, %v1989
      %v2005 = vadd.f32 %v2004, %v1990
      %v2006 = vadd.f32 %v2005, %v1991
      %v2007 = vadd.f32 %v2006, %v1992
      %v2008 = vadd.f32 %v2007, %v1993
      %v2009 = vrot.slane %v2008, 4
      %v2010 = vadd.f32 %v2008, %v2009
      %v2011 = vrot.slane %v2010, 2
      %v2012 = vadd.f32 %v2010, %v2011
      %v2013 = vrot.slane %v2012, 1
      %v2014 = vadd.f32 %v2012, %v2013
      %v2015 = vmul.f32 %v1978, %v1978
      %v2016 = vmul.f32 %v1979, %v1979
      %v2017 = vmul.f32 %v1980, %v1980
      %v2018 = vmul.f32 %v1981, %v1981
      %v2019 = vmul.f32 %v1982, %v1982
      %v2020 = vmul.f32 %v1983, %v1983
      %v2021 = vmul.f32 %v1984, %v1984
      %v2022 = vmul.f32 %v1985, %v1985
      %v2023 = vmul.f32 %v1986, %v1986
      %v2024 = vmul.f32 %v1987, %v1987
      %v2025 = vmul.f32 %v1988, %v1988
      %v2026 = vmul.f32 %v1989, %v1989
      %v2027 = vmul.f32 %v1990, %v1990
      %v2028 = vmul.f32 %v1991, %v1991
      %v2029 = vmul.f32 %v1992, %v1992
      %v2030 = vmul.f32 %v1993, %v1993
      %v2031 = vadd.f32 %v2015, %v2016
      %v2032 = vadd.f32 %v2031, %v2017
      %v2033 = vadd.f32 %v2032, %v2018
      %v2034 = vadd.f32 %v2033, %v2019
      %v2035 = vadd.f32 %v2034, %v2020
      %v2036 = vadd.f32 %v2035, %v2021
      %v2037 = vadd.f32 %v2036, %v2022
      %v2038 = vadd.f32 %v2037, %v2023
      %v2039 = vadd.f32 %v2038, %v2024
      %v2040 = vadd.f32 %v2039, %v2025
      %v2041 = vadd.f32 %v2040, %v2026
      %v2042 = vadd.f32 %v2041, %v2027
      %v2043 = vadd.f32 %v2042, %v2028
      %v2044 = vadd.f32 %v2043, %v2029
      %v2045 = vadd.f32 %v2044, %v2030
      %v2046 = vrot.slane %v2045, 4
      %v2047 = vadd.f32 %v2045, %v2046
      %v2048 = vrot.slane %v2047, 2
      %v2049 = vadd.f32 %v2047, %v2048
      %v2050 = vrot.slane %v2049, 1
      %v2051 = vadd.f32 %v2049, %v2050
      %vm2052 = vcmask 1040384
      %v2053 = vsel %vm2052, %v2014, %v2051
      %2054 = vst [vmem:[%s311] sm:$0x3] %v2053
      %v2055 = vpack.c.bf16 %v1978, %v1978
      %v2056 = vpack.c.bf16 %v1979, %v1979
      %v2057 = vpack.c.bf16 %v1980, %v1980
      %v2058 = vpack.c.bf16 %v1981, %v1981
      %v2059 = vpack.c.bf16 %v1982, %v1982
      %v2060 = vpack.c.bf16 %v1983, %v1983
      %v2061 = vpack.c.bf16 %v1984, %v1984
      %v2062 = vpack.c.bf16 %v1985, %v1985
      %v2063 = vpack.c.bf16 %v1986, %v1986
      %v2064 = vpack.c.bf16 %v1987, %v1987
      %v2065 = vpack.c.bf16 %v1988, %v1988
      %v2066 = vpack.c.bf16 %v1989, %v1989
      %v2067 = vpack.c.bf16 %v1990, %v1990
      %v2068 = vpack.c.bf16 %v1991, %v1991
      %v2069 = vpack.c.bf16 %v1992, %v1992
      %v2070 = vpack.c.bf16 %v1993, %v1993
      %2071 = vst [vmem:[%s302] sm:$0xf] %v2055
      %2072 = vst [vmem:[%s302 + $0x4] sm:$0xf] %v2056
      %2073 = vst [vmem:[%s302 + $0x8] sm:$0xf] %v2057
      %2074 = vst [vmem:[%s302 + $0xc] sm:$0xf] %v2058
      %2075 = vst [vmem:[%s302 + $0x10] sm:$0xf] %v2059
      %2076 = vst [vmem:[%s302 + $0x14] sm:$0xf] %v2060
      %2077 = vst [vmem:[%s302 + $0x18] sm:$0xf] %v2061
      %2078 = vst [vmem:[%s302 + $0x1c] sm:$0xf] %v2062
      %2079 = vst [vmem:[%s302 + $0x20] sm:$0xf] %v2063
      %2080 = vst [vmem:[%s302 + $0x24] sm:$0xf] %v2064
      %2081 = vst [vmem:[%s302 + $0x28] sm:$0xf] %v2065
      %2082 = vst [vmem:[%s302 + $0x2c] sm:$0xf] %v2066
      %2083 = vst [vmem:[%s302 + $0x30] sm:$0xf] %v2067
      %2084 = vst [vmem:[%s302 + $0x34] sm:$0xf] %v2068
      %2085 = vst [vmem:[%s302 + $0x38] sm:$0xf] %v2069
      %2086 = vst [vmem:[%s302 + $0x3c] sm:$0xf] %v2070
      %s2087 = smul.u32 8, %s23
      %p2088 = scmp.lt.s32.totalorder %s22, 1
      %s2089 = scalar_select %p2088, %s22, 1
      %p2090 = scmp.lt.s32.totalorder %s2087, 15
      %s2091 = scalar_select %p2090, %s2087, 15
      %s2092 = smul.addr %s2091, 2
      %s2093 = smul.addr %s2089, 32
      %s2094 = sadd.s32 %s2092, %s2093
      %s2095 = smul.addr %s2094, 4
      %s2096 = scalar_lea.vmem %s5, %s2095
      %p2097 = scmp.lt.s32.totalorder %s22, 1
      %s2098 = scalar_select %p2097, %s22, 1
      %p2099 = scmp.lt.s32.totalorder %s23, 1
      %s2100 = scalar_select %p2099, %s23, 1
      %s2101 = smul.addr %s2098, 2
      %s2102 = sadd.s32 %s2100, %s2101
      %s2103 = smul.addr %s2102, 2
      %s2104 = scalar_lea.vmem %s6, %s2103
      // Predicated region
      $region41: #{double_conv.4} parent=39 // pred_check
        %p2105 = pneg %p162
      $region42: #{double_conv.4} parent=39 // pred_check_branch
        %2107 = sbr.rel (%p2105) target = $region44
      $region43: #{double_conv.4} parent=39 // pred_region
        %s2108 = smul.u32 8, %s23
      $region44: #{double_conv.4} parent=39 // pred_fallthru
        _
      // Predicated region
      $region45: #{double_conv.4} parent=39 // pred_check
        %p2109 = pneg %p190
      $region46: #{double_conv.4} parent=39 // pred_check_branch
        %2111 = sbr.rel (%p2109) target = $region48
      $region47: #{double_conv.4} parent=39 // pred_region
        _
      $region48: #{double_conv.4} parent=39 // pred_fallthru
        _
    $region40: #{double_conv.4} parent=5 // pred_fallthru
      _
    %p2112 = scmp.le.s32.totalorder 2, %s13
    // Predicated region
    $region49: #{double_conv.4} parent=5 // pred_check
      %p2113 = pneg %p2112
    $region50: #{double_conv.4} parent=5 // pred_check_branch
      %2115 = sbr.rel (%p2113) target = $region52
    $region51: #{double_conv.4} parent=5 // pred_region
      %s2116 = ssub.s32 %s13, 2
      // Predicated region
      $region53: #{double_conv.4} parent=51 // pred_check
        %p2117 = pneg %p168
      $region54: #{double_conv.4} parent=51 // pred_check_branch
        %2119 = sbr.rel (%p2117) target = $region56
      $region55: #{double_conv.4} parent=51 // pred_region
        %s2120 = smul.u32 8, %s25
        %p2121 = scmp.lt.s32.totalorder %s24, 1
        %s2122 = scalar_select %p2121, %s24, 1
        %p2123 = scmp.lt.s32.totalorder %s2120, 15
        %s2124 = scalar_select %p2123, %s2120, 15
        %s2125 = smul.addr %s2124, 2
        %s2126 = smul.addr %s2122, 32
        %s2127 = sadd.s32 %s2125, %s2126
        %s2128 = smul.addr %s2127, 4
        %s2129 = scalar_lea.vmem %s5, %s2128
      $region56: #{double_conv.4} parent=51 // pred_fallthru
        _
      // Predicated region
      $region57: #{double_conv.4} parent=51 // pred_check
        %p2130 = pneg %p196
      $region58: #{double_conv.4} parent=51 // pred_check_branch
        %2132 = sbr.rel (%p2130) target = $region60
      $region59: #{double_conv.4} parent=51 // pred_region
        %p2133 = scmp.lt.s32.totalorder %s24, 1
        %s2134 = scalar_select %p2133, %s24, 1
        %p2135 = scmp.lt.s32.totalorder %s25, 1
        %s2136 = scalar_select %p2135, %s25, 1
        %s2137 = smul.addr %s2134, 2
        %s2138 = sadd.s32 %s2136, %s2137
        %s2139 = smul.addr %s2138, 2
        %s2140 = scalar_lea.vmem %s6, %s2139
      $region60: #{double_conv.4} parent=51 // pred_fallthru
        _
    $region52: #{double_conv.4} parent=5 // pred_fallthru
      _
  $region6: #{double_conv.4} parent=0 // loop_footer
    %s17 = sadd.s32 1, %s13
  $region7: #{double_conv.4} parent=0 // loop_footer_branch
    %12 = sbr.rel target = $region3
  $region8: #{double_conv.4} parent=0 // loop_exit
    _

</llo_original>
